<compile_context>
chip_gen: v6e
topology: v6e:2x2x1
jax: 0.10.0
libtpu: 0.0.40
codegen_flags: <defaults>
</compile_context>

<pallas_src>
import math
import functools

import jax
import jax.numpy as jnp
from jax.experimental import pallas as pl
from jax.experimental.pallas import tpu as pltpu


# ------------------------------ pack helpers --------------------------------

def _round_up(x, m):
    return ((x + m - 1) // m) * m


def _pad2(w, rows, cols):
    return jnp.pad(w, ((0, rows - w.shape[0]), (0, cols - w.shape[1])))


def _pad_last(v, cols):
    return jnp.pad(v, ((0, 0), (0, cols - v.shape[1])))


# --------------------------------- kernel -----------------------------------

def encoder_stack_kernel(x_ref,
                         wqkv_ref, wo_ref,
                         ln1a_ref, ln1b_ref, ln2a_ref, ln2b_ref,
                         w1_ref, b1_ref, w2_ref, b2_ref,
                         fna_ref, fnb_ref,
                         o_ref, *, n_layers, n_heads, batch, seq,
                         d_model, dk_pad, eps):
    """All encoder layers + final LayerNorm on the flattened (B*S, D_pad) slab."""
    d_pad = x_ref.shape[-1]
    bf = jnp.bfloat16

    # lane mask selecting the real d_model features inside the 128-padded width
    lane = jax.lax.broadcasted_iota(jnp.int32, (1, d_pad), 1)
    mask = (lane < d_model).astype(jnp.float32)

    def layernorm(v, alpha, bias):
        # torch semantics: mean over last dim, *unbiased* std (N-1), /(std+eps).
        # Padded lanes of v are exactly 0, so plain sums are sums over real lanes.
        mean = jnp.sum(v, axis=-1, keepdims=True) * (1.0 / d_model)
        c = (v - mean) * mask
        var = jnp.sum(c * c, axis=-1, keepdims=True) * (1.0 / (d_model - 1))
        return alpha * c / (jnp.sqrt(var) + eps) + bias   # exact divide (parity)

    x = x_ref[...]                                   # (B*S, d_pad) f32
    qoff = 0
    koff = n_heads * dk_pad
    voff = 2 * n_heads * dk_pad

    for l in range(n_layers):                        # static unroll; weights resident
        # ---- hoist per-layer parameter reads once ----
        ln1a, ln1b = ln1a_ref[l], ln1b_ref[l]        # (1, d_pad) f32
        ln2a, ln2b = ln2a_ref[l], ln2b_ref[l]
        wqkv = wqkv_ref[l]                           # (d_pad, 3*h*dk_pad) bf16, Q pre-scaled
        wo = wo_ref[l]                               # (h, dk_pad, d_pad)  bf16
        w1, b1 = w1_ref[l], b1_ref[l]                # (d_pad, dff_pad) bf16, (1, dff_pad) f32
        w2, b2 = w2_ref[l], b2_ref[l]                # (dff_pad, d_pad) bf16, (1, d_pad)  f32

        # -------- self-attention sublayer: x = x + Attn(LN(x)) --------
        xn = layernorm(x, ln1a, ln1b)
        qkv = jnp.dot(xn.astype(bf), wqkv,
                      preferred_element_type=jnp.float32)      # (B*S, 3*h*dk_pad) f32

        attn_rows = []
        for b in range(batch):                       # static B loop (attention is per-batch)
            r0 = b * seq
            qkv_b = qkv[r0:r0 + seq]                 # (S, 3*h*dk_pad) sublane-aligned slice
            # 128-lane-aligned head blocks -> no masked relayouts
            qh = jnp.stack([qkv_b[:, qoff + i * dk_pad: qoff + (i + 1) * dk_pad]
                            for i in range(n_heads)]).astype(bf)        # (h, S, dk_pad)
            kh = jnp.stack([qkv_b[:, koff + i * dk_pad: koff + (i + 1) * dk_pad]
                            for i in range(n_heads)]).astype(bf)
            vh = jnp.stack([qkv_b[:, voff + i * dk_pad: voff + (i + 1) * dk_pad]
                            for i in range(n_heads)]).astype(bf)

            s = jnp.einsum('hqd,hkd->hqk', qh, kh,
                           preferred_element_type=jnp.float32)          # (h, S, S)
            s = s - jnp.max(s, axis=-1, keepdims=True)
            e = jnp.exp(s)
            p = e * pl.reciprocal(jnp.sum(e, axis=-1, keepdims=True), approx=True)
            ctx = jnp.einsum('hqk,hkd->hqd', p.astype(bf), vh,
                             preferred_element_type=jnp.float32)        # (h, S, dk_pad)
            proj = jnp.einsum('hqd,hdo->hqo', ctx.astype(bf), wo,
                              preferred_element_type=jnp.float32)       # (h, S, d_pad)
            attn_rows.append(jnp.sum(proj, axis=0))                     # (S, d_pad)

        x = x + jnp.concatenate(attn_rows, axis=0)   # sublane concat only

        # -------- feed-forward sublayer: x = x + FFN(LN(x)) --------
        xn2 = layernorm(x, ln2a, ln2b)
        h1 = jnp.maximum(
            jnp.dot(xn2.astype(bf), w1, preferred_element_type=jnp.float32) + b1, 0.0)
        ff = jnp.dot(h1.astype(bf), w2, preferred_element_type=jnp.float32) + b2
        x = x + ff

    # ---- fused final LayerNorm, lane-dense (B*S, 128) store ----
    o_ref[...] = layernorm(x, fna_ref[...], fnb_ref[...])


# ------------------------------ pallas wrapper -------------------------------

def _full_spec(shape):
    # whole-array block, same block every grid step (kept VMEM-resident)
    return pl.BlockSpec(shape, lambda i, _n=len(shape): (0,) * _n)


def run_encoder_stack(x, pp, *, h, eps=1e-6):
    B, S, D = x.shape
    d_pad = pp["fna"].shape[-1]
    dk_pad = pp["wo"].shape[2]
    L = pp["wqkv"].shape[0]

    # lane-dense padding + batch flatten done wrapper-side (cheap XLA ops)
    x_pad = jnp.pad(x, ((0, 0), (0, 0), (0, d_pad - D))).reshape(B * S, d_pad)

    kernel = functools.partial(encoder_stack_kernel,
                               n_layers=L, n_heads=h, batch=B, seq=S,
                               d_model=D, dk_pad=dk_pad, eps=eps)
    weight_keys = ("wqkv", "wo", "ln1a", "ln1b", "ln2a", "ln2b",
                   "w1", "b1", "w2", "b2", "fna", "fnb")
    in_specs = [_full_spec((B * S, d_pad))] + [_full_spec(pp[k].shape) for k in weight_keys]

    out = pl.pallas_call(
        kernel,
        out_shape=jax.ShapeDtypeStruct((B * S, d_pad), jnp.float32),
        grid=(1,),
        in_specs=in_specs,
        out_specs=_full_spec((B * S, d_pad)),
        compiler_params=pltpu.CompilerParams(dimension_semantics=("arbitrary",)),
    )(x_pad, *[pp[k] for k in weight_keys])

    return out.reshape(B, S, d_pad)[:, :, :D]


# ------------------------------ plain-JAX glue -------------------------------

def make_positional_encoding(max_len, d_model):
    position = jnp.arange(max_len, dtype=jnp.float32)[:, None]
    div_term = jnp.exp(jnp.arange(0, d_model, 2, dtype=jnp.float32)
                       * (-math.log(10000.0) / d_model))
    angles = position * div_term
    pe = jnp.zeros((max_len, d_model), jnp.float32)
    pe = pe.at[:, 0::2].set(jnp.sin(angles))
    pe = pe.at[:, 1::2].set(jnp.cos(angles))
    return pe


def init_params(key, d_model, d_ff, vocab_size, n_layers):
    k_emb, k_layers = jax.random.split(key)
    embedding = 0.02 * jax.random.normal(k_emb, (vocab_size, d_model), jnp.float32)

    layer_keys = jax.random.split(k_layers, n_layers)
    layers = []
    s_attn = 1.0 / math.sqrt(d_model)
    s_ff = 1.0 / math.sqrt(d_ff)
    for i in range(n_layers):
        lk = jax.random.split(layer_keys[i], 6)
        layers.append(dict(
            wq=s_attn * jax.random.normal(lk[0], (d_model, d_model), jnp.float32),
            wk=s_attn * jax.random.normal(lk[1], (d_model, d_model), jnp.float32),
            wv=s_attn * jax.random.normal(lk[2], (d_model, d_model), jnp.float32),
            wo=s_attn * jax.random.normal(lk[3], (d_model, d_model), jnp.float32),
            ln1_a=jnp.ones((1, d_model), jnp.float32),
            ln1_b=jnp.zeros((1, d_model), jnp.float32),
            ln2_a=jnp.ones((1, d_model), jnp.float32),
            ln2_b=jnp.zeros((1, d_model), jnp.float32),
            w1=s_attn * jax.random.normal(lk[4], (d_model, d_ff), jnp.float32),
            b1=jnp.zeros((1, d_ff), jnp.float32),
            w2=s_ff * jax.random.normal(lk[5], (d_ff, d_model), jnp.float32),
            b2=jnp.zeros((1, d_model), jnp.float32),
        ))
    norm_a = jnp.ones((1, d_model), jnp.float32)
    norm_b = jnp.zeros((1, d_model), jnp.float32)
    return embedding, layers, (norm_a, norm_b)


def pack_params(layers, final_norm, *, d_model, h, d_ff):
    """Stack per-layer params; pad everything lane-dense (last dim multiple of 128),
    lay heads out in 128-aligned blocks, fold 1/sqrt(d_k) into Q, store MXU
    operands in bf16 (one-time)."""
    bf = jnp.bfloat16
    d_k = d_model // h
    scale = 1.0 / math.sqrt(d_k)
    d_pad = _round_up(d_model, 128)
    dk_pad = _round_up(d_k, 128)
    dff_pad = _round_up(d_ff, 128)

    wqkv_list, wo_list = [], []
    for p in layers:
        cols = []
        for w, s in ((p["wq"], scale), (p["wk"], 1.0), (p["wv"], 1.0)):
            for i in range(h):
                cols.append(_pad2(w[:, i * d_k:(i + 1) * d_k] * s, d_pad, dk_pad))
        wqkv_list.append(jnp.concatenate(cols, axis=1))          # (d_pad, 3*h*dk_pad)
        wo_list.append(jnp.stack(
            [_pad2(p["wo"][i * d_k:(i + 1) * d_k, :], dk_pad, d_pad)
             for i in range(h)]))                                # (h, dk_pad, d_pad)

    return dict(
        wqkv=jnp.stack(wqkv_list).astype(bf),                    # (L, d_pad, 3*h*dk_pad)
        wo=jnp.stack(wo_list).astype(bf),                        # (L, h, dk_pad, d_pad)
        w1=jnp.stack([_pad2(p["w1"], d_pad, dff_pad) for p in layers]).astype(bf),
        w2=jnp.stack([_pad2(p["w2"], dff_pad, d_pad) for p in layers]).astype(bf),
        b1=jnp.stack([_pad_last(p["b1"], dff_pad) for p in layers]),   # (L,1,dff_pad) f32
        b2=jnp.stack([_pad_last(p["b2"], d_pad) for p in layers]),     # (L,1,d_pad)   f32
        ln1a=jnp.stack([_pad_last(p["ln1_a"], d_pad) for p in layers]),
        ln1b=jnp.stack([_pad_last(p["ln1_b"], d_pad) for p in layers]),
        ln2a=jnp.stack([_pad_last(p["ln2_a"], d_pad) for p in layers]),
        ln2b=jnp.stack([_pad_last(p["ln2_b"], d_pad) for p in layers]),
        fna=_pad_last(final_norm[0], d_pad),                     # (1, d_pad) f32
        fnb=_pad_last(final_norm[1], d_pad),
    )


def encoder_forward(token_ids, embedding, packed, pe, *, d_model, h):
    # embedding lookup * sqrt(d_model)  (plain JAX gather, glue)
    x = embedding[token_ids] * math.sqrt(d_model)                # (B, S, D)
    S = x.shape[1]
    x = x + pe[None, :S, :]                                      # dropout = identity
    out = run_encoder_stack(x, packed, h=h)                      # fused Pallas stack
    return out, None                                             # (output, mask=None)


# ----------------------------------- main ------------------------------------

if __name__ == "__main__":
    B, S = 2, 8
    D_MODEL, H, D_FF = 32, 4, 64
    VOCAB, N_LAYERS = 100, 2

    key = jax.random.PRNGKey(0)
    k_tok, k_param = jax.random.split(key)

    token_ids = jax.random.randint(k_tok, (B, S), 0, VOCAB, dtype=jnp.int32)
    embedding, layers, final_norm = init_params(k_param, D_MODEL, D_FF, VOCAB, N_LAYERS)
    packed = pack_params(layers, final_norm, d_model=D_MODEL, h=H, d_ff=D_FF)
    pe = make_positional_encoding(S, D_MODEL)

    out, mask = encoder_forward(token_ids, embedding, packed, pe,
                                d_model=D_MODEL, h=H)
    out = jax.block_until_ready(out)
    assert out.shape == (B, S, D_MODEL) and out.dtype == jnp.float32
    assert bool(jnp.all(jnp.isfinite(out)))
    print("KERNEL_OK")
</pallas_src>

<mosaic_0001>
module attributes {stable_mosaic.version = 11 : i64} {
  func.func @encoder_stack_kernel(%arg0: i32, %arg1: memref<16x128xf32, #tpu.memory_space<vmem>>, %arg2: memref<2x128x1536xbf16, #tpu.memory_space<vmem>>, %arg3: memref<2x4x128x128xbf16, #tpu.memory_space<vmem>>, %arg4: memref<2x1x128xf32, #tpu.memory_space<vmem>>, %arg5: memref<2x1x128xf32, #tpu.memory_space<vmem>>, %arg6: memref<2x1x128xf32, #tpu.memory_space<vmem>>, %arg7: memref<2x1x128xf32, #tpu.memory_space<vmem>>, %arg8: memref<2x128x128xbf16, #tpu.memory_space<vmem>>, %arg9: memref<2x1x128xf32, #tpu.memory_space<vmem>>, %arg10: memref<2x128x128xbf16, #tpu.memory_space<vmem>>, %arg11: memref<2x1x128xf32, #tpu.memory_space<vmem>>, %arg12: memref<1x128xf32, #tpu.memory_space<vmem>>, %arg13: memref<1x128xf32, #tpu.memory_space<vmem>>, %arg14: memref<16x128xf32, #tpu.memory_space<vmem>>) attributes {dimension_semantics = [#tpu.dimension_semantics<arbitrary>], iteration_bounds = array<i64: 1>, scalar_prefetch = 0 : i64, scratch_operands = 0 : i64, tpu.core_type = #tpu.core_type<tc>, window_params = [{pipeline_mode = #tpu.pipeline_mode<synchronous>, transform_indices = @transform_0, window_bounds = array<i64: 16, 128>}, {pipeline_mode = #tpu.pipeline_mode<synchronous>, transform_indices = @transform_1, window_bounds = array<i64: 2, 128, 1536>}, {pipeline_mode = #tpu.pipeline_mode<synchronous>, transform_indices = @transform_2, window_bounds = array<i64: 2, 4, 128, 128>}, {pipeline_mode = #tpu.pipeline_mode<synchronous>, transform_indices = @transform_3, window_bounds = array<i64: 2, 1, 128>}, {pipeline_mode = #tpu.pipeline_mode<synchronous>, transform_indices = @transform_4, window_bounds = array<i64: 2, 1, 128>}, {pipeline_mode = #tpu.pipeline_mode<synchronous>, transform_indices = @transform_5, window_bounds = array<i64: 2, 1, 128>}, {pipeline_mode = #tpu.pipeline_mode<synchronous>, transform_indices = @transform_6, window_bounds = array<i64: 2, 1, 128>}, {pipeline_mode = #tpu.pipeline_mode<synchronous>, transform_indices = @transform_7, window_bounds = array<i64: 2, 128, 128>}, {pipeline_mode = #tpu.pipeline_mode<synchronous>, transform_indices = @transform_8, window_bounds = array<i64: 2, 1, 128>}, {pipeline_mode = #tpu.pipeline_mode<synchronous>, transform_indices = @transform_9, window_bounds = array<i64: 2, 128, 128>}, {pipeline_mode = #tpu.pipeline_mode<synchronous>, transform_indices = @transform_10, window_bounds = array<i64: 2, 1, 128>}, {pipeline_mode = #tpu.pipeline_mode<synchronous>, transform_indices = @transform_11, window_bounds = array<i64: 1, 128>}, {pipeline_mode = #tpu.pipeline_mode<synchronous>, transform_indices = @transform_12, window_bounds = array<i64: 1, 128>}, {pipeline_mode = #tpu.pipeline_mode<synchronous>, transform_indices = @transform_13, window_bounds = array<i64: 16, 128>}]} {
    %0 = tpu.iota {dimensions = array<i32: 1>} : vector<1x128xi32>
    %c32_i32 = arith.constant 32 : i32
    %1 = vector.broadcast %c32_i32 : i32 to vector<1x128xi32>
    %2 = arith.cmpi slt, %0, %1 : vector<1x128xi32>
    %3 = arith.extui %2 : vector<1x128xi1> to vector<1x128xi32>
    %4 = arith.sitofp %3 : vector<1x128xi32> to vector<1x128xf32>
    %c0 = arith.constant 0 : index
    %c0_0 = arith.constant 0 : index
    %5 = vector.load %arg1[%c0, %c0_0] : memref<16x128xf32, #tpu.memory_space<vmem>>, vector<16x128xf32>
    %c0_1 = arith.constant 0 : index
    %c0_2 = arith.constant 0 : index
    %c0_3 = arith.constant 0 : index
    %6 = vector.load %arg4[%c0_1, %c0_2, %c0_3] : memref<2x1x128xf32, #tpu.memory_space<vmem>>, vector<1x1x128xf32>
    %7 = vector.shape_cast %6 : vector<1x1x128xf32> to vector<1x128xf32>
    %c0_4 = arith.constant 0 : index
    %c0_5 = arith.constant 0 : index
    %c0_6 = arith.constant 0 : index
    %8 = vector.load %arg5[%c0_4, %c0_5, %c0_6] : memref<2x1x128xf32, #tpu.memory_space<vmem>>, vector<1x1x128xf32>
    %9 = vector.shape_cast %8 : vector<1x1x128xf32> to vector<1x128xf32>
    %c0_7 = arith.constant 0 : index
    %c0_8 = arith.constant 0 : index
    %c0_9 = arith.constant 0 : index
    %10 = vector.load %arg6[%c0_7, %c0_8, %c0_9] : memref<2x1x128xf32, #tpu.memory_space<vmem>>, vector<1x1x128xf32>
    %11 = vector.shape_cast %10 : vector<1x1x128xf32> to vector<1x128xf32>
    %c0_10 = arith.constant 0 : index
    %c0_11 = arith.constant 0 : index
    %c0_12 = arith.constant 0 : index
    %12 = vector.load %arg7[%c0_10, %c0_11, %c0_12] : memref<2x1x128xf32, #tpu.memory_space<vmem>>, vector<1x1x128xf32>
    %13 = vector.shape_cast %12 : vector<1x1x128xf32> to vector<1x128xf32>
    %c0_13 = arith.constant 0 : index
    %c0_14 = arith.constant 0 : index
    %c0_15 = arith.constant 0 : index
    %14 = vector.load %arg2[%c0_13, %c0_14, %c0_15] : memref<2x128x1536xbf16, #tpu.memory_space<vmem>>, vector<1x128x1536xbf16>
    %15 = vector.shape_cast %14 : vector<1x128x1536xbf16> to vector<128x1536xbf16>
    %c0_16 = arith.constant 0 : index
    %c0_17 = arith.constant 0 : index
    %c0_18 = arith.constant 0 : index
    %c0_19 = arith.constant 0 : index
    %16 = vector.load %arg3[%c0_16, %c0_17, %c0_18, %c0_19] : memref<2x4x128x128xbf16, #tpu.memory_space<vmem>>, vector<1x4x128x128xbf16>
    %17 = vector.shape_cast %16 : vector<1x4x128x128xbf16> to vector<4x128x128xbf16>
    %c0_20 = arith.constant 0 : index
    %c0_21 = arith.constant 0 : index
    %c0_22 = arith.constant 0 : index
    %18 = vector.load %arg8[%c0_20, %c0_21, %c0_22] : memref<2x128x128xbf16, #tpu.memory_space<vmem>>, vector<1x128x128xbf16>
    %19 = vector.shape_cast %18 : vector<1x128x128xbf16> to vector<128x128xbf16>
    %c0_23 = arith.constant 0 : index
    %c0_24 = arith.constant 0 : index
    %c0_25 = arith.constant 0 : index
    %20 = vector.load %arg9[%c0_23, %c0_24, %c0_25] : memref<2x1x128xf32, #tpu.memory_space<vmem>>, vector<1x1x128xf32>
    %21 = vector.shape_cast %20 : vector<1x1x128xf32> to vector<1x128xf32>
    %c0_26 = arith.constant 0 : index
    %c0_27 = arith.constant 0 : index
    %c0_28 = arith.constant 0 : index
    %22 = vector.load %arg10[%c0_26, %c0_27, %c0_28] : memref<2x128x128xbf16, #tpu.memory_space<vmem>>, vector<1x128x128xbf16>
    %23 = vector.shape_cast %22 : vector<1x128x128xbf16> to vector<128x128xbf16>
    %c0_29 = arith.constant 0 : index
    %c0_30 = arith.constant 0 : index
    %c0_31 = arith.constant 0 : index
    %24 = vector.load %arg11[%c0_29, %c0_30, %c0_31] : memref<2x1x128xf32, #tpu.memory_space<vmem>>, vector<1x1x128xf32>
    %25 = vector.shape_cast %24 : vector<1x1x128xf32> to vector<1x128xf32>
    %cst = arith.constant dense<0.000000e+00> : vector<16xf32>
    %26 = vector.multi_reduction <add>, %5, %cst [1] : vector<16x128xf32> to vector<16xf32>
    %27 = vector.shape_cast %26 : vector<16xf32> to vector<16x1xf32>
    %cst_32 = arith.constant 3.125000e-02 : f32
    %28 = vector.broadcast %cst_32 : f32 to vector<16x1xf32>
    %29 = arith.mulf %27, %28 : vector<16x1xf32>
    %30 = vector.broadcast %29 : vector<16x1xf32> to vector<16x128xf32>
    %31 = arith.subf %5, %30 : vector<16x128xf32>
    %32 = vector.broadcast %4 : vector<1x128xf32> to vector<16x128xf32>
    %33 = arith.mulf %31, %32 : vector<16x128xf32>
    %34 = arith.mulf %33, %33 : vector<16x128xf32>
    %cst_33 = arith.constant dense<0.000000e+00> : vector<16xf32>
    %35 = vector.multi_reduction <add>, %34, %cst_33 [1] : vector<16x128xf32> to vector<16xf32>
    %36 = vector.shape_cast %35 : vector<16xf32> to vector<16x1xf32>
    %cst_34 = arith.constant 0.0322580636 : f32
    %37 = vector.broadcast %cst_34 : f32 to vector<16x1xf32>
    %38 = arith.mulf %36, %37 : vector<16x1xf32>
    %39 = vector.broadcast %7 : vector<1x128xf32> to vector<16x128xf32>
    %40 = arith.mulf %39, %33 : vector<16x128xf32>
    %41 = math.sqrt %38 : vector<16x1xf32>
    %cst_35 = arith.constant 9.99999997E-7 : f32
    %42 = vector.broadcast %cst_35 : f32 to vector<16x1xf32>
    %43 = arith.addf %41, %42 : vector<16x1xf32>
    %44 = vector.broadcast %43 : vector<16x1xf32> to vector<16x128xf32>
    %45 = arith.divf %40, %44 : vector<16x128xf32>
    %46 = vector.broadcast %9 : vector<1x128xf32> to vector<16x128xf32>
    %47 = arith.addf %45, %46 : vector<16x128xf32>
    %48 = arith.truncf %47 : vector<16x128xf32> to vector<16x128xbf16>
    %cst_36 = arith.constant dense<0.000000e+00> : vector<16x1536xf32>
    %49 = tpu.matmul %48, %15, %cst_36 {dimension_numbers = #tpu.dot_dimension_numbers<[1], [0], [0], [1], [0, 0, 1, 1], [], []>} : vector<16x128xbf16>, vector<128x1536xbf16>, vector<16x1536xf32> -> vector<16x1536xf32>
    %50 = vector.extract_strided_slice %49 {offsets = [0, 0], sizes = [8, 1536], strides = [1, 1]} : vector<16x1536xf32> to vector<8x1536xf32>
    %51 = vector.extract_strided_slice %50 {offsets = [0, 0], sizes = [8, 128], strides = [1, 1]} : vector<8x1536xf32> to vector<8x128xf32>
    %52 = vector.extract_strided_slice %50 {offsets = [0, 128], sizes = [8, 128], strides = [1, 1]} : vector<8x1536xf32> to vector<8x128xf32>
    %53 = vector.extract_strided_slice %50 {offsets = [0, 256], sizes = [8, 128], strides = [1, 1]} : vector<8x1536xf32> to vector<8x128xf32>
    %54 = vector.extract_strided_slice %50 {offsets = [0, 384], sizes = [8, 128], strides = [1, 1]} : vector<8x1536xf32> to vector<8x128xf32>
    %55 = vector.shape_cast %51 : vector<8x128xf32> to vector<1x8x128xf32>
    %56 = vector.shape_cast %52 : vector<8x128xf32> to vector<1x8x128xf32>
    %57 = vector.shape_cast %53 : vector<8x128xf32> to vector<1x8x128xf32>
    %58 = vector.shape_cast %54 : vector<8x128xf32> to vector<1x8x128xf32>
    %59 = tpu.concatenate %55, %56, %57, %58 in 0 : vector<1x8x128xf32>, vector<1x8x128xf32>, vector<1x8x128xf32>, vector<1x8x128xf32> -> vector<4x8x128xf32>
    %60 = arith.truncf %59 : vector<4x8x128xf32> to vector<4x8x128xbf16>
    %61 = vector.extract_strided_slice %50 {offsets = [0, 512], sizes = [8, 128], strides = [1, 1]} : vector<8x1536xf32> to vector<8x128xf32>
    %62 = vector.extract_strided_slice %50 {offsets = [0, 640], sizes = [8, 128], strides = [1, 1]} : vector<8x1536xf32> to vector<8x128xf32>
    %63 = vector.extract_strided_slice %50 {offsets = [0, 768], sizes = [8, 128], strides = [1, 1]} : vector<8x1536xf32> to vector<8x128xf32>
    %64 = vector.extract_strided_slice %50 {offsets = [0, 896], sizes = [8, 128], strides = [1, 1]} : vector<8x1536xf32> to vector<8x128xf32>
    %65 = vector.shape_cast %61 : vector<8x128xf32> to vector<1x8x128xf32>
    %66 = vector.shape_cast %62 : vector<8x128xf32> to vector<1x8x128xf32>
    %67 = vector.shape_cast %63 : vector<8x128xf32> to vector<1x8x128xf32>
    %68 = vector.shape_cast %64 : vector<8x128xf32> to vector<1x8x128xf32>
    %69 = tpu.concatenate %65, %66, %67, %68 in 0 : vector<1x8x128xf32>, vector<1x8x128xf32>, vector<1x8x128xf32>, vector<1x8x128xf32> -> vector<4x8x128xf32>
    %70 = arith.truncf %69 : vector<4x8x128xf32> to vector<4x8x128xbf16>
    %71 = vector.extract_strided_slice %50 {offsets = [0, 1024], sizes = [8, 128], strides = [1, 1]} : vector<8x1536xf32> to vector<8x128xf32>
    %72 = vector.extract_strided_slice %50 {offsets = [0, 1152], sizes = [8, 128], strides = [1, 1]} : vector<8x1536xf32> to vector<8x128xf32>
    %73 = vector.extract_strided_slice %50 {offsets = [0, 1280], sizes = [8, 128], strides = [1, 1]} : vector<8x1536xf32> to vector<8x128xf32>
    %74 = vector.extract_strided_slice %50 {offsets = [0, 1408], sizes = [8, 128], strides = [1, 1]} : vector<8x1536xf32> to vector<8x128xf32>
    %75 = vector.shape_cast %71 : vector<8x128xf32> to vector<1x8x128xf32>
    %76 = vector.shape_cast %72 : vector<8x128xf32> to vector<1x8x128xf32>
    %77 = vector.shape_cast %73 : vector<8x128xf32> to vector<1x8x128xf32>
    %78 = vector.shape_cast %74 : vector<8x128xf32> to vector<1x8x128xf32>
    %79 = tpu.concatenate %75, %76, %77, %78 in 0 : vector<1x8x128xf32>, vector<1x8x128xf32>, vector<1x8x128xf32>, vector<1x8x128xf32> -> vector<4x8x128xf32>
    %80 = arith.truncf %79 : vector<4x8x128xf32> to vector<4x8x128xbf16>
    "tpu.trace_start"() <{level = 10 : i32, message = "hqd,hkd->hqk"}> : () -> ()
    %cst_37 = arith.constant dense<0.000000e+00> : vector<4x8x8xf32>
    %81 = tpu.matmul %60, %70, %cst_37 {dimension_numbers = #tpu.dot_dimension_numbers<[2], [2], [1], [1], [0, 0, 0, 1, 1, 1], [0], [0]>} : vector<4x8x128xbf16>, vector<4x8x128xbf16>, vector<4x8x8xf32> -> vector<4x8x8xf32>
    "tpu.trace_stop"() : () -> ()
    %cst_38 = arith.constant dense<0xFF800000> : vector<4x8xf32>
    %82 = vector.multi_reduction <maximumf>, %81, %cst_38 [2] : vector<4x8x8xf32> to vector<4x8xf32>
    %83 = vector.shape_cast %82 : vector<4x8xf32> to vector<4x8x1xf32>
    %84 = vector.broadcast %83 : vector<4x8x1xf32> to vector<4x8x8xf32>
    %85 = arith.subf %81, %84 : vector<4x8x8xf32>
    %86 = math.exp %85 : vector<4x8x8xf32>
    %cst_39 = arith.constant dense<0.000000e+00> : vector<4x8xf32>
    %87 = vector.multi_reduction <add>, %86, %cst_39 [2] : vector<4x8x8xf32> to vector<4x8xf32>
    %88 = vector.shape_cast %87 : vector<4x8xf32> to vector<4x8x1xf32>
    %89 = tpu.reciprocal %88 {approx = true} : vector<4x8x1xf32> -> vector<4x8x1xf32>
    %90 = vector.broadcast %89 : vector<4x8x1xf32> to vector<4x8x8xf32>
    %91 = arith.mulf %86, %90 : vector<4x8x8xf32>
    %92 = arith.truncf %91 : vector<4x8x8xf32> to vector<4x8x8xbf16>
    "tpu.trace_start"() <{level = 10 : i32, message = "hqk,hkd->hqd"}> : () -> ()
    %cst_40 = arith.constant dense<0.000000e+00> : vector<4x8x128xf32>
    %93 = tpu.matmul %92, %80, %cst_40 {dimension_numbers = #tpu.dot_dimension_numbers<[2], [1], [1], [2], [0, 0, 0, 1, 1, 2], [0], [0]>} : vector<4x8x8xbf16>, vector<4x8x128xbf16>, vector<4x8x128xf32> -> vector<4x8x128xf32>
    "tpu.trace_stop"() : () -> ()
    %94 = arith.truncf %93 : vector<4x8x128xf32> to vector<4x8x128xbf16>
    "tpu.trace_start"() <{level = 10 : i32, message = "hqd,hdo->hqo"}> : () -> ()
    %cst_41 = arith.constant dense<0.000000e+00> : vector<4x8x128xf32>
    %95 = tpu.matmul %94, %17, %cst_41 {dimension_numbers = #tpu.dot_dimension_numbers<[2], [1], [1], [2], [0, 0, 0, 1, 1, 2], [0], [0]>} : vector<4x8x128xbf16>, vector<4x128x128xbf16>, vector<4x8x128xf32> -> vector<4x8x128xf32>
    "tpu.trace_stop"() : () -> ()
    %cst_42 = arith.constant dense<0.000000e+00> : vector<8x128xf32>
    %96 = vector.multi_reduction <add>, %95, %cst_42 [0] : vector<4x8x128xf32> to vector<8x128xf32>
    %97 = vector.extract_strided_slice %49 {offsets = [8, 0], sizes = [8, 1536], strides = [1, 1]} : vector<16x1536xf32> to vector<8x1536xf32>
    %98 = vector.extract_strided_slice %97 {offsets = [0, 0], sizes = [8, 128], strides = [1, 1]} : vector<8x1536xf32> to vector<8x128xf32>
    %99 = vector.extract_strided_slice %97 {offsets = [0, 128], sizes = [8, 128], strides = [1, 1]} : vector<8x1536xf32> to vector<8x128xf32>
    %100 = vector.extract_strided_slice %97 {offsets = [0, 256], sizes = [8, 128], strides = [1, 1]} : vector<8x1536xf32> to vector<8x128xf32>
    %101 = vector.extract_strided_slice %97 {offsets = [0, 384], sizes = [8, 128], strides = [1, 1]} : vector<8x1536xf32> to vector<8x128xf32>
    %102 = vector.shape_cast %98 : vector<8x128xf32> to vector<1x8x128xf32>
    %103 = vector.shape_cast %99 : vector<8x128xf32> to vector<1x8x128xf32>
    %104 = vector.shape_cast %100 : vector<8x128xf32> to vector<1x8x128xf32>
    %105 = vector.shape_cast %101 : vector<8x128xf32> to vector<1x8x128xf32>
    %106 = tpu.concatenate %102, %103, %104, %105 in 0 : vector<1x8x128xf32>, vector<1x8x128xf32>, vector<1x8x128xf32>, vector<1x8x128xf32> -> vector<4x8x128xf32>
    %107 = arith.truncf %106 : vector<4x8x128xf32> to vector<4x8x128xbf16>
    %108 = vector.extract_strided_slice %97 {offsets = [0, 512], sizes = [8, 128], strides = [1, 1]} : vector<8x1536xf32> to vector<8x128xf32>
    %109 = vector.extract_strided_slice %97 {offsets = [0, 640], sizes = [8, 128], strides = [1, 1]} : vector<8x1536xf32> to vector<8x128xf32>
    %110 = vector.extract_strided_slice %97 {offsets = [0, 768], sizes = [8, 128], strides = [1, 1]} : vector<8x1536xf32> to vector<8x128xf32>
    %111 = vector.extract_strided_slice %97 {offsets = [0, 896], sizes = [8, 128], strides = [1, 1]} : vector<8x1536xf32> to vector<8x128xf32>
    %112 = vector.shape_cast %108 : vector<8x128xf32> to vector<1x8x128xf32>
    %113 = vector.shape_cast %109 : vector<8x128xf32> to vector<1x8x128xf32>
    %114 = vector.shape_cast %110 : vector<8x128xf32> to vector<1x8x128xf32>
    %115 = vector.shape_cast %111 : vector<8x128xf32> to vector<1x8x128xf32>
    %116 = tpu.concatenate %112, %113, %114, %115 in 0 : vector<1x8x128xf32>, vector<1x8x128xf32>, vector<1x8x128xf32>, vector<1x8x128xf32> -> vector<4x8x128xf32>
    %117 = arith.truncf %116 : vector<4x8x128xf32> to vector<4x8x128xbf16>
    %118 = vector.extract_strided_slice %97 {offsets = [0, 1024], sizes = [8, 128], strides = [1, 1]} : vector<8x1536xf32> to vector<8x128xf32>
    %119 = vector.extract_strided_slice %97 {offsets = [0, 1152], sizes = [8, 128], strides = [1, 1]} : vector<8x1536xf32> to vector<8x128xf32>
    %120 = vector.extract_strided_slice %97 {offsets = [0, 1280], sizes = [8, 128], strides = [1, 1]} : vector<8x1536xf32> to vector<8x128xf32>
    %121 = vector.extract_strided_slice %97 {offsets = [0, 1408], sizes = [8, 128], strides = [1, 1]} : vector<8x1536xf32> to vector<8x128xf32>
    %122 = vector.shape_cast %118 : vector<8x128xf32> to vector<1x8x128xf32>
    %123 = vector.shape_cast %119 : vector<8x128xf32> to vector<1x8x128xf32>
    %124 = vector.shape_cast %120 : vector<8x128xf32> to vector<1x8x128xf32>
    %125 = vector.shape_cast %121 : vector<8x128xf32> to vector<1x8x128xf32>
    %126 = tpu.concatenate %122, %123, %124, %125 in 0 : vector<1x8x128xf32>, vector<1x8x128xf32>, vector<1x8x128xf32>, vector<1x8x128xf32> -> vector<4x8x128xf32>
    %127 = arith.truncf %126 : vector<4x8x128xf32> to vector<4x8x128xbf16>
    "tpu.trace_start"() <{level = 10 : i32, message = "hqd,hkd->hqk"}> : () -> ()
    %cst_43 = arith.constant dense<0.000000e+00> : vector<4x8x8xf32>
    %128 = tpu.matmul %107, %117, %cst_43 {dimension_numbers = #tpu.dot_dimension_numbers<[2], [2], [1], [1], [0, 0, 0, 1, 1, 1], [0], [0]>} : vector<4x8x128xbf16>, vector<4x8x128xbf16>, vector<4x8x8xf32> -> vector<4x8x8xf32>
    "tpu.trace_stop"() : () -> ()
    %cst_44 = arith.constant dense<0xFF800000> : vector<4x8xf32>
    %129 = vector.multi_reduction <maximumf>, %128, %cst_44 [2] : vector<4x8x8xf32> to vector<4x8xf32>
    %130 = vector.shape_cast %129 : vector<4x8xf32> to vector<4x8x1xf32>
    %131 = vector.broadcast %130 : vector<4x8x1xf32> to vector<4x8x8xf32>
    %132 = arith.subf %128, %131 : vector<4x8x8xf32>
    %133 = math.exp %132 : vector<4x8x8xf32>
    %cst_45 = arith.constant dense<0.000000e+00> : vector<4x8xf32>
    %134 = vector.multi_reduction <add>, %133, %cst_45 [2] : vector<4x8x8xf32> to vector<4x8xf32>
    %135 = vector.shape_cast %134 : vector<4x8xf32> to vector<4x8x1xf32>
    %136 = tpu.reciprocal %135 {approx = true} : vector<4x8x1xf32> -> vector<4x8x1xf32>
    %137 = vector.broadcast %136 : vector<4x8x1xf32> to vector<4x8x8xf32>
    %138 = arith.mulf %133, %137 : vector<4x8x8xf32>
    %139 = arith.truncf %138 : vector<4x8x8xf32> to vector<4x8x8xbf16>
    "tpu.trace_start"() <{level = 10 : i32, message = "hqk,hkd->hqd"}> : () -> ()
    %cst_46 = arith.constant dense<0.000000e+00> : vector<4x8x128xf32>
    %140 = tpu.matmul %139, %127, %cst_46 {dimension_numbers = #tpu.dot_dimension_numbers<[2], [1], [1], [2], [0, 0, 0, 1, 1, 2], [0], [0]>} : vector<4x8x8xbf16>, vector<4x8x128xbf16>, vector<4x8x128xf32> -> vector<4x8x128xf32>
    "tpu.trace_stop"() : () -> ()
    %141 = arith.truncf %140 : vector<4x8x128xf32> to vector<4x8x128xbf16>
    "tpu.trace_start"() <{level = 10 : i32, message = "hqd,hdo->hqo"}> : () -> ()
    %cst_47 = arith.constant dense<0.000000e+00> : vector<4x8x128xf32>
    %142 = tpu.matmul %141, %17, %cst_47 {dimension_numbers = #tpu.dot_dimension_numbers<[2], [1], [1], [2], [0, 0, 0, 1, 1, 2], [0], [0]>} : vector<4x8x128xbf16>, vector<4x128x128xbf16>, vector<4x8x128xf32> -> vector<4x8x128xf32>
    "tpu.trace_stop"() : () -> ()
    %cst_48 = arith.constant dense<0.000000e+00> : vector<8x128xf32>
    %143 = vector.multi_reduction <add>, %142, %cst_48 [0] : vector<4x8x128xf32> to vector<8x128xf32>
    %144 = tpu.concatenate %96, %143 in 0 : vector<8x128xf32>, vector<8x128xf32> -> vector<16x128xf32>
    %145 = arith.addf %5, %144 : vector<16x128xf32>
    %cst_49 = arith.constant dense<0.000000e+00> : vector<16xf32>
    %146 = vector.multi_reduction <add>, %145, %cst_49 [1] : vector<16x128xf32> to vector<16xf32>
    %147 = vector.shape_cast %146 : vector<16xf32> to vector<16x1xf32>
    %cst_50 = arith.constant 3.125000e-02 : f32
    %148 = vector.broadcast %cst_50 : f32 to vector<16x1xf32>
    %149 = arith.mulf %147, %148 : vector<16x1xf32>
    %150 = vector.broadcast %149 : vector<16x1xf32> to vector<16x128xf32>
    %151 = arith.subf %145, %150 : vector<16x128xf32>
    %152 = vector.broadcast %4 : vector<1x128xf32> to vector<16x128xf32>
    %153 = arith.mulf %151, %152 : vector<16x128xf32>
    %154 = arith.mulf %153, %153 : vector<16x128xf32>
    %cst_51 = arith.constant dense<0.000000e+00> : vector<16xf32>
    %155 = vector.multi_reduction <add>, %154, %cst_51 [1] : vector<16x128xf32> to vector<16xf32>
    %156 = vector.shape_cast %155 : vector<16xf32> to vector<16x1xf32>
    %cst_52 = arith.constant 0.0322580636 : f32
    %157 = vector.broadcast %cst_52 : f32 to vector<16x1xf32>
    %158 = arith.mulf %156, %157 : vector<16x1xf32>
    %159 = vector.broadcast %11 : vector<1x128xf32> to vector<16x128xf32>
    %160 = arith.mulf %159, %153 : vector<16x128xf32>
    %161 = math.sqrt %158 : vector<16x1xf32>
    %cst_53 = arith.constant 9.99999997E-7 : f32
    %162 = vector.broadcast %cst_53 : f32 to vector<16x1xf32>
    %163 = arith.addf %161, %162 : vector<16x1xf32>
    %164 = vector.broadcast %163 : vector<16x1xf32> to vector<16x128xf32>
    %165 = arith.divf %160, %164 : vector<16x128xf32>
    %166 = vector.broadcast %13 : vector<1x128xf32> to vector<16x128xf32>
    %167 = arith.addf %165, %166 : vector<16x128xf32>
    %168 = arith.truncf %167 : vector<16x128xf32> to vector<16x128xbf16>
    %cst_54 = arith.constant dense<0.000000e+00> : vector<16x128xf32>
    %169 = tpu.matmul %168, %19, %cst_54 {dimension_numbers = #tpu.dot_dimension_numbers<[1], [0], [0], [1], [0, 0, 1, 1], [], []>} : vector<16x128xbf16>, vector<128x128xbf16>, vector<16x128xf32> -> vector<16x128xf32>
    %170 = vector.broadcast %21 : vector<1x128xf32> to vector<16x128xf32>
    %171 = arith.addf %169, %170 : vector<16x128xf32>
    %cst_55 = arith.constant 0.000000e+00 : f32
    %172 = vector.broadcast %cst_55 : f32 to vector<16x128xf32>
    %173 = arith.maximumf %171, %172 : vector<16x128xf32>
    %174 = arith.truncf %173 : vector<16x128xf32> to vector<16x128xbf16>
    %cst_56 = arith.constant dense<0.000000e+00> : vector<16x128xf32>
    %175 = tpu.matmul %174, %23, %cst_56 {dimension_numbers = #tpu.dot_dimension_numbers<[1], [0], [0], [1], [0, 0, 1, 1], [], []>} : vector<16x128xbf16>, vector<128x128xbf16>, vector<16x128xf32> -> vector<16x128xf32>
    %176 = vector.broadcast %25 : vector<1x128xf32> to vector<16x128xf32>
    %177 = arith.addf %175, %176 : vector<16x128xf32>
    %178 = arith.addf %145, %177 : vector<16x128xf32>
    %c1 = arith.constant 1 : index
    %c0_57 = arith.constant 0 : index
    %c0_58 = arith.constant 0 : index
    %179 = vector.load %arg4[%c1, %c0_57, %c0_58] : memref<2x1x128xf32, #tpu.memory_space<vmem>>, vector<1x1x128xf32>
    %180 = vector.shape_cast %179 : vector<1x1x128xf32> to vector<1x128xf32>
    %c1_59 = arith.constant 1 : index
    %c0_60 = arith.constant 0 : index
    %c0_61 = arith.constant 0 : index
    %181 = vector.load %arg5[%c1_59, %c0_60, %c0_61] : memref<2x1x128xf32, #tpu.memory_space<vmem>>, vector<1x1x128xf32>
    %182 = vector.shape_cast %181 : vector<1x1x128xf32> to vector<1x128xf32>
    %c1_62 = arith.constant 1 : index
    %c0_63 = arith.constant 0 : index
    %c0_64 = arith.constant 0 : index
    %183 = vector.load %arg6[%c1_62, %c0_63, %c0_64] : memref<2x1x128xf32, #tpu.memory_space<vmem>>, vector<1x1x128xf32>
    %184 = vector.shape_cast %183 : vector<1x1x128xf32> to vector<1x128xf32>
    %c1_65 = arith.constant 1 : index
    %c0_66 = arith.constant 0 : index
    %c0_67 = arith.constant 0 : index
    %185 = vector.load %arg7[%c1_65, %c0_66, %c0_67] : memref<2x1x128xf32, #tpu.memory_space<vmem>>, vector<1x1x128xf32>
    %186 = vector.shape_cast %185 : vector<1x1x128xf32> to vector<1x128xf32>
    %c1_68 = arith.constant 1 : index
    %c0_69 = arith.constant 0 : index
    %c0_70 = arith.constant 0 : index
    %187 = vector.load %arg2[%c1_68, %c0_69, %c0_70] : memref<2x128x1536xbf16, #tpu.memory_space<vmem>>, vector<1x128x1536xbf16>
    %188 = vector.shape_cast %187 : vector<1x128x1536xbf16> to vector<128x1536xbf16>
    %c1_71 = arith.constant 1 : index
    %c0_72 = arith.constant 0 : index
    %c0_73 = arith.constant 0 : index
    %c0_74 = arith.constant 0 : index
    %189 = vector.load %arg3[%c1_71, %c0_72, %c0_73, %c0_74] : memref<2x4x128x128xbf16, #tpu.memory_space<vmem>>, vector<1x4x128x128xbf16>
    %190 = vector.shape_cast %189 : vector<1x4x128x128xbf16> to vector<4x128x128xbf16>
    %c1_75 = arith.constant 1 : index
    %c0_76 = arith.constant 0 : index
    %c0_77 = arith.constant 0 : index
    %191 = vector.load %arg8[%c1_75, %c0_76, %c0_77] : memref<2x128x128xbf16, #tpu.memory_space<vmem>>, vector<1x128x128xbf16>
    %192 = vector.shape_cast %191 : vector<1x128x128xbf16> to vector<128x128xbf16>
    %c1_78 = arith.constant 1 : index
    %c0_79 = arith.constant 0 : index
    %c0_80 = arith.constant 0 : index
    %193 = vector.load %arg9[%c1_78, %c0_79, %c0_80] : memref<2x1x128xf32, #tpu.memory_space<vmem>>, vector<1x1x128xf32>
    %194 = vector.shape_cast %193 : vector<1x1x128xf32> to vector<1x128xf32>
    %c1_81 = arith.constant 1 : index
    %c0_82 = arith.constant 0 : index
    %c0_83 = arith.constant 0 : index
    %195 = vector.load %arg10[%c1_81, %c0_82, %c0_83] : memref<2x128x128xbf16, #tpu.memory_space<vmem>>, vector<1x128x128xbf16>
    %196 = vector.shape_cast %195 : vector<1x128x128xbf16> to vector<128x128xbf16>
    %c1_84 = arith.constant 1 : index
    %c0_85 = arith.constant 0 : index
    %c0_86 = arith.constant 0 : index
    %197 = vector.load %arg11[%c1_84, %c0_85, %c0_86] : memref<2x1x128xf32, #tpu.memory_space<vmem>>, vector<1x1x128xf32>
    %198 = vector.shape_cast %197 : vector<1x1x128xf32> to vector<1x128xf32>
    %cst_87 = arith.constant dense<0.000000e+00> : vector<16xf32>
    %199 = vector.multi_reduction <add>, %178, %cst_87 [1] : vector<16x128xf32> to vector<16xf32>
    %200 = vector.shape_cast %199 : vector<16xf32> to vector<16x1xf32>
    %cst_88 = arith.constant 3.125000e-02 : f32
    %201 = vector.broadcast %cst_88 : f32 to vector<16x1xf32>
    %202 = arith.mulf %200, %201 : vector<16x1xf32>
    %203 = vector.broadcast %202 : vector<16x1xf32> to vector<16x128xf32>
    %204 = arith.subf %178, %203 : vector<16x128xf32>
    %205 = vector.broadcast %4 : vector<1x128xf32> to vector<16x128xf32>
    %206 = arith.mulf %204, %205 : vector<16x128xf32>
    %207 = arith.mulf %206, %206 : vector<16x128xf32>
    %cst_89 = arith.constant dense<0.000000e+00> : vector<16xf32>
    %208 = vector.multi_reduction <add>, %207, %cst_89 [1] : vector<16x128xf32> to vector<16xf32>
    %209 = vector.shape_cast %208 : vector<16xf32> to vector<16x1xf32>
    %cst_90 = arith.constant 0.0322580636 : f32
    %210 = vector.broadcast %cst_90 : f32 to vector<16x1xf32>
    %211 = arith.mulf %209, %210 : vector<16x1xf32>
    %212 = vector.broadcast %180 : vector<1x128xf32> to vector<16x128xf32>
    %213 = arith.mulf %212, %206 : vector<16x128xf32>
    %214 = math.sqrt %211 : vector<16x1xf32>
    %cst_91 = arith.constant 9.99999997E-7 : f32
    %215 = vector.broadcast %cst_91 : f32 to vector<16x1xf32>
    %216 = arith.addf %214, %215 : vector<16x1xf32>
    %217 = vector.broadcast %216 : vector<16x1xf32> to vector<16x128xf32>
    %218 = arith.divf %213, %217 : vector<16x128xf32>
    %219 = vector.broadcast %182 : vector<1x128xf32> to vector<16x128xf32>
    %220 = arith.addf %218, %219 : vector<16x128xf32>
    %221 = arith.truncf %220 : vector<16x128xf32> to vector<16x128xbf16>
    %cst_92 = arith.constant dense<0.000000e+00> : vector<16x1536xf32>
    %222 = tpu.matmul %221, %188, %cst_92 {dimension_numbers = #tpu.dot_dimension_numbers<[1], [0], [0], [1], [0, 0, 1, 1], [], []>} : vector<16x128xbf16>, vector<128x1536xbf16>, vector<16x1536xf32> -> vector<16x1536xf32>
    %223 = vector.extract_strided_slice %222 {offsets = [0, 0], sizes = [8, 1536], strides = [1, 1]} : vector<16x1536xf32> to vector<8x1536xf32>
    %224 = vector.extract_strided_slice %223 {offsets = [0, 0], sizes = [8, 128], strides = [1, 1]} : vector<8x1536xf32> to vector<8x128xf32>
    %225 = vector.extract_strided_slice %223 {offsets = [0, 128], sizes = [8, 128], strides = [1, 1]} : vector<8x1536xf32> to vector<8x128xf32>
    %226 = vector.extract_strided_slice %223 {offsets = [0, 256], sizes = [8, 128], strides = [1, 1]} : vector<8x1536xf32> to vector<8x128xf32>
    %227 = vector.extract_strided_slice %223 {offsets = [0, 384], sizes = [8, 128], strides = [1, 1]} : vector<8x1536xf32> to vector<8x128xf32>
    %228 = vector.shape_cast %224 : vector<8x128xf32> to vector<1x8x128xf32>
    %229 = vector.shape_cast %225 : vector<8x128xf32> to vector<1x8x128xf32>
    %230 = vector.shape_cast %226 : vector<8x128xf32> to vector<1x8x128xf32>
    %231 = vector.shape_cast %227 : vector<8x128xf32> to vector<1x8x128xf32>
    %232 = tpu.concatenate %228, %229, %230, %231 in 0 : vector<1x8x128xf32>, vector<1x8x128xf32>, vector<1x8x128xf32>, vector<1x8x128xf32> -> vector<4x8x128xf32>
    %233 = arith.truncf %232 : vector<4x8x128xf32> to vector<4x8x128xbf16>
    %234 = vector.extract_strided_slice %223 {offsets = [0, 512], sizes = [8, 128], strides = [1, 1]} : vector<8x1536xf32> to vector<8x128xf32>
    %235 = vector.extract_strided_slice %223 {offsets = [0, 640], sizes = [8, 128], strides = [1, 1]} : vector<8x1536xf32> to vector<8x128xf32>
    %236 = vector.extract_strided_slice %223 {offsets = [0, 768], sizes = [8, 128], strides = [1, 1]} : vector<8x1536xf32> to vector<8x128xf32>
    %237 = vector.extract_strided_slice %223 {offsets = [0, 896], sizes = [8, 128], strides = [1, 1]} : vector<8x1536xf32> to vector<8x128xf32>
    %238 = vector.shape_cast %234 : vector<8x128xf32> to vector<1x8x128xf32>
    %239 = vector.shape_cast %235 : vector<8x128xf32> to vector<1x8x128xf32>
    %240 = vector.shape_cast %236 : vector<8x128xf32> to vector<1x8x128xf32>
    %241 = vector.shape_cast %237 : vector<8x128xf32> to vector<1x8x128xf32>
    %242 = tpu.concatenate %238, %239, %240, %241 in 0 : vector<1x8x128xf32>, vector<1x8x128xf32>, vector<1x8x128xf32>, vector<1x8x128xf32> -> vector<4x8x128xf32>
    %243 = arith.truncf %242 : vector<4x8x128xf32> to vector<4x8x128xbf16>
    %244 = vector.extract_strided_slice %223 {offsets = [0, 1024], sizes = [8, 128], strides = [1, 1]} : vector<8x1536xf32> to vector<8x128xf32>
    %245 = vector.extract_strided_slice %223 {offsets = [0, 1152], sizes = [8, 128], strides = [1, 1]} : vector<8x1536xf32> to vector<8x128xf32>
    %246 = vector.extract_strided_slice %223 {offsets = [0, 1280], sizes = [8, 128], strides = [1, 1]} : vector<8x1536xf32> to vector<8x128xf32>
    %247 = vector.extract_strided_slice %223 {offsets = [0, 1408], sizes = [8, 128], strides = [1, 1]} : vector<8x1536xf32> to vector<8x128xf32>
    %248 = vector.shape_cast %244 : vector<8x128xf32> to vector<1x8x128xf32>
    %249 = vector.shape_cast %245 : vector<8x128xf32> to vector<1x8x128xf32>
    %250 = vector.shape_cast %246 : vector<8x128xf32> to vector<1x8x128xf32>
    %251 = vector.shape_cast %247 : vector<8x128xf32> to vector<1x8x128xf32>
    %252 = tpu.concatenate %248, %249, %250, %251 in 0 : vector<1x8x128xf32>, vector<1x8x128xf32>, vector<1x8x128xf32>, vector<1x8x128xf32> -> vector<4x8x128xf32>
    %253 = arith.truncf %252 : vector<4x8x128xf32> to vector<4x8x128xbf16>
    "tpu.trace_start"() <{level = 10 : i32, message = "hqd,hkd->hqk"}> : () -> ()
    %cst_93 = arith.constant dense<0.000000e+00> : vector<4x8x8xf32>
    %254 = tpu.matmul %233, %243, %cst_93 {dimension_numbers = #tpu.dot_dimension_numbers<[2], [2], [1], [1], [0, 0, 0, 1, 1, 1], [0], [0]>} : vector<4x8x128xbf16>, vector<4x8x128xbf16>, vector<4x8x8xf32> -> vector<4x8x8xf32>
    "tpu.trace_stop"() : () -> ()
    %cst_94 = arith.constant dense<0xFF800000> : vector<4x8xf32>
    %255 = vector.multi_reduction <maximumf>, %254, %cst_94 [2] : vector<4x8x8xf32> to vector<4x8xf32>
    %256 = vector.shape_cast %255 : vector<4x8xf32> to vector<4x8x1xf32>
    %257 = vector.broadcast %256 : vector<4x8x1xf32> to vector<4x8x8xf32>
    %258 = arith.subf %254, %257 : vector<4x8x8xf32>
    %259 = math.exp %258 : vector<4x8x8xf32>
    %cst_95 = arith.constant dense<0.000000e+00> : vector<4x8xf32>
    %260 = vector.multi_reduction <add>, %259, %cst_95 [2] : vector<4x8x8xf32> to vector<4x8xf32>
    %261 = vector.shape_cast %260 : vector<4x8xf32> to vector<4x8x1xf32>
    %262 = tpu.reciprocal %261 {approx = true} : vector<4x8x1xf32> -> vector<4x8x1xf32>
    %263 = vector.broadcast %262 : vector<4x8x1xf32> to vector<4x8x8xf32>
    %264 = arith.mulf %259, %263 : vector<4x8x8xf32>
    %265 = arith.truncf %264 : vector<4x8x8xf32> to vector<4x8x8xbf16>
    "tpu.trace_start"() <{level = 10 : i32, message = "hqk,hkd->hqd"}> : () -> ()
    %cst_96 = arith.constant dense<0.000000e+00> : vector<4x8x128xf32>
    %266 = tpu.matmul %265, %253, %cst_96 {dimension_numbers = #tpu.dot_dimension_numbers<[2], [1], [1], [2], [0, 0, 0, 1, 1, 2], [0], [0]>} : vector<4x8x8xbf16>, vector<4x8x128xbf16>, vector<4x8x128xf32> -> vector<4x8x128xf32>
    "tpu.trace_stop"() : () -> ()
    %267 = arith.truncf %266 : vector<4x8x128xf32> to vector<4x8x128xbf16>
    "tpu.trace_start"() <{level = 10 : i32, message = "hqd,hdo->hqo"}> : () -> ()
    %cst_97 = arith.constant dense<0.000000e+00> : vector<4x8x128xf32>
    %268 = tpu.matmul %267, %190, %cst_97 {dimension_numbers = #tpu.dot_dimension_numbers<[2], [1], [1], [2], [0, 0, 0, 1, 1, 2], [0], [0]>} : vector<4x8x128xbf16>, vector<4x128x128xbf16>, vector<4x8x128xf32> -> vector<4x8x128xf32>
    "tpu.trace_stop"() : () -> ()
    %cst_98 = arith.constant dense<0.000000e+00> : vector<8x128xf32>
    %269 = vector.multi_reduction <add>, %268, %cst_98 [0] : vector<4x8x128xf32> to vector<8x128xf32>
    %270 = vector.extract_strided_slice %222 {offsets = [8, 0], sizes = [8, 1536], strides = [1, 1]} : vector<16x1536xf32> to vector<8x1536xf32>
    %271 = vector.extract_strided_slice %270 {offsets = [0, 0], sizes = [8, 128], strides = [1, 1]} : vector<8x1536xf32> to vector<8x128xf32>
    %272 = vector.extract_strided_slice %270 {offsets = [0, 128], sizes = [8, 128], strides = [1, 1]} : vector<8x1536xf32> to vector<8x128xf32>
    %273 = vector.extract_strided_slice %270 {offsets = [0, 256], sizes = [8, 128], strides = [1, 1]} : vector<8x1536xf32> to vector<8x128xf32>
    %274 = vector.extract_strided_slice %270 {offsets = [0, 384], sizes = [8, 128], strides = [1, 1]} : vector<8x1536xf32> to vector<8x128xf32>
    %275 = vector.shape_cast %271 : vector<8x128xf32> to vector<1x8x128xf32>
    %276 = vector.shape_cast %272 : vector<8x128xf32> to vector<1x8x128xf32>
    %277 = vector.shape_cast %273 : vector<8x128xf32> to vector<1x8x128xf32>
    %278 = vector.shape_cast %274 : vector<8x128xf32> to vector<1x8x128xf32>
    %279 = tpu.concatenate %275, %276, %277, %278 in 0 : vector<1x8x128xf32>, vector<1x8x128xf32>, vector<1x8x128xf32>, vector<1x8x128xf32> -> vector<4x8x128xf32>
    %280 = arith.truncf %279 : vector<4x8x128xf32> to vector<4x8x128xbf16>
    %281 = vector.extract_strided_slice %270 {offsets = [0, 512], sizes = [8, 128], strides = [1, 1]} : vector<8x1536xf32> to vector<8x128xf32>
    %282 = vector.extract_strided_slice %270 {offsets = [0, 640], sizes = [8, 128], strides = [1, 1]} : vector<8x1536xf32> to vector<8x128xf32>
    %283 = vector.extract_strided_slice %270 {offsets = [0, 768], sizes = [8, 128], strides = [1, 1]} : vector<8x1536xf32> to vector<8x128xf32>
    %284 = vector.extract_strided_slice %270 {offsets = [0, 896], sizes = [8, 128], strides = [1, 1]} : vector<8x1536xf32> to vector<8x128xf32>
    %285 = vector.shape_cast %281 : vector<8x128xf32> to vector<1x8x128xf32>
    %286 = vector.shape_cast %282 : vector<8x128xf32> to vector<1x8x128xf32>
    %287 = vector.shape_cast %283 : vector<8x128xf32> to vector<1x8x128xf32>
    %288 = vector.shape_cast %284 : vector<8x128xf32> to vector<1x8x128xf32>
    %289 = tpu.concatenate %285, %286, %287, %288 in 0 : vector<1x8x128xf32>, vector<1x8x128xf32>, vector<1x8x128xf32>, vector<1x8x128xf32> -> vector<4x8x128xf32>
    %290 = arith.truncf %289 : vector<4x8x128xf32> to vector<4x8x128xbf16>
    %291 = vector.extract_strided_slice %270 {offsets = [0, 1024], sizes = [8, 128], strides = [1, 1]} : vector<8x1536xf32> to vector<8x128xf32>
    %292 = vector.extract_strided_slice %270 {offsets = [0, 1152], sizes = [8, 128], strides = [1, 1]} : vector<8x1536xf32> to vector<8x128xf32>
    %293 = vector.extract_strided_slice %270 {offsets = [0, 1280], sizes = [8, 128], strides = [1, 1]} : vector<8x1536xf32> to vector<8x128xf32>
    %294 = vector.extract_strided_slice %270 {offsets = [0, 1408], sizes = [8, 128], strides = [1, 1]} : vector<8x1536xf32> to vector<8x128xf32>
    %295 = vector.shape_cast %291 : vector<8x128xf32> to vector<1x8x128xf32>
    %296 = vector.shape_cast %292 : vector<8x128xf32> to vector<1x8x128xf32>
    %297 = vector.shape_cast %293 : vector<8x128xf32> to vector<1x8x128xf32>
    %298 = vector.shape_cast %294 : vector<8x128xf32> to vector<1x8x128xf32>
    %299 = tpu.concatenate %295, %296, %297, %298 in 0 : vector<1x8x128xf32>, vector<1x8x128xf32>, vector<1x8x128xf32>, vector<1x8x128xf32> -> vector<4x8x128xf32>
    %300 = arith.truncf %299 : vector<4x8x128xf32> to vector<4x8x128xbf16>
    "tpu.trace_start"() <{level = 10 : i32, message = "hqd,hkd->hqk"}> : () -> ()
    %cst_99 = arith.constant dense<0.000000e+00> : vector<4x8x8xf32>
    %301 = tpu.matmul %280, %290, %cst_99 {dimension_numbers = #tpu.dot_dimension_numbers<[2], [2], [1], [1], [0, 0, 0, 1, 1, 1], [0], [0]>} : vector<4x8x128xbf16>, vector<4x8x128xbf16>, vector<4x8x8xf32> -> vector<4x8x8xf32>
    "tpu.trace_stop"() : () -> ()
    %cst_100 = arith.constant dense<0xFF800000> : vector<4x8xf32>
    %302 = vector.multi_reduction <maximumf>, %301, %cst_100 [2] : vector<4x8x8xf32> to vector<4x8xf32>
    %303 = vector.shape_cast %302 : vector<4x8xf32> to vector<4x8x1xf32>
    %304 = vector.broadcast %303 : vector<4x8x1xf32> to vector<4x8x8xf32>
    %305 = arith.subf %301, %304 : vector<4x8x8xf32>
    %306 = math.exp %305 : vector<4x8x8xf32>
    %cst_101 = arith.constant dense<0.000000e+00> : vector<4x8xf32>
    %307 = vector.multi_reduction <add>, %306, %cst_101 [2] : vector<4x8x8xf32> to vector<4x8xf32>
    %308 = vector.shape_cast %307 : vector<4x8xf32> to vector<4x8x1xf32>
    %309 = tpu.reciprocal %308 {approx = true} : vector<4x8x1xf32> -> vector<4x8x1xf32>
    %310 = vector.broadcast %309 : vector<4x8x1xf32> to vector<4x8x8xf32>
    %311 = arith.mulf %306, %310 : vector<4x8x8xf32>
    %312 = arith.truncf %311 : vector<4x8x8xf32> to vector<4x8x8xbf16>
    "tpu.trace_start"() <{level = 10 : i32, message = "hqk,hkd->hqd"}> : () -> ()
    %cst_102 = arith.constant dense<0.000000e+00> : vector<4x8x128xf32>
    %313 = tpu.matmul %312, %300, %cst_102 {dimension_numbers = #tpu.dot_dimension_numbers<[2], [1], [1], [2], [0, 0, 0, 1, 1, 2], [0], [0]>} : vector<4x8x8xbf16>, vector<4x8x128xbf16>, vector<4x8x128xf32> -> vector<4x8x128xf32>
    "tpu.trace_stop"() : () -> ()
    %314 = arith.truncf %313 : vector<4x8x128xf32> to vector<4x8x128xbf16>
    "tpu.trace_start"() <{level = 10 : i32, message = "hqd,hdo->hqo"}> : () -> ()
    %cst_103 = arith.constant dense<0.000000e+00> : vector<4x8x128xf32>
    %315 = tpu.matmul %314, %190, %cst_103 {dimension_numbers = #tpu.dot_dimension_numbers<[2], [1], [1], [2], [0, 0, 0, 1, 1, 2], [0], [0]>} : vector<4x8x128xbf16>, vector<4x128x128xbf16>, vector<4x8x128xf32> -> vector<4x8x128xf32>
    "tpu.trace_stop"() : () -> ()
    %cst_104 = arith.constant dense<0.000000e+00> : vector<8x128xf32>
    %316 = vector.multi_reduction <add>, %315, %cst_104 [0] : vector<4x8x128xf32> to vector<8x128xf32>
    %317 = tpu.concatenate %269, %316 in 0 : vector<8x128xf32>, vector<8x128xf32> -> vector<16x128xf32>
    %318 = arith.addf %178, %317 : vector<16x128xf32>
    %cst_105 = arith.constant dense<0.000000e+00> : vector<16xf32>
    %319 = vector.multi_reduction <add>, %318, %cst_105 [1] : vector<16x128xf32> to vector<16xf32>
    %320 = vector.shape_cast %319 : vector<16xf32> to vector<16x1xf32>
    %cst_106 = arith.constant 3.125000e-02 : f32
    %321 = vector.broadcast %cst_106 : f32 to vector<16x1xf32>
    %322 = arith.mulf %320, %321 : vector<16x1xf32>
    %323 = vector.broadcast %322 : vector<16x1xf32> to vector<16x128xf32>
    %324 = arith.subf %318, %323 : vector<16x128xf32>
    %325 = vector.broadcast %4 : vector<1x128xf32> to vector<16x128xf32>
    %326 = arith.mulf %324, %325 : vector<16x128xf32>
    %327 = arith.mulf %326, %326 : vector<16x128xf32>
    %cst_107 = arith.constant dense<0.000000e+00> : vector<16xf32>
    %328 = vector.multi_reduction <add>, %327, %cst_107 [1] : vector<16x128xf32> to vector<16xf32>
    %329 = vector.shape_cast %328 : vector<16xf32> to vector<16x1xf32>
    %cst_108 = arith.constant 0.0322580636 : f32
    %330 = vector.broadcast %cst_108 : f32 to vector<16x1xf32>
    %331 = arith.mulf %329, %330 : vector<16x1xf32>
    %332 = vector.broadcast %184 : vector<1x128xf32> to vector<16x128xf32>
    %333 = arith.mulf %332, %326 : vector<16x128xf32>
    %334 = math.sqrt %331 : vector<16x1xf32>
    %cst_109 = arith.constant 9.99999997E-7 : f32
    %335 = vector.broadcast %cst_109 : f32 to vector<16x1xf32>
    %336 = arith.addf %334, %335 : vector<16x1xf32>
    %337 = vector.broadcast %336 : vector<16x1xf32> to vector<16x128xf32>
    %338 = arith.divf %333, %337 : vector<16x128xf32>
    %339 = vector.broadcast %186 : vector<1x128xf32> to vector<16x128xf32>
    %340 = arith.addf %338, %339 : vector<16x128xf32>
    %341 = arith.truncf %340 : vector<16x128xf32> to vector<16x128xbf16>
    %cst_110 = arith.constant dense<0.000000e+00> : vector<16x128xf32>
    %342 = tpu.matmul %341, %192, %cst_110 {dimension_numbers = #tpu.dot_dimension_numbers<[1], [0], [0], [1], [0, 0, 1, 1], [], []>} : vector<16x128xbf16>, vector<128x128xbf16>, vector<16x128xf32> -> vector<16x128xf32>
    %343 = vector.broadcast %194 : vector<1x128xf32> to vector<16x128xf32>
    %344 = arith.addf %342, %343 : vector<16x128xf32>
    %cst_111 = arith.constant 0.000000e+00 : f32
    %345 = vector.broadcast %cst_111 : f32 to vector<16x128xf32>
    %346 = arith.maximumf %344, %345 : vector<16x128xf32>
    %347 = arith.truncf %346 : vector<16x128xf32> to vector<16x128xbf16>
    %cst_112 = arith.constant dense<0.000000e+00> : vector<16x128xf32>
    %348 = tpu.matmul %347, %196, %cst_112 {dimension_numbers = #tpu.dot_dimension_numbers<[1], [0], [0], [1], [0, 0, 1, 1], [], []>} : vector<16x128xbf16>, vector<128x128xbf16>, vector<16x128xf32> -> vector<16x128xf32>
    %349 = vector.broadcast %198 : vector<1x128xf32> to vector<16x128xf32>
    %350 = arith.addf %348, %349 : vector<16x128xf32>
    %351 = arith.addf %318, %350 : vector<16x128xf32>
    %c0_113 = arith.constant 0 : index
    %c0_114 = arith.constant 0 : index
    %352 = vector.load %arg12[%c0_113, %c0_114] : memref<1x128xf32, #tpu.memory_space<vmem>>, vector<1x128xf32>
    %c0_115 = arith.constant 0 : index
    %c0_116 = arith.constant 0 : index
    %353 = vector.load %arg13[%c0_115, %c0_116] : memref<1x128xf32, #tpu.memory_space<vmem>>, vector<1x128xf32>
    %cst_117 = arith.constant dense<0.000000e+00> : vector<16xf32>
    %354 = vector.multi_reduction <add>, %351, %cst_117 [1] : vector<16x128xf32> to vector<16xf32>
    %355 = vector.shape_cast %354 : vector<16xf32> to vector<16x1xf32>
    %cst_118 = arith.constant 3.125000e-02 : f32
    %356 = vector.broadcast %cst_118 : f32 to vector<16x1xf32>
    %357 = arith.mulf %355, %356 : vector<16x1xf32>
    %358 = vector.broadcast %357 : vector<16x1xf32> to vector<16x128xf32>
    %359 = arith.subf %351, %358 : vector<16x128xf32>
    %360 = vector.broadcast %4 : vector<1x128xf32> to vector<16x128xf32>
    %361 = arith.mulf %359, %360 : vector<16x128xf32>
    %362 = arith.mulf %361, %361 : vector<16x128xf32>
    %cst_119 = arith.constant dense<0.000000e+00> : vector<16xf32>
    %363 = vector.multi_reduction <add>, %362, %cst_119 [1] : vector<16x128xf32> to vector<16xf32>
    %364 = vector.shape_cast %363 : vector<16xf32> to vector<16x1xf32>
    %cst_120 = arith.constant 0.0322580636 : f32
    %365 = vector.broadcast %cst_120 : f32 to vector<16x1xf32>
    %366 = arith.mulf %364, %365 : vector<16x1xf32>
    %367 = vector.broadcast %352 : vector<1x128xf32> to vector<16x128xf32>
    %368 = arith.mulf %367, %361 : vector<16x128xf32>
    %369 = math.sqrt %366 : vector<16x1xf32>
    %cst_121 = arith.constant 9.99999997E-7 : f32
    %370 = vector.broadcast %cst_121 : f32 to vector<16x1xf32>
    %371 = arith.addf %369, %370 : vector<16x1xf32>
    %372 = vector.broadcast %371 : vector<16x1xf32> to vector<16x128xf32>
    %373 = arith.divf %368, %372 : vector<16x128xf32>
    %374 = vector.broadcast %353 : vector<1x128xf32> to vector<16x128xf32>
    %375 = arith.addf %373, %374 : vector<16x128xf32>
    %c0_122 = arith.constant 0 : index
    %c0_123 = arith.constant 0 : index
    %376 = vector.load %arg14[%c0_122, %c0_123] : memref<16x128xf32, #tpu.memory_space<vmem>>, vector<16x128xf32>
    tpu.vector_store %arg14[%c0_122, %c0_123], %375 {strides = array<i32>} : memref<16x128xf32, #tpu.memory_space<vmem>>, vector<16x128xf32>,
    return
  }
  func.func @transform_0(%arg0: i32) -> (i32, i32) {
    %c0_i32 = arith.constant 0 : i32
    %c0_i32_0 = arith.constant 0 : i32
    %c0_i32_1 = arith.constant 0 : i32
    return %c0_i32, %c0_i32_0 : i32, i32
  }
  func.func @transform_1(%arg0: i32) -> (i32, i32, i32) {
    %c0_i32 = arith.constant 0 : i32
    %c0_i32_0 = arith.constant 0 : i32
    %c0_i32_1 = arith.constant 0 : i32
    %c0_i32_2 = arith.constant 0 : i32
    return %c0_i32, %c0_i32_0, %c0_i32_1 : i32, i32, i32
  }
  func.func @transform_2(%arg0: i32) -> (i32, i32, i32, i32) {
    %c0_i32 = arith.constant 0 : i32
    %c0_i32_0 = arith.constant 0 : i32
    %c0_i32_1 = arith.constant 0 : i32
    %c0_i32_2 = arith.constant 0 : i32
    %c0_i32_3 = arith.constant 0 : i32
    return %c0_i32, %c0_i32_0, %c0_i32_1, %c0_i32_2 : i32, i32, i32, i32
  }
  func.func @transform_3(%arg0: i32) -> (i32, i32, i32) {
    %c0_i32 = arith.constant 0 : i32
    %c0_i32_0 = arith.constant 0 : i32
    %c0_i32_1 = arith.constant 0 : i32
    %c0_i32_2 = arith.constant 0 : i32
    return %c0_i32, %c0_i32_0, %c0_i32_1 : i32, i32, i32
  }
  func.func @transform_4(%arg0: i32) -> (i32, i32, i32) {
    %c0_i32 = arith.constant 0 : i32
    %c0_i32_0 = arith.constant 0 : i32
    %c0_i32_1 = arith.constant 0 : i32
    %c0_i32_2 = arith.constant 0 : i32
    return %c0_i32, %c0_i32_0, %c0_i32_1 : i32, i32, i32
  }
  func.func @transform_5(%arg0: i32) -> (i32, i32, i32) {
    %c0_i32 = arith.constant 0 : i32
    %c0_i32_0 = arith.constant 0 : i32
    %c0_i32_1 = arith.constant 0 : i32
    %c0_i32_2 = arith.constant 0 : i32
    return %c0_i32, %c0_i32_0, %c0_i32_1 : i32, i32, i32
  }
  func.func @transform_6(%arg0: i32) -> (i32, i32, i32) {
    %c0_i32 = arith.constant 0 : i32
    %c0_i32_0 = arith.constant 0 : i32
    %c0_i32_1 = arith.constant 0 : i32
    %c0_i32_2 = arith.constant 0 : i32
    return %c0_i32, %c0_i32_0, %c0_i32_1 : i32, i32, i32
  }
  func.func @transform_7(%arg0: i32) -> (i32, i32, i32) {
    %c0_i32 = arith.constant 0 : i32
    %c0_i32_0 = arith.constant 0 : i32
    %c0_i32_1 = arith.constant 0 : i32
    %c0_i32_2 = arith.constant 0 : i32
    return %c0_i32, %c0_i32_0, %c0_i32_1 : i32, i32, i32
  }
  func.func @transform_8(%arg0: i32) -> (i32, i32, i32) {
    %c0_i32 = arith.constant 0 : i32
    %c0_i32_0 = arith.constant 0 : i32
    %c0_i32_1 = arith.constant 0 : i32
    %c0_i32_2 = arith.constant 0 : i32
    return %c0_i32, %c0_i32_0, %c0_i32_1 : i32, i32, i32
  }
  func.func @transform_9(%arg0: i32) -> (i32, i32, i32) {
    %c0_i32 = arith.constant 0 : i32
    %c0_i32_0 = arith.constant 0 : i32
    %c0_i32_1 = arith.constant 0 : i32
    %c0_i32_2 = arith.constant 0 : i32
    return %c0_i32, %c0_i32_0, %c0_i32_1 : i32, i32, i32
  }
  func.func @transform_10(%arg0: i32) -> (i32, i32, i32) {
    %c0_i32 = arith.constant 0 : i32
    %c0_i32_0 = arith.constant 0 : i32
    %c0_i32_1 = arith.constant 0 : i32
    %c0_i32_2 = arith.constant 0 : i32
    return %c0_i32, %c0_i32_0, %c0_i32_1 : i32, i32, i32
  }
  func.func @transform_11(%arg0: i32) -> (i32, i32) {
    %c0_i32 = arith.constant 0 : i32
    %c0_i32_0 = arith.constant 0 : i32
    %c0_i32_1 = arith.constant 0 : i32
    return %c0_i32, %c0_i32_0 : i32, i32
  }
  func.func @transform_12(%arg0: i32) -> (i32, i32) {
    %c0_i32 = arith.constant 0 : i32
    %c0_i32_0 = arith.constant 0 : i32
    %c0_i32_1 = arith.constant 0 : i32
    return %c0_i32, %c0_i32_0 : i32, i32
  }
  func.func @transform_13(%arg0: i32) -> (i32, i32) {
    %c0_i32 = arith.constant 0 : i32
    %c0_i32_0 = arith.constant 0 : i32
    %c0_i32_1 = arith.constant 0 : i32
    return %c0_i32, %c0_i32_0 : i32, i32
  }
}

</mosaic_0001>

<llo_original>
// kernel: tpu_custom_call.1
$region0: #{tpu_custom_call.1}
  #allocation0 [shape = 'u32[]', space=smem, size = 0x4, offset = 0x4, fixed_abs, tag = 'smem constant byte address 0x4 - core index']
  #allocation1 [shape = 'u32[144,128]{1,0:T(1,128)}', space=vmem, size = 0x12000, scoped, tag = 'internal scratch']
  %s0 = inlined_call_operand.hbm [shape: f32[16,128], index: 0, kind: input, shape index: {}]
  %s1 = inlined_call_operand.hbm [shape: bf16[2,128,1536], index: 1, kind: input, shape index: {}]
  %s2 = inlined_call_operand.hbm [shape: bf16[2,4,128,128], index: 2, kind: input, shape index: {}]
  %s3 = inlined_call_operand.vmem [shape: f32[2,1,128], index: 3, kind: input, shape index: {}]
  %s4 = inlined_call_operand.vmem [shape: f32[2,1,128], index: 4, kind: input, shape index: {}]
  %s5 = inlined_call_operand.vmem [shape: f32[2,1,128], index: 5, kind: input, shape index: {}]
  %s6 = inlined_call_operand.vmem [shape: f32[2,1,128], index: 6, kind: input, shape index: {}]
  %s7 = inlined_call_operand.hbm [shape: bf16[2,128,128], index: 7, kind: input, shape index: {}]
  %s8 = inlined_call_operand.vmem [shape: f32[2,1,128], index: 8, kind: input, shape index: {}]
  %s9 = inlined_call_operand.hbm [shape: bf16[2,128,128], index: 9, kind: input, shape index: {}]
  %s10 = inlined_call_operand.vmem [shape: f32[2,1,128], index: 10, kind: input, shape index: {}]
  %s11 = inlined_call_operand.vmem [shape: f32[1,128], index: 11, kind: input, shape index: {}]
  %s12 = inlined_call_operand.vmem [shape: f32[1,128], index: 12, kind: input, shape index: {}]
  %s13 = inlined_call_operand.hbm [shape: f32[16,128], index: 13, kind: output, shape index: {}]
  %s14 = sld [smem:[#allocation0]]
  $region82: #{tpu_custom_call.1} parent=0
    _
  %s16 = ssub.s32 1, %s14
  %s17 = scalar_select 0, %s16, %s14
  $region1: #{tpu_custom_call.1} parent=0
    #allocation2 [shape = 'u8[8192]{0}', space=vmem, size = 0x2000, scoped, tag = 'input window, operand 0, single buffered']
    #allocation3 [shape = 's32[1]{0}', space=sflag, size = 0x4, scoped, tag = 'scoped memory for tpu_custom_call.1']
    #allocation4 [shape = 's32[1]{0}', space=sflag, size = 0x4, scoped, tag = 'scoped memory for tpu_custom_call.1']
    #allocation5 [shape = 'u8[786432]{0}', space=vmem, size = 0xc0000, scoped, tag = 'input window, operand 1, single buffered']
    #allocation6 [shape = 's32[1]{0}', space=sflag, size = 0x4, scoped, tag = 'scoped memory for tpu_custom_call.1']
    #allocation7 [shape = 'u8[262144]{0}', space=vmem, size = 0x40000, scoped, tag = 'input window, operand 2, single buffered']
    #allocation8 [shape = 'u8[65536]{0}', space=vmem, size = 0x10000, scoped, tag = 'input window, operand 7, single buffered']
    #allocation9 [shape = 's32[1]{0}', space=sflag, size = 0x4, scoped, tag = 'scoped memory for tpu_custom_call.1']
    #allocation10 [shape = 'u8[65536]{0}', space=vmem, size = 0x10000, scoped, tag = 'input window, operand 9, single buffered']
    #allocation11 [shape = 'u8[8192]{0}', space=vmem, size = 0x2000, scoped, tag = 'output window, operand 0, single buffered']
    %18 = vsyncpa [#allocation3], 0
    %19 = vsyncpa [#allocation6], 0
    %20 = vsyncpa [#allocation9], 0
    %21 = vsyncpa [#allocation4], 0
    // Predicated region
    $region2: #{tpu_custom_call.1} parent=1 // pred_check
      _
    $region3: #{tpu_custom_call.1} parent=1 // pred_check_branch
      %23 = sbr.rel (0) target = $region5
    $region4: #{tpu_custom_call.1} parent=1 // pred_region
      %s25 = ssub.s32 256, 256
      %26 = vsyncadd [#allocation3], %s25
      %s27 = sshll.u32 [#allocation2], 4
      %s28 = int_to_ptr.vmem [resolvable:$true] %s27
      %33 = dma.hbm_to_vmem [thread:$0]  %s0, 256, %s28, [#allocation3], 128, 128, 8
    $region5: #{tpu_custom_call.1} parent=1 // pred_fallthru
      _
    // Predicated region
    $region6: #{tpu_custom_call.1} parent=1 // pred_check
      _
    $region7: #{tpu_custom_call.1} parent=1 // pred_check_branch
      %35 = sbr.rel (0) target = $region9
    $region8: #{tpu_custom_call.1} parent=1 // pred_region
      %s37 = ssub.s32 24576, 24576
      %38 = vsyncadd [#allocation6], %s37
      %s39 = sshll.u32 [#allocation5], 4
      %s40 = int_to_ptr.vmem [resolvable:$true] %s39
      %45 = dma.hbm_to_vmem [thread:$0]  %s1, 24576, %s40, [#allocation6], 768, 768, 48
    $region9: #{tpu_custom_call.1} parent=1 // pred_fallthru
      _
    // Predicated region
    $region10: #{tpu_custom_call.1} parent=1 // pred_check
      _
    $region11: #{tpu_custom_call.1} parent=1 // pred_check_branch
      %47 = sbr.rel (0) target = $region13
    $region12: #{tpu_custom_call.1} parent=1 // pred_region
      %s49 = ssub.s32 8192, 8192
      %50 = vsyncadd [#allocation6], %s49
      %s51 = sshll.u32 [#allocation7], 4
      %s52 = int_to_ptr.vmem [resolvable:$true] %s51
      %57 = dma.hbm_to_vmem [thread:$0]  %s2, 8192, %s52, [#allocation6], 64, 64, 4
    $region13: #{tpu_custom_call.1} parent=1 // pred_fallthru
      _
    // Predicated region
    $region14: #{tpu_custom_call.1} parent=1 // pred_check
      _
    $region15: #{tpu_custom_call.1} parent=1 // pred_check_branch
      %59 = sbr.rel (0) target = $region17
    $region16: #{tpu_custom_call.1} parent=1 // pred_region
      _
    $region17: #{tpu_custom_call.1} parent=1 // pred_fallthru
      _
    // Predicated region
    $region18: #{tpu_custom_call.1} parent=1 // pred_check
      _
    $region19: #{tpu_custom_call.1} parent=1 // pred_check_branch
      %61 = sbr.rel (0) target = $region21
    $region20: #{tpu_custom_call.1} parent=1 // pred_region
      _
    $region21: #{tpu_custom_call.1} parent=1 // pred_fallthru
      _
    // Predicated region
    $region22: #{tpu_custom_call.1} parent=1 // pred_check
      _
    $region23: #{tpu_custom_call.1} parent=1 // pred_check_branch
      %63 = sbr.rel (0) target = $region25
    $region24: #{tpu_custom_call.1} parent=1 // pred_region
      _
    $region25: #{tpu_custom_call.1} parent=1 // pred_fallthru
      _
    // Predicated region
    $region26: #{tpu_custom_call.1} parent=1 // pred_check
      _
    $region27: #{tpu_custom_call.1} parent=1 // pred_check_branch
      %65 = sbr.rel (0) target = $region29
    $region28: #{tpu_custom_call.1} parent=1 // pred_region
      _
    $region29: #{tpu_custom_call.1} parent=1 // pred_fallthru
      _
    // Predicated region
    $region30: #{tpu_custom_call.1} parent=1 // pred_check
      _
    $region31: #{tpu_custom_call.1} parent=1 // pred_check_branch
      %67 = sbr.rel (0) target = $region33
    $region32: #{tpu_custom_call.1} parent=1 // pred_region
      %s69 = ssub.s32 2048, 2048
      %70 = vsyncadd [#allocation9], %s69
      %s71 = sshll.u32 [#allocation8], 4
      %s72 = int_to_ptr.vmem [resolvable:$true] %s71
      %77 = dma.hbm_to_vmem [thread:$0]  %s7, 2048, %s72, [#allocation9], 64, 64, 4
    $region33: #{tpu_custom_call.1} parent=1 // pred_fallthru
      _
    // Predicated region
    $region34: #{tpu_custom_call.1} parent=1 // pred_check
      _
    $region35: #{tpu_custom_call.1} parent=1 // pred_check_branch
      %79 = sbr.rel (0) target = $region37
    $region36: #{tpu_custom_call.1} parent=1 // pred_region
      _
    $region37: #{tpu_custom_call.1} parent=1 // pred_fallthru
      _
    // Predicated region
    $region38: #{tpu_custom_call.1} parent=1 // pred_check
      _
    $region39: #{tpu_custom_call.1} parent=1 // pred_check_branch
      %81 = sbr.rel (0) target = $region41
    $region40: #{tpu_custom_call.1} parent=1 // pred_region
      %s83 = ssub.s32 2048, 2048
      %84 = vsyncadd [#allocation9], %s83
      %s85 = sshll.u32 [#allocation10], 4
      %s86 = int_to_ptr.vmem [resolvable:$true] %s85
      %91 = dma.hbm_to_vmem [thread:$0]  %s9, 2048, %s86, [#allocation9], 64, 64, 4
    $region41: #{tpu_custom_call.1} parent=1 // pred_fallthru
      _
    // Predicated region
    $region42: #{tpu_custom_call.1} parent=1 // pred_check
      _
    $region43: #{tpu_custom_call.1} parent=1 // pred_check_branch
      %93 = sbr.rel (0) target = $region45
    $region44: #{tpu_custom_call.1} parent=1 // pred_region
      _
    $region45: #{tpu_custom_call.1} parent=1 // pred_fallthru
      _
    // Predicated region
    $region46: #{tpu_custom_call.1} parent=1 // pred_check
      _
    $region47: #{tpu_custom_call.1} parent=1 // pred_check_branch
      %95 = sbr.rel (0) target = $region49
    $region48: #{tpu_custom_call.1} parent=1 // pred_region
      _
    $region49: #{tpu_custom_call.1} parent=1 // pred_fallthru
      _
    // Predicated region
    $region50: #{tpu_custom_call.1} parent=1 // pred_check
      _
    $region51: #{tpu_custom_call.1} parent=1 // pred_check_branch
      %97 = sbr.rel (0) target = $region53
    $region52: #{tpu_custom_call.1} parent=1 // pred_region
      _
    $region53: #{tpu_custom_call.1} parent=1 // pred_fallthru
      _
    // Predicated region
    $region54: #{tpu_custom_call.1} parent=1 // pred_check
      _
    $region55: #{tpu_custom_call.1} parent=1 // pred_check_branch
      %99 = sbr.rel (0) target = $region57
    $region56: #{tpu_custom_call.1} parent=1 // pred_region
      %100 = dma.done [#allocation3], 256
    $region57: #{tpu_custom_call.1} parent=1 // pred_fallthru
      _
    // Predicated region
    $region58: #{tpu_custom_call.1} parent=1 // pred_check
      _
    $region59: #{tpu_custom_call.1} parent=1 // pred_check_branch
      %102 = sbr.rel (0) target = $region61
    $region60: #{tpu_custom_call.1} parent=1 // pred_region
      %103 = dma.done [#allocation6], 24576
    $region61: #{tpu_custom_call.1} parent=1 // pred_fallthru
      _
    // Predicated region
    $region62: #{tpu_custom_call.1} parent=1 // pred_check
      _
    $region63: #{tpu_custom_call.1} parent=1 // pred_check_branch
      %105 = sbr.rel (0) target = $region65
    $region64: #{tpu_custom_call.1} parent=1 // pred_region
      %106 = dma.done [#allocation6], 8192
    $region65: #{tpu_custom_call.1} parent=1 // pred_fallthru
      _
    // Predicated region
    $region66: #{tpu_custom_call.1} parent=1 // pred_check
      _
    $region67: #{tpu_custom_call.1} parent=1 // pred_check_branch
      %108 = sbr.rel (0) target = $region69
    $region68: #{tpu_custom_call.1} parent=1 // pred_region
      %109 = dma.done [#allocation9], 2048
    $region69: #{tpu_custom_call.1} parent=1 // pred_fallthru
      _
    // Predicated region
    $region70: #{tpu_custom_call.1} parent=1 // pred_check
      _
    $region71: #{tpu_custom_call.1} parent=1 // pred_check_branch
      %111 = sbr.rel (0) target = $region73
    $region72: #{tpu_custom_call.1} parent=1 // pred_region
      %112 = dma.done [#allocation9], 2048
    $region73: #{tpu_custom_call.1} parent=1 // pred_fallthru
      _
    %v114 = vlaneseq
    %v115 = vand.u32 %v114, 127
    %vm116 = vcmp.lt.s32.totalorder %v115, 32
    %v117 = vsel %vm116, 1, 0
    %v118 = vcvt.s32.f32 %v117
    %v119 = vld [vmem:[#allocation2] sm:$0xff]
    %v120 = vld [vmem:[#allocation2 + $0x8] sm:$0xff]
    %v121 = vld [vmem:[%s3] sm:$0x1]
    %v122 = vld [vmem:[%s4] sm:$0x1]
    %v123 = vld [vmem:[%s5] sm:$0x1]
    %v124 = vld [vmem:[%s6] sm:$0x1]
    %v125 = vld [vmem:[#allocation5] sm:$0xff]
    %v126 = vld [vmem:[#allocation5 + $0x8] sm:$0xff]
    %v127 = vld [vmem:[#allocation5 + $0x10] sm:$0xff]
    %v128 = vld [vmem:[#allocation5 + $0x18] sm:$0xff]
    %v129 = vld [vmem:[#allocation5 + $0x20] sm:$0xff]
    %v130 = vld [vmem:[#allocation5 + $0x28] sm:$0xff]
    %v131 = vld [vmem:[#allocation5 + $0x30] sm:$0xff]
    %v132 = vld [vmem:[#allocation5 + $0x38] sm:$0xff]
    %v133 = vld [vmem:[#allocation5 + $0x40] sm:$0xff]
    %v134 = vld [vmem:[#allocation5 + $0x48] sm:$0xff]
    %v135 = vld [vmem:[#allocation5 + $0x50] sm:$0xff]
    %v136 = vld [vmem:[#allocation5 + $0x58] sm:$0xff]
    %v137 = vld [vmem:[#allocation5 + $0x60] sm:$0xff]
    %v138 = vld [vmem:[#allocation5 + $0x68] sm:$0xff]
    %v139 = vld [vmem:[#allocation5 + $0x70] sm:$0xff]
    %v140 = vld [vmem:[#allocation5 + $0x78] sm:$0xff]
    %v141 = vld [vmem:[#allocation5 + $0x80] sm:$0xff]
    %v142 = vld [vmem:[#allocation5 + $0x88] sm:$0xff]
    %v143 = vld [vmem:[#allocation5 + $0x90] sm:$0xff]
    %v144 = vld [vmem:[#allocation5 + $0x98] sm:$0xff]
    %v145 = vld [vmem:[#allocation5 + $0xa0] sm:$0xff]
    %v146 = vld [vmem:[#allocation5 + $0xa8] sm:$0xff]
    %v147 = vld [vmem:[#allocation5 + $0xb0] sm:$0xff]
    %v148 = vld [vmem:[#allocation5 + $0xb8] sm:$0xff]
    %v149 = vld [vmem:[#allocation5 + $0xc0] sm:$0xff]
    %v150 = vld [vmem:[#allocation5 + $0xc8] sm:$0xff]
    %v151 = vld [vmem:[#allocation5 + $0xd0] sm:$0xff]
    %v152 = vld [vmem:[#allocation5 + $0xd8] sm:$0xff]
    %v153 = vld [vmem:[#allocation5 + $0xe0] sm:$0xff]
    %v154 = vld [vmem:[#allocation5 + $0xe8] sm:$0xff]
    %v155 = vld [vmem:[#allocation5 + $0xf0] sm:$0xff]
    %v156 = vld [vmem:[#allocation5 + $0xf8] sm:$0xff]
    %v157 = vld [vmem:[#allocation5 + $0x100] sm:$0xff]
    %v158 = vld [vmem:[#allocation5 + $0x108] sm:$0xff]
    %v159 = vld [vmem:[#allocation5 + $0x110] sm:$0xff]
    %v160 = vld [vmem:[#allocation5 + $0x118] sm:$0xff]
    %v161 = vld [vmem:[#allocation5 + $0x120] sm:$0xff]
    %v162 = vld [vmem:[#allocation5 + $0x128] sm:$0xff]
    %v163 = vld [vmem:[#allocation5 + $0x130] sm:$0xff]
    %v164 = vld [vmem:[#allocation5 + $0x138] sm:$0xff]
    %v165 = vld [vmem:[#allocation5 + $0x140] sm:$0xff]
    %v166 = vld [vmem:[#allocation5 + $0x148] sm:$0xff]
    %v167 = vld [vmem:[#allocation5 + $0x150] sm:$0xff]
    %v168 = vld [vmem:[#allocation5 + $0x158] sm:$0xff]
    %v169 = vld [vmem:[#allocation5 + $0x160] sm:$0xff]
    %v170 = vld [vmem:[#allocation5 + $0x168] sm:$0xff]
    %v171 = vld [vmem:[#allocation5 + $0x170] sm:$0xff]
    %v172 = vld [vmem:[#allocation5 + $0x178] sm:$0xff]
    %v173 = vld [vmem:[#allocation5 + $0x180] sm:$0xff]
    %v174 = vld [vmem:[#allocation5 + $0x188] sm:$0xff]
    %v175 = vld [vmem:[#allocation5 + $0x190] sm:$0xff]
    %v176 = vld [vmem:[#allocation5 + $0x198] sm:$0xff]
    %v177 = vld [vmem:[#allocation5 + $0x1a0] sm:$0xff]
    %v178 = vld [vmem:[#allocation5 + $0x1a8] sm:$0xff]
    %v179 = vld [vmem:[#allocation5 + $0x1b0] sm:$0xff]
    %v180 = vld [vmem:[#allocation5 + $0x1b8] sm:$0xff]
    %v181 = vld [vmem:[#allocation5 + $0x1c0] sm:$0xff]
    %v182 = vld [vmem:[#allocation5 + $0x1c8] sm:$0xff]
    %v183 = vld [vmem:[#allocation5 + $0x1d0] sm:$0xff]
    %v184 = vld [vmem:[#allocation5 + $0x1d8] sm:$0xff]
    %v185 = vld [vmem:[#allocation5 + $0x1e0] sm:$0xff]
    %v186 = vld [vmem:[#allocation5 + $0x1e8] sm:$0xff]
    %v187 = vld [vmem:[#allocation5 + $0x1f0] sm:$0xff]
    %v188 = vld [vmem:[#allocation5 + $0x1f8] sm:$0xff]
    %v189 = vld [vmem:[#allocation5 + $0x200] sm:$0xff]
    %v190 = vld [vmem:[#allocation5 + $0x208] sm:$0xff]
    %v191 = vld [vmem:[#allocation5 + $0x210] sm:$0xff]
    %v192 = vld [vmem:[#allocation5 + $0x218] sm:$0xff]
    %v193 = vld [vmem:[#allocation5 + $0x220] sm:$0xff]
    %v194 = vld [vmem:[#allocation5 + $0x228] sm:$0xff]
    %v195 = vld [vmem:[#allocation5 + $0x230] sm:$0xff]
    %v196 = vld [vmem:[#allocation5 + $0x238] sm:$0xff]
    %v197 = vld [vmem:[#allocation5 + $0x240] sm:$0xff]
    %v198 = vld [vmem:[#allocation5 + $0x248] sm:$0xff]
    %v199 = vld [vmem:[#allocation5 + $0x250] sm:$0xff]
    %v200 = vld [vmem:[#allocation5 + $0x258] sm:$0xff]
    %v201 = vld [vmem:[#allocation5 + $0x260] sm:$0xff]
    %v202 = vld [vmem:[#allocation5 + $0x268] sm:$0xff]
    %v203 = vld [vmem:[#allocation5 + $0x270] sm:$0xff]
    %v204 = vld [vmem:[#allocation5 + $0x278] sm:$0xff]
    %v205 = vld [vmem:[#allocation5 + $0x280] sm:$0xff]
    %v206 = vld [vmem:[#allocation5 + $0x288] sm:$0xff]
    %v207 = vld [vmem:[#allocation5 + $0x290] sm:$0xff]
    %v208 = vld [vmem:[#allocation5 + $0x298] sm:$0xff]
    %v209 = vld [vmem:[#allocation5 + $0x2a0] sm:$0xff]
    %v210 = vld [vmem:[#allocation5 + $0x2a8] sm:$0xff]
    %v211 = vld [vmem:[#allocation5 + $0x2b0] sm:$0xff]
    %v212 = vld [vmem:[#allocation5 + $0x2b8] sm:$0xff]
    %v213 = vld [vmem:[#allocation5 + $0x2c0] sm:$0xff]
    %v214 = vld [vmem:[#allocation5 + $0x2c8] sm:$0xff]
    %v215 = vld [vmem:[#allocation5 + $0x2d0] sm:$0xff]
    %v216 = vld [vmem:[#allocation5 + $0x2d8] sm:$0xff]
    %v217 = vld [vmem:[#allocation5 + $0x2e0] sm:$0xff]
    %v218 = vld [vmem:[#allocation5 + $0x2e8] sm:$0xff]
    %v219 = vld [vmem:[#allocation5 + $0x2f0] sm:$0xff]
    %v220 = vld [vmem:[#allocation5 + $0x2f8] sm:$0xff]
    %v221 = vld [vmem:[#allocation7] sm:$0xf]
    %v222 = vld [vmem:[#allocation7 + $0x4] sm:$0xf]
    %v223 = vld [vmem:[#allocation7 + $0x8] sm:$0xf]
    %v224 = vld [vmem:[#allocation7 + $0xc] sm:$0xf]
    %v225 = vld [vmem:[#allocation7 + $0x10] sm:$0xf]
    %v226 = vld [vmem:[#allocation7 + $0x14] sm:$0xf]
    %v227 = vld [vmem:[#allocation7 + $0x18] sm:$0xf]
    %v228 = vld [vmem:[#allocation7 + $0x1c] sm:$0xf]
    %v229 = vld [vmem:[#allocation7 + $0x20] sm:$0xf]
    %v230 = vld [vmem:[#allocation7 + $0x24] sm:$0xf]
    %v231 = vld [vmem:[#allocation7 + $0x28] sm:$0xf]
    %v232 = vld [vmem:[#allocation7 + $0x2c] sm:$0xf]
    %v233 = vld [vmem:[#allocation7 + $0x30] sm:$0xf]
    %v234 = vld [vmem:[#allocation7 + $0x34] sm:$0xf]
    %v235 = vld [vmem:[#allocation7 + $0x38] sm:$0xf]
    %v236 = vld [vmem:[#allocation7 + $0x3c] sm:$0xf]
    %v237 = vld [vmem:[#allocation7 + $0x40] sm:$0xf]
    %v238 = vld [vmem:[#allocation7 + $0x44] sm:$0xf]
    %v239 = vld [vmem:[#allocation7 + $0x48] sm:$0xf]
    %v240 = vld [vmem:[#allocation7 + $0x4c] sm:$0xf]
    %v241 = vld [vmem:[#allocation7 + $0x50] sm:$0xf]
    %v242 = vld [vmem:[#allocation7 + $0x54] sm:$0xf]
    %v243 = vld [vmem:[#allocation7 + $0x58] sm:$0xf]
    %v244 = vld [vmem:[#allocation7 + $0x5c] sm:$0xf]
    %v245 = vld [vmem:[#allocation7 + $0x60] sm:$0xf]
    %v246 = vld [vmem:[#allocation7 + $0x64] sm:$0xf]
    %v247 = vld [vmem:[#allocation7 + $0x68] sm:$0xf]
    %v248 = vld [vmem:[#allocation7 + $0x6c] sm:$0xf]
    %v249 = vld [vmem:[#allocation7 + $0x70] sm:$0xf]
    %v250 = vld [vmem:[#allocation7 + $0x74] sm:$0xf]
    %v251 = vld [vmem:[#allocation7 + $0x78] sm:$0xf]
    %v252 = vld [vmem:[#allocation7 + $0x7c] sm:$0xf]
    %v253 = vld [vmem:[#allocation7 + $0x80] sm:$0xf]
    %v254 = vld [vmem:[#allocation7 + $0x84] sm:$0xf]
    %v255 = vld [vmem:[#allocation7 + $0x88] sm:$0xf]
    %v256 = vld [vmem:[#allocation7 + $0x8c] sm:$0xf]
    %v257 = vld [vmem:[#allocation7 + $0x90] sm:$0xf]
    %v258 = vld [vmem:[#allocation7 + $0x94] sm:$0xf]
    %v259 = vld [vmem:[#allocation7 + $0x98] sm:$0xf]
    %v260 = vld [vmem:[#allocation7 + $0x9c] sm:$0xf]
    %v261 = vld [vmem:[#allocation7 + $0xa0] sm:$0xf]
    %v262 = vld [vmem:[#allocation7 + $0xa4] sm:$0xf]
    %v263 = vld [vmem:[#allocation7 + $0xa8] sm:$0xf]
    %v264 = vld [vmem:[#allocation7 + $0xac] sm:$0xf]
    %v265 = vld [vmem:[#allocation7 + $0xb0] sm:$0xf]
    %v266 = vld [vmem:[#allocation7 + $0xb4] sm:$0xf]
    %v267 = vld [vmem:[#allocation7 + $0xb8] sm:$0xf]
    %v268 = vld [vmem:[#allocation7 + $0xbc] sm:$0xf]
    %v269 = vld [vmem:[#allocation7 + $0xc0] sm:$0xf]
    %v270 = vld [vmem:[#allocation7 + $0xc4] sm:$0xf]
    %v271 = vld [vmem:[#allocation7 + $0xc8] sm:$0xf]
    %v272 = vld [vmem:[#allocation7 + $0xcc] sm:$0xf]
    %v273 = vld [vmem:[#allocation7 + $0xd0] sm:$0xf]
    %v274 = vld [vmem:[#allocation7 + $0xd4] sm:$0xf]
    %v275 = vld [vmem:[#allocation7 + $0xd8] sm:$0xf]
    %v276 = vld [vmem:[#allocation7 + $0xdc] sm:$0xf]
    %v277 = vld [vmem:[#allocation7 + $0xe0] sm:$0xf]
    %v278 = vld [vmem:[#allocation7 + $0xe4] sm:$0xf]
    %v279 = vld [vmem:[#allocation7 + $0xe8] sm:$0xf]
    %v280 = vld [vmem:[#allocation7 + $0xec] sm:$0xf]
    %v281 = vld [vmem:[#allocation7 + $0xf0] sm:$0xf]
    %v282 = vld [vmem:[#allocation7 + $0xf4] sm:$0xf]
    %v283 = vld [vmem:[#allocation7 + $0xf8] sm:$0xf]
    %v284 = vld [vmem:[#allocation7 + $0xfc] sm:$0xf]
    %v285 = vld [vmem:[#allocation8] sm:$0xf]
    %v286 = vld [vmem:[#allocation8 + $0x4] sm:$0xf]
    %v287 = vld [vmem:[#allocation8 + $0x8] sm:$0xf]
    %v288 = vld [vmem:[#allocation8 + $0xc] sm:$0xf]
    %v289 = vld [vmem:[#allocation8 + $0x10] sm:$0xf]
    %v290 = vld [vmem:[#allocation8 + $0x14] sm:$0xf]
    %v291 = vld [vmem:[#allocation8 + $0x18] sm:$0xf]
    %v292 = vld [vmem:[#allocation8 + $0x1c] sm:$0xf]
    %v293 = vld [vmem:[#allocation8 + $0x20] sm:$0xf]
    %v294 = vld [vmem:[#allocation8 + $0x24] sm:$0xf]
    %v295 = vld [vmem:[#allocation8 + $0x28] sm:$0xf]
    %v296 = vld [vmem:[#allocation8 + $0x2c] sm:$0xf]
    %v297 = vld [vmem:[#allocation8 + $0x30] sm:$0xf]
    %v298 = vld [vmem:[#allocation8 + $0x34] sm:$0xf]
    %v299 = vld [vmem:[#allocation8 + $0x38] sm:$0xf]
    %v300 = vld [vmem:[#allocation8 + $0x3c] sm:$0xf]
    %v301 = vld [vmem:[%s8] sm:$0x1]
    %v302 = vld [vmem:[#allocation10] sm:$0xf]
    %v303 = vld [vmem:[#allocation10 + $0x4] sm:$0xf]
    %v304 = vld [vmem:[#allocation10 + $0x8] sm:$0xf]
    %v305 = vld [vmem:[#allocation10 + $0xc] sm:$0xf]
    %v306 = vld [vmem:[#allocation10 + $0x10] sm:$0xf]
    %v307 = vld [vmem:[#allocation10 + $0x14] sm:$0xf]
    %v308 = vld [vmem:[#allocation10 + $0x18] sm:$0xf]
    %v309 = vld [vmem:[#allocation10 + $0x1c] sm:$0xf]
    %v310 = vld [vmem:[#allocation10 + $0x20] sm:$0xf]
    %v311 = vld [vmem:[#allocation10 + $0x24] sm:$0xf]
    %v312 = vld [vmem:[#allocation10 + $0x28] sm:$0xf]
    %v313 = vld [vmem:[#allocation10 + $0x2c] sm:$0xf]
    %v314 = vld [vmem:[#allocation10 + $0x30] sm:$0xf]
    %v315 = vld [vmem:[#allocation10 + $0x34] sm:$0xf]
    %v316 = vld [vmem:[#allocation10 + $0x38] sm:$0xf]
    %v317 = vld [vmem:[#allocation10 + $0x3c] sm:$0xf]
    %v318 = vld [vmem:[%s10] sm:$0x1]
    %319 = vadd.xlane.f32.xlu0 %v119
    %v320 = vpop.xlane.xlu0 %319
    %321 = vadd.xlane.f32.xlu0 %v120
    %v322 = vpop.xlane.xlu0 %321
    %v323 = vmul.f32 %v320, 0.03125
    %v324 = vmul.f32 %v322, 0.03125
    %v325 = vsub.f32 %v119, %v323
    %v326 = vsub.f32 %v120, %v324
    %v327 = vmul.f32 %v325, %v118
    %v328 = vmul.f32 %v326, %v118
    %v329 = vmul.f32 %v327, %v327
    %v330 = vmul.f32 %v328, %v328
    %331 = vadd.xlane.f32.xlu0 %v329
    %v332 = vpop.xlane.xlu0 %331
    %333 = vadd.xlane.f32.xlu0 %v330
    %v334 = vpop.xlane.xlu0 %333
    %v335 = vmul.f32 %v332, 0.032258064
    %v336 = vmul.f32 %v334, 0.032258064
    %v338 = vlaneseq
    %v339 = vshrl.u32 %v338, 7
    %v340 = vsub.s32 0, %v339
    %v341 = vrot.slane %v121, %v340
    %v343 = vmul.f32 %v341, %v327
    %v344 = vmul.f32 %v341, %v328
    %v345 = vrsqrt.pop %v335
    %v346 = vmul.f32 %v335, %v345
    %vm347 = vcmp.eq.f32.partialorder %v335, inf
    %v348 = vsel %vm347, %v335, %v346
    %vm349 = vcmp.eq.f32.partialorder %v335, 0.0
    %v350 = vand.u32 %v335, 2147483648
    %v351 = vsel %vm349, %v350, %v348
    %v352 = vrsqrt.pop %v336
    %v353 = vmul.f32 %v336, %v352
    %vm354 = vcmp.eq.f32.partialorder %v336, inf
    %v355 = vsel %vm354, %v336, %v353
    %vm356 = vcmp.eq.f32.partialorder %v336, 0.0
    %v357 = vand.u32 %v336, 2147483648
    %v358 = vsel %vm356, %v357, %v355
    %v359 = vadd.f32 %v351, 1e-06
    %v360 = vadd.f32 %v358, 1e-06
    %v361 = vrcp.pop %v359
    %v362 = vmul.f32 %v343, %v361
    %v363 = vrcp.pop %v360
    %v364 = vmul.f32 %v344, %v363
    %v366 = vlaneseq
    %v367 = vshrl.u32 %v366, 7
    %v368 = vsub.s32 0, %v367
    %v369 = vrot.slane %v122, %v368
    %v371 = vadd.f32 %v362, %v369
    %v372 = vadd.f32 %v364, %v369
    %v373 = vpack.c.bf16 %v372, %v371
    %v470 = vunpack.c.l.b16 %v125
    %v471 = vunpack.c.h.b16 %v125
    %v472 = vunpack.c.l.b16 %v126
    %v473 = vunpack.c.h.b16 %v126
    %v474 = vunpack.c.l.b16 %v127
    %v475 = vunpack.c.h.b16 %v127
    %v476 = vunpack.c.l.b16 %v128
    %v477 = vunpack.c.h.b16 %v128
    %v478 = vunpack.c.l.b16 %v129
    %v479 = vunpack.c.h.b16 %v129
    %v480 = vunpack.c.l.b16 %v130
    %v481 = vunpack.c.h.b16 %v130
    %v482 = vunpack.c.l.b16 %v131
    %v483 = vunpack.c.h.b16 %v131
    %v484 = vunpack.c.l.b16 %v132
    %v485 = vunpack.c.h.b16 %v132
    %v486 = vunpack.c.l.b16 %v133
    %v487 = vunpack.c.h.b16 %v133
    %v488 = vunpack.c.l.b16 %v134
    %v489 = vunpack.c.h.b16 %v134
    %v490 = vunpack.c.l.b16 %v135
    %v491 = vunpack.c.h.b16 %v135
    %v492 = vunpack.c.l.b16 %v136
    %v493 = vunpack.c.h.b16 %v136
    %v494 = vunpack.c.l.b16 %v137
    %v495 = vunpack.c.h.b16 %v137
    %v496 = vunpack.c.l.b16 %v138
    %v497 = vunpack.c.h.b16 %v138
    %v498 = vunpack.c.l.b16 %v139
    %v499 = vunpack.c.h.b16 %v139
    %v500 = vunpack.c.l.b16 %v140
    %v501 = vunpack.c.h.b16 %v140
    %v502 = vunpack.c.l.b16 %v141
    %v503 = vunpack.c.h.b16 %v141
    %v504 = vunpack.c.l.b16 %v142
    %v505 = vunpack.c.h.b16 %v142
    %v506 = vunpack.c.l.b16 %v143
    %v507 = vunpack.c.h.b16 %v143
    %v508 = vunpack.c.l.b16 %v144
    %v509 = vunpack.c.h.b16 %v144
    %v510 = vunpack.c.l.b16 %v145
    %v511 = vunpack.c.h.b16 %v145
    %v512 = vunpack.c.l.b16 %v146
    %v513 = vunpack.c.h.b16 %v146
    %v514 = vunpack.c.l.b16 %v147
    %v515 = vunpack.c.h.b16 %v147
    %v516 = vunpack.c.l.b16 %v148
    %v517 = vunpack.c.h.b16 %v148
    %v518 = vunpack.c.l.b16 %v149
    %v519 = vunpack.c.h.b16 %v149
    %v520 = vunpack.c.l.b16 %v150
    %v521 = vunpack.c.h.b16 %v150
    %v522 = vunpack.c.l.b16 %v151
    %v523 = vunpack.c.h.b16 %v151
    %v524 = vunpack.c.l.b16 %v152
    %v525 = vunpack.c.h.b16 %v152
    %v526 = vunpack.c.l.b16 %v153
    %v527 = vunpack.c.h.b16 %v153
    %v528 = vunpack.c.l.b16 %v154
    %v529 = vunpack.c.h.b16 %v154
    %v530 = vunpack.c.l.b16 %v155
    %v531 = vunpack.c.h.b16 %v155
    %v532 = vunpack.c.l.b16 %v156
    %v533 = vunpack.c.h.b16 %v156
    %v534 = vunpack.c.l.b16 %v157
    %v535 = vunpack.c.h.b16 %v157
    %v536 = vunpack.c.l.b16 %v158
    %v537 = vunpack.c.h.b16 %v158
    %v538 = vunpack.c.l.b16 %v159
    %v539 = vunpack.c.h.b16 %v159
    %v540 = vunpack.c.l.b16 %v160
    %v541 = vunpack.c.h.b16 %v160
    %v542 = vunpack.c.l.b16 %v161
    %v543 = vunpack.c.h.b16 %v161
    %v544 = vunpack.c.l.b16 %v162
    %v545 = vunpack.c.h.b16 %v162
    %v546 = vunpack.c.l.b16 %v163
    %v547 = vunpack.c.h.b16 %v163
    %v548 = vunpack.c.l.b16 %v164
    %v549 = vunpack.c.h.b16 %v164
    %v550 = vunpack.c.l.b16 %v165
    %v551 = vunpack.c.h.b16 %v165
    %v552 = vunpack.c.l.b16 %v166
    %v553 = vunpack.c.h.b16 %v166
    %v554 = vunpack.c.l.b16 %v167
    %v555 = vunpack.c.h.b16 %v167
    %v556 = vunpack.c.l.b16 %v168
    %v557 = vunpack.c.h.b16 %v168
    %v558 = vunpack.c.l.b16 %v169
    %v559 = vunpack.c.h.b16 %v169
    %v560 = vunpack.c.l.b16 %v170
    %v561 = vunpack.c.h.b16 %v170
    %v562 = vunpack.c.l.b16 %v171
    %v563 = vunpack.c.h.b16 %v171
    %v564 = vunpack.c.l.b16 %v172
    %v565 = vunpack.c.h.b16 %v172
    %v566 = vunpack.c.l.b16 %v173
    %v567 = vunpack.c.h.b16 %v173
    %v568 = vunpack.c.l.b16 %v174
    %v569 = vunpack.c.h.b16 %v174
    %v570 = vunpack.c.l.b16 %v175
    %v571 = vunpack.c.h.b16 %v175
    %v572 = vunpack.c.l.b16 %v176
    %v573 = vunpack.c.h.b16 %v176
    %v574 = vunpack.c.l.b16 %v177
    %v575 = vunpack.c.h.b16 %v177
    %v576 = vunpack.c.l.b16 %v178
    %v577 = vunpack.c.h.b16 %v178
    %v578 = vunpack.c.l.b16 %v179
    %v579 = vunpack.c.h.b16 %v179
    %v580 = vunpack.c.l.b16 %v180
    %v581 = vunpack.c.h.b16 %v180
    %v582 = vunpack.c.l.b16 %v181
    %v583 = vunpack.c.h.b16 %v181
    %v584 = vunpack.c.l.b16 %v182
    %v585 = vunpack.c.h.b16 %v182
    %v586 = vunpack.c.l.b16 %v183
    %v587 = vunpack.c.h.b16 %v183
    %v588 = vunpack.c.l.b16 %v184
    %v589 = vunpack.c.h.b16 %v184
    %v590 = vunpack.c.l.b16 %v185
    %v591 = vunpack.c.h.b16 %v185
    %v592 = vunpack.c.l.b16 %v186
    %v593 = vunpack.c.h.b16 %v186
    %v594 = vunpack.c.l.b16 %v187
    %v595 = vunpack.c.h.b16 %v187
    %v596 = vunpack.c.l.b16 %v188
    %v597 = vunpack.c.h.b16 %v188
    %v598 = vunpack.c.l.b16 %v189
    %v599 = vunpack.c.h.b16 %v189
    %v600 = vunpack.c.l.b16 %v190
    %v601 = vunpack.c.h.b16 %v190
    %v602 = vunpack.c.l.b16 %v191
    %v603 = vunpack.c.h.b16 %v191
    %v604 = vunpack.c.l.b16 %v192
    %v605 = vunpack.c.h.b16 %v192
    %v606 = vunpack.c.l.b16 %v193
    %v607 = vunpack.c.h.b16 %v193
    %v608 = vunpack.c.l.b16 %v194
    %v609 = vunpack.c.h.b16 %v194
    %v610 = vunpack.c.l.b16 %v195
    %v611 = vunpack.c.h.b16 %v195
    %v612 = vunpack.c.l.b16 %v196
    %v613 = vunpack.c.h.b16 %v196
    %v614 = vunpack.c.l.b16 %v197
    %v615 = vunpack.c.h.b16 %v197
    %v616 = vunpack.c.l.b16 %v198
    %v617 = vunpack.c.h.b16 %v198
    %v618 = vunpack.c.l.b16 %v199
    %v619 = vunpack.c.h.b16 %v199
    %v620 = vunpack.c.l.b16 %v200
    %v621 = vunpack.c.h.b16 %v200
    %v622 = vunpack.c.l.b16 %v201
    %v623 = vunpack.c.h.b16 %v201
    %v624 = vunpack.c.l.b16 %v202
    %v625 = vunpack.c.h.b16 %v202
    %v626 = vunpack.c.l.b16 %v203
    %v627 = vunpack.c.h.b16 %v203
    %v628 = vunpack.c.l.b16 %v204
    %v629 = vunpack.c.h.b16 %v204
    %v630 = vunpack.c.l.b16 %v205
    %v631 = vunpack.c.h.b16 %v205
    %v632 = vunpack.c.l.b16 %v206
    %v633 = vunpack.c.h.b16 %v206
    %v634 = vunpack.c.l.b16 %v207
    %v635 = vunpack.c.h.b16 %v207
    %v636 = vunpack.c.l.b16 %v208
    %v637 = vunpack.c.h.b16 %v208
    %v638 = vunpack.c.l.b16 %v209
    %v639 = vunpack.c.h.b16 %v209
    %v640 = vunpack.c.l.b16 %v210
    %v641 = vunpack.c.h.b16 %v210
    %v642 = vunpack.c.l.b16 %v211
    %v643 = vunpack.c.h.b16 %v211
    %v644 = vunpack.c.l.b16 %v212
    %v645 = vunpack.c.h.b16 %v212
    %v646 = vunpack.c.l.b16 %v213
    %v647 = vunpack.c.h.b16 %v213
    %v648 = vunpack.c.l.b16 %v214
    %v649 = vunpack.c.h.b16 %v214
    %v650 = vunpack.c.l.b16 %v215
    %v651 = vunpack.c.h.b16 %v215
    %v652 = vunpack.c.l.b16 %v216
    %v653 = vunpack.c.h.b16 %v216
    %v654 = vunpack.c.l.b16 %v217
    %v655 = vunpack.c.h.b16 %v217
    %v656 = vunpack.c.l.b16 %v218
    %v657 = vunpack.c.h.b16 %v218
    %v658 = vunpack.c.l.b16 %v219
    %v659 = vunpack.c.h.b16 %v219
    %v660 = vunpack.c.l.b16 %v220
    %v661 = vunpack.c.h.b16 %v220
    %v662 = vpack.c.b16 %v482, %v470
    %v663 = vpack.c.b16 %v483, %v471
    %v664 = vpack.c.b16 %v484, %v472
    %v665 = vpack.c.b16 %v485, %v473
    %v666 = vpack.c.b16 %v486, %v474
    %v667 = vpack.c.b16 %v487, %v475
    %v668 = vpack.c.b16 %v488, %v476
    %v669 = vpack.c.b16 %v489, %v477
    %v670 = vpack.c.b16 %v490, %v478
    %v671 = vpack.c.b16 %v491, %v479
    %v672 = vpack.c.b16 %v492, %v480
    %v673 = vpack.c.b16 %v493, %v481
    %v674 = vpack.c.b16 %v506, %v494
    %v675 = vpack.c.b16 %v507, %v495
    %v676 = vpack.c.b16 %v508, %v496
    %v677 = vpack.c.b16 %v509, %v497
    %v678 = vpack.c.b16 %v510, %v498
    %v679 = vpack.c.b16 %v511, %v499
    %v680 = vpack.c.b16 %v512, %v500
    %v681 = vpack.c.b16 %v513, %v501
    %v682 = vpack.c.b16 %v514, %v502
    %v683 = vpack.c.b16 %v515, %v503
    %v684 = vpack.c.b16 %v516, %v504
    %v685 = vpack.c.b16 %v517, %v505
    %v686 = vpack.c.b16 %v530, %v518
    %v687 = vpack.c.b16 %v531, %v519
    %v688 = vpack.c.b16 %v532, %v520
    %v689 = vpack.c.b16 %v533, %v521
    %v690 = vpack.c.b16 %v534, %v522
    %v691 = vpack.c.b16 %v535, %v523
    %v692 = vpack.c.b16 %v536, %v524
    %v693 = vpack.c.b16 %v537, %v525
    %v694 = vpack.c.b16 %v538, %v526
    %v695 = vpack.c.b16 %v539, %v527
    %v696 = vpack.c.b16 %v540, %v528
    %v697 = vpack.c.b16 %v541, %v529
    %v698 = vpack.c.b16 %v554, %v542
    %v699 = vpack.c.b16 %v555, %v543
    %v700 = vpack.c.b16 %v556, %v544
    %v701 = vpack.c.b16 %v557, %v545
    %v702 = vpack.c.b16 %v558, %v546
    %v703 = vpack.c.b16 %v559, %v547
    %v704 = vpack.c.b16 %v560, %v548
    %v705 = vpack.c.b16 %v561, %v549
    %v706 = vpack.c.b16 %v562, %v550
    %v707 = vpack.c.b16 %v563, %v551
    %v708 = vpack.c.b16 %v564, %v552
    %v709 = vpack.c.b16 %v565, %v553
    %v710 = vpack.c.b16 %v578, %v566
    %v711 = vpack.c.b16 %v579, %v567
    %v712 = vpack.c.b16 %v580, %v568
    %v713 = vpack.c.b16 %v581, %v569
    %v714 = vpack.c.b16 %v582, %v570
    %v715 = vpack.c.b16 %v583, %v571
    %v716 = vpack.c.b16 %v584, %v572
    %v717 = vpack.c.b16 %v585, %v573
    %v718 = vpack.c.b16 %v586, %v574
    %v719 = vpack.c.b16 %v587, %v575
    %v720 = vpack.c.b16 %v588, %v576
    %v721 = vpack.c.b16 %v589, %v577
    %v722 = vpack.c.b16 %v602, %v590
    %v723 = vpack.c.b16 %v603, %v591
    %v724 = vpack.c.b16 %v604, %v592
    %v725 = vpack.c.b16 %v605, %v593
    %v726 = vpack.c.b16 %v606, %v594
    %v727 = vpack.c.b16 %v607, %v595
    %v728 = vpack.c.b16 %v608, %v596
    %v729 = vpack.c.b16 %v609, %v597
    %v730 = vpack.c.b16 %v610, %v598
    %v731 = vpack.c.b16 %v611, %v599
    %v732 = vpack.c.b16 %v612, %v600
    %v733 = vpack.c.b16 %v613, %v601
    %v734 = vpack.c.b16 %v626, %v614
    %v735 = vpack.c.b16 %v627, %v615
    %v736 = vpack.c.b16 %v628, %v616
    %v737 = vpack.c.b16 %v629, %v617
    %v738 = vpack.c.b16 %v630, %v618
    %v739 = vpack.c.b16 %v631, %v619
    %v740 = vpack.c.b16 %v632, %v620
    %v741 = vpack.c.b16 %v633, %v621
    %v742 = vpack.c.b16 %v634, %v622
    %v743 = vpack.c.b16 %v635, %v623
    %v744 = vpack.c.b16 %v636, %v624
    %v745 = vpack.c.b16 %v637, %v625
    %v746 = vpack.c.b16 %v650, %v638
    %v747 = vpack.c.b16 %v651, %v639
    %v748 = vpack.c.b16 %v652, %v640
    %v749 = vpack.c.b16 %v653, %v641
    %v750 = vpack.c.b16 %v654, %v642
    %v751 = vpack.c.b16 %v655, %v643
    %v752 = vpack.c.b16 %v656, %v644
    %v753 = vpack.c.b16 %v657, %v645
    %v754 = vpack.c.b16 %v658, %v646
    %v755 = vpack.c.b16 %v659, %v647
    %v756 = vpack.c.b16 %v660, %v648
    %v757 = vpack.c.b16 %v661, %v649
    %854 = vmatprep.subr.bf16.mxu0 %v747
    %855 = vmatpush1.bf16.msra.mxu0 %v746
    %856 = vmatprep.subr.bf16.mxu0 %v735
    %857 = vmatpush1.bf16.msra.mxu0 %v734
    %858 = vmatprep.subr.bf16.mxu0 %v723
    %859 = vmatpush1.bf16.msra.mxu0 %v722
    %860 = vmatprep.subr.bf16.mxu0 %v711
    %861 = vmatpush1.bf16.msra.mxu0 %v710
    %862 = vmatprep.subr.bf16.mxu0 %v699
    %863 = vmatpush1.bf16.msra.mxu0 %v698
    %864 = vmatprep.subr.bf16.mxu0 %v687
    %865 = vmatpush1.bf16.msra.mxu0 %v686
    %866 = vmatprep.subr.bf16.mxu0 %v675
    %867 = vmatpush1.bf16.msra.mxu0 %v674
    %868 = vmatprep.subr.bf16.mxu0 %v663
    %869 = vmatpush1.bf16.msra.mxu0 %v662
    %870 = vmatprep.subr.bf16.mxu0 0
    %871 = vmatpush2.bf16.msra.mxu0 0
    %872 = vmatprep.subr.bf16.mxu0 0
    %873 = vmatpush2.bf16.msra.mxu0 0
    %874 = vmatprep.subr.bf16.mxu0 0
    %875 = vmatpush2.bf16.msra.mxu0 0
    %876 = vmatprep.subr.bf16.mxu0 0
    %877 = vmatpush2.bf16.msra.mxu0 0
    %878 = vmatprep.subr.bf16.mxu0 0
    %879 = vmatpush2.bf16.msra.mxu0 0
    %880 = vmatprep.subr.bf16.mxu0 0
    %881 = vmatpush2.bf16.msra.mxu0 0
    %882 = vmatprep.subr.bf16.mxu0 0
    %883 = vmatpush2.bf16.msra.mxu0 0
    %884 = vmatprep.subr.bf16.mxu0 0
    %885 = vmatpush2.bf16.msra.mxu0 0
    %886 = vmatprep.mubr.bf16.mxu0 0
    %887 = vmatmul.mubr.bf16.gmra.mxu0 %v373
    %v888 = vpop.f32.mrf.mxu0
    %v889 = vadd.f32 0.0, %v888
    %v890 = vpop.f32.mrf.mxu0
    %v891 = vadd.f32 0.0, %v890
    %v892 = vpop.f32.mrf.mxu0
    %v893 = vadd.f32 0.0, %v892
    %v894 = vpop.f32.mrf.mxu0
    %v895 = vadd.f32 0.0, %v894
    %896 = vdwg.mxu0
    %897 = vmatprep.subr.bf16.mxu0 %v749
    %898 = vmatpush1.bf16.msra.mxu0 %v748
    %899 = vmatprep.subr.bf16.mxu0 %v737
    %900 = vmatpush1.bf16.msra.mxu0 %v736
    %901 = vmatprep.subr.bf16.mxu0 %v725
    %902 = vmatpush1.bf16.msra.mxu0 %v724
    %903 = vmatprep.subr.bf16.mxu0 %v713
    %904 = vmatpush1.bf16.msra.mxu0 %v712
    %905 = vmatprep.subr.bf16.mxu0 %v701
    %906 = vmatpush1.bf16.msra.mxu0 %v700
    %907 = vmatprep.subr.bf16.mxu0 %v689
    %908 = vmatpush1.bf16.msra.mxu0 %v688
    %909 = vmatprep.subr.bf16.mxu0 %v677
    %910 = vmatpush1.bf16.msra.mxu0 %v676
    %911 = vmatprep.subr.bf16.mxu0 %v665
    %912 = vmatpush1.bf16.msra.mxu0 %v664
    %913 = vmatprep.subr.bf16.mxu0 0
    %914 = vmatpush2.bf16.msra.mxu0 0
    %915 = vmatprep.subr.bf16.mxu0 0
    %916 = vmatpush2.bf16.msra.mxu0 0
    %917 = vmatprep.subr.bf16.mxu0 0
    %918 = vmatpush2.bf16.msra.mxu0 0
    %919 = vmatprep.subr.bf16.mxu0 0
    %920 = vmatpush2.bf16.msra.mxu0 0
    %921 = vmatprep.subr.bf16.mxu0 0
    %922 = vmatpush2.bf16.msra.mxu0 0
    %923 = vmatprep.subr.bf16.mxu0 0
    %924 = vmatpush2.bf16.msra.mxu0 0
    %925 = vmatprep.subr.bf16.mxu0 0
    %926 = vmatpush2.bf16.msra.mxu0 0
    %927 = vmatprep.subr.bf16.mxu0 0
    %928 = vmatpush2.bf16.msra.mxu0 0
    %929 = vmatprep.mubr.bf16.mxu0 0
    %930 = vmatmul.mubr.bf16.gmra.mxu0 %v373
    %v931 = vpop.f32.mrf.mxu0
    %v932 = vadd.f32 0.0, %v931
    %v933 = vpop.f32.mrf.mxu0
    %v934 = vadd.f32 0.0, %v933
    %v935 = vpop.f32.mrf.mxu0
    %v936 = vadd.f32 0.0, %v935
    %v937 = vpop.f32.mrf.mxu0
    %v938 = vadd.f32 0.0, %v937
    %939 = vdwg.mxu0
    %940 = vmatprep.subr.bf16.mxu0 %v751
    %941 = vmatpush1.bf16.msra.mxu0 %v750
    %942 = vmatprep.subr.bf16.mxu0 %v739
    %943 = vmatpush1.bf16.msra.mxu0 %v738
    %944 = vmatprep.subr.bf16.mxu0 %v727
    %945 = vmatpush1.bf16.msra.mxu0 %v726
    %946 = vmatprep.subr.bf16.mxu0 %v715
    %947 = vmatpush1.bf16.msra.mxu0 %v714
    %948 = vmatprep.subr.bf16.mxu0 %v703
    %949 = vmatpush1.bf16.msra.mxu0 %v702
    %950 = vmatprep.subr.bf16.mxu0 %v691
    %951 = vmatpush1.bf16.msra.mxu0 %v690
    %952 = vmatprep.subr.bf16.mxu0 %v679
    %953 = vmatpush1.bf16.msra.mxu0 %v678
    %954 = vmatprep.subr.bf16.mxu0 %v667
    %955 = vmatpush1.bf16.msra.mxu0 %v666
    %956 = vmatprep.subr.bf16.mxu0 0
    %957 = vmatpush2.bf16.msra.mxu0 0
    %958 = vmatprep.subr.bf16.mxu0 0
    %959 = vmatpush2.bf16.msra.mxu0 0
    %960 = vmatprep.subr.bf16.mxu0 0
    %961 = vmatpush2.bf16.msra.mxu0 0
    %962 = vmatprep.subr.bf16.mxu0 0
    %963 = vmatpush2.bf16.msra.mxu0 0
    %964 = vmatprep.subr.bf16.mxu0 0
    %965 = vmatpush2.bf16.msra.mxu0 0
    %966 = vmatprep.subr.bf16.mxu0 0
    %967 = vmatpush2.bf16.msra.mxu0 0
    %968 = vmatprep.subr.bf16.mxu0 0
    %969 = vmatpush2.bf16.msra.mxu0 0
    %970 = vmatprep.subr.bf16.mxu0 0
    %971 = vmatpush2.bf16.msra.mxu0 0
    %972 = vmatprep.mubr.bf16.mxu0 0
    %973 = vmatmul.mubr.bf16.gmra.mxu0 %v373
    %v974 = vpop.f32.mrf.mxu0
    %v975 = vadd.f32 0.0, %v974
    %v976 = vpop.f32.mrf.mxu0
    %v977 = vadd.f32 0.0, %v976
    %v978 = vpop.f32.mrf.mxu0
    %v979 = vadd.f32 0.0, %v978
    %v980 = vpop.f32.mrf.mxu0
    %v981 = vadd.f32 0.0, %v980
    %982 = vdwg.mxu0
    %983 = vmatprep.subr.bf16.mxu0 %v753
    %984 = vmatpush1.bf16.msra.mxu0 %v752
    %985 = vmatprep.subr.bf16.mxu0 %v741
    %986 = vmatpush1.bf16.msra.mxu0 %v740
    %987 = vmatprep.subr.bf16.mxu0 %v729
    %988 = vmatpush1.bf16.msra.mxu0 %v728
    %989 = vmatprep.subr.bf16.mxu0 %v717
    %990 = vmatpush1.bf16.msra.mxu0 %v716
    %991 = vmatprep.subr.bf16.mxu0 %v705
    %992 = vmatpush1.bf16.msra.mxu0 %v704
    %993 = vmatprep.subr.bf16.mxu0 %v693
    %994 = vmatpush1.bf16.msra.mxu0 %v692
    %995 = vmatprep.subr.bf16.mxu0 %v681
    %996 = vmatpush1.bf16.msra.mxu0 %v680
    %997 = vmatprep.subr.bf16.mxu0 %v669
    %998 = vmatpush1.bf16.msra.mxu0 %v668
    %999 = vmatprep.subr.bf16.mxu0 0
    %1000 = vmatpush2.bf16.msra.mxu0 0
    %1001 = vmatprep.subr.bf16.mxu0 0
    %1002 = vmatpush2.bf16.msra.mxu0 0
    %1003 = vmatprep.subr.bf16.mxu0 0
    %1004 = vmatpush2.bf16.msra.mxu0 0
    %1005 = vmatprep.subr.bf16.mxu0 0
    %1006 = vmatpush2.bf16.msra.mxu0 0
    %1007 = vmatprep.subr.bf16.mxu0 0
    %1008 = vmatpush2.bf16.msra.mxu0 0
    %1009 = vmatprep.subr.bf16.mxu0 0
    %1010 = vmatpush2.bf16.msra.mxu0 0
    %1011 = vmatprep.subr.bf16.mxu0 0
    %1012 = vmatpush2.bf16.msra.mxu0 0
    %1013 = vmatprep.subr.bf16.mxu0 0
    %1014 = vmatpush2.bf16.msra.mxu0 0
    %1015 = vmatprep.mubr.bf16.mxu0 0
    %1016 = vmatmul.mubr.bf16.gmra.mxu0 %v373
    %v1017 = vpop.f32.mrf.mxu0
    %v1018 = vadd.f32 0.0, %v1017
    %v1019 = vpop.f32.mrf.mxu0
    %v1020 = vadd.f32 0.0, %v1019
    %v1021 = vpop.f32.mrf.mxu0
    %v1022 = vadd.f32 0.0, %v1021
    %v1023 = vpop.f32.mrf.mxu0
    %v1024 = vadd.f32 0.0, %v1023
    %1025 = vdwg.mxu0
    %1026 = vmatprep.subr.bf16.mxu0 %v755
    %1027 = vmatpush1.bf16.msra.mxu0 %v754
    %1028 = vmatprep.subr.bf16.mxu0 %v743
    %1029 = vmatpush1.bf16.msra.mxu0 %v742
    %1030 = vmatprep.subr.bf16.mxu0 %v731
    %1031 = vmatpush1.bf16.msra.mxu0 %v730
    %1032 = vmatprep.subr.bf16.mxu0 %v719
    %1033 = vmatpush1.bf16.msra.mxu0 %v718
    %1034 = vmatprep.subr.bf16.mxu0 %v707
    %1035 = vmatpush1.bf16.msra.mxu0 %v706
    %1036 = vmatprep.subr.bf16.mxu0 %v695
    %1037 = vmatpush1.bf16.msra.mxu0 %v694
    %1038 = vmatprep.subr.bf16.mxu0 %v683
    %1039 = vmatpush1.bf16.msra.mxu0 %v682
    %1040 = vmatprep.subr.bf16.mxu0 %v671
    %1041 = vmatpush1.bf16.msra.mxu0 %v670
    %1042 = vmatprep.subr.bf16.mxu0 0
    %1043 = vmatpush2.bf16.msra.mxu0 0
    %1044 = vmatprep.subr.bf16.mxu0 0
    %1045 = vmatpush2.bf16.msra.mxu0 0
    %1046 = vmatprep.subr.bf16.mxu0 0
    %1047 = vmatpush2.bf16.msra.mxu0 0
    %1048 = vmatprep.subr.bf16.mxu0 0
    %1049 = vmatpush2.bf16.msra.mxu0 0
    %1050 = vmatprep.subr.bf16.mxu0 0
    %1051 = vmatpush2.bf16.msra.mxu0 0
    %1052 = vmatprep.subr.bf16.mxu0 0
    %1053 = vmatpush2.bf16.msra.mxu0 0
    %1054 = vmatprep.subr.bf16.mxu0 0
    %1055 = vmatpush2.bf16.msra.mxu0 0
    %1056 = vmatprep.subr.bf16.mxu0 0
    %1057 = vmatpush2.bf16.msra.mxu0 0
    %1058 = vmatprep.mubr.bf16.mxu0 0
    %1059 = vmatmul.mubr.bf16.gmra.mxu0 %v373
    %v1060 = vpop.f32.mrf.mxu0
    %v1061 = vadd.f32 0.0, %v1060
    %v1062 = vpop.f32.mrf.mxu0
    %v1063 = vadd.f32 0.0, %v1062
    %v1064 = vpop.f32.mrf.mxu0
    %v1065 = vadd.f32 0.0, %v1064
    %v1066 = vpop.f32.mrf.mxu0
    %v1067 = vadd.f32 0.0, %v1066
    %1068 = vdwg.mxu0
    %1069 = vmatprep.subr.bf16.mxu0 %v757
    %1070 = vmatpush1.bf16.msra.mxu0 %v756
    %1071 = vmatprep.subr.bf16.mxu0 %v745
    %1072 = vmatpush1.bf16.msra.mxu0 %v744
    %1073 = vmatprep.subr.bf16.mxu0 %v733
    %1074 = vmatpush1.bf16.msra.mxu0 %v732
    %1075 = vmatprep.subr.bf16.mxu0 %v721
    %1076 = vmatpush1.bf16.msra.mxu0 %v720
    %1077 = vmatprep.subr.bf16.mxu0 %v709
    %1078 = vmatpush1.bf16.msra.mxu0 %v708
    %1079 = vmatprep.subr.bf16.mxu0 %v697
    %1080 = vmatpush1.bf16.msra.mxu0 %v696
    %1081 = vmatprep.subr.bf16.mxu0 %v685
    %1082 = vmatpush1.bf16.msra.mxu0 %v684
    %1083 = vmatprep.subr.bf16.mxu0 %v673
    %1084 = vmatpush1.bf16.msra.mxu0 %v672
    %1085 = vmatprep.subr.bf16.mxu0 0
    %1086 = vmatpush2.bf16.msra.mxu0 0
    %1087 = vmatprep.subr.bf16.mxu0 0
    %1088 = vmatpush2.bf16.msra.mxu0 0
    %1089 = vmatprep.subr.bf16.mxu0 0
    %1090 = vmatpush2.bf16.msra.mxu0 0
    %1091 = vmatprep.subr.bf16.mxu0 0
    %1092 = vmatpush2.bf16.msra.mxu0 0
    %1093 = vmatprep.subr.bf16.mxu0 0
    %1094 = vmatpush2.bf16.msra.mxu0 0
    %1095 = vmatprep.subr.bf16.mxu0 0
    %1096 = vmatpush2.bf16.msra.mxu0 0
    %1097 = vmatprep.subr.bf16.mxu0 0
    %1098 = vmatpush2.bf16.msra.mxu0 0
    %1099 = vmatprep.subr.bf16.mxu0 0
    %1100 = vmatpush2.bf16.msra.mxu0 0
    %1101 = vmatprep.mubr.bf16.mxu0 0
    %1102 = vmatmul.mubr.bf16.gmra.mxu0 %v373
    %v1103 = vpop.f32.mrf.mxu0
    %v1104 = vadd.f32 0.0, %v1103
    %v1105 = vpop.f32.mrf.mxu0
    %v1106 = vadd.f32 0.0, %v1105
    %v1107 = vpop.f32.mrf.mxu0
    %v1108 = vadd.f32 0.0, %v1107
    %v1109 = vpop.f32.mrf.mxu0
    %v1110 = vadd.f32 0.0, %v1109
    %1111 = vdwg.mxu0
    %v1112 = vpack.c.bf16 %v889, %v889
    %v1113 = vpack.c.bf16 %v891, %v891
    %v1114 = vpack.c.bf16 %v932, %v932
    %v1115 = vpack.c.bf16 %v934, %v934
    %v1116 = vpack.c.bf16 %v975, %v975
    %v1117 = vpack.c.bf16 %v977, %v977
    %v1118 = vpack.c.bf16 %v1018, %v1018
    %v1119 = vpack.c.bf16 %v1020, %v1020
    %v1120 = vpack.c.bf16 %v1061, %v1061
    %v1121 = vpack.c.bf16 %v1063, %v1063
    %v1122 = vpack.c.bf16 %v1104, %v1104
    %v1123 = vpack.c.bf16 %v1106, %v1106
    %1124 = vmatprep.subr.bf16.mxu0 0
    %1125 = vmatpush1.bf16.xpose.msra.mxu0 0
    %1126 = vmatprep.subr.bf16.mxu0 0
    %1127 = vmatpush1.bf16.xpose.msra.mxu0 0
    %1128 = vmatprep.subr.bf16.mxu0 0
    %1129 = vmatpush1.bf16.xpose.msra.mxu0 0
    %1130 = vmatprep.subr.bf16.mxu0 0
    %1131 = vmatpush1.bf16.xpose.msra.mxu0 0
    %1132 = vmatprep.subr.bf16.mxu0 0
    %1133 = vmatpush1.bf16.xpose.msra.mxu0 0
    %1134 = vmatprep.subr.bf16.mxu0 0
    %1135 = vmatpush1.bf16.xpose.msra.mxu0 0
    %1136 = vmatprep.subr.bf16.mxu0 0
    %1137 = vmatpush1.bf16.xpose.msra.mxu0 0
    %1138 = vmatprep.subr.bf16.mxu0 0
    %1139 = vmatpush1.bf16.xpose.msra.mxu0 %v1116
    %1140 = vmatprep.subr.bf16.mxu0 0
    %1141 = vmatpush2.bf16.xpose.msra.mxu0 0
    %1142 = vmatprep.subr.bf16.mxu0 0
    %1143 = vmatpush2.bf16.xpose.msra.mxu0 0
    %1144 = vmatprep.subr.bf16.mxu0 0
    %1145 = vmatpush2.bf16.xpose.msra.mxu0 0
    %1146 = vmatprep.subr.bf16.mxu0 0
    %1147 = vmatpush2.bf16.xpose.msra.mxu0 0
    %1148 = vmatprep.subr.bf16.mxu0 0
    %1149 = vmatpush2.bf16.xpose.msra.mxu0 0
    %1150 = vmatprep.subr.bf16.mxu0 0
    %1151 = vmatpush2.bf16.xpose.msra.mxu0 0
    %1152 = vmatprep.subr.bf16.mxu0 0
    %1153 = vmatpush2.bf16.xpose.msra.mxu0 0
    %1154 = vmatprep.subr.bf16.mxu0 0
    %1155 = vmatpush2.bf16.xpose.msra.mxu0 0
    %1156 = vmatprep.mubr.bf16.mxu0 0
    %1157 = vmatmul.mubr.bf16.gmra.mxu0 %v1112
    %v1158 = vpop.f32.mrf.mxu0
    %v1159 = vadd.f32 0.0, %v1158
    %v1160 = vpop.f32.mrf.mxu0
    %v1161 = vpop.f32.mrf.mxu0
    %v1162 = vpop.f32.mrf.mxu0
    %1163 = vdwg.mxu0
    %1164 = vmatprep.subr.bf16.mxu0 0
    %1165 = vmatpush1.bf16.xpose.msra.mxu0 0
    %1166 = vmatprep.subr.bf16.mxu0 0
    %1167 = vmatpush1.bf16.xpose.msra.mxu0 0
    %1168 = vmatprep.subr.bf16.mxu0 0
    %1169 = vmatpush1.bf16.xpose.msra.mxu0 0
    %1170 = vmatprep.subr.bf16.mxu0 0
    %1171 = vmatpush1.bf16.xpose.msra.mxu0 0
    %1172 = vmatprep.subr.bf16.mxu0 0
    %1173 = vmatpush1.bf16.xpose.msra.mxu0 0
    %1174 = vmatprep.subr.bf16.mxu0 0
    %1175 = vmatpush1.bf16.xpose.msra.mxu0 0
    %1176 = vmatprep.subr.bf16.mxu0 0
    %1177 = vmatpush1.bf16.xpose.msra.mxu0 0
    %1178 = vmatprep.subr.bf16.mxu0 0
    %1179 = vmatpush1.bf16.xpose.msra.mxu0 %v1117
    %1180 = vmatprep.subr.bf16.mxu0 0
    %1181 = vmatpush2.bf16.xpose.msra.mxu0 0
    %1182 = vmatprep.subr.bf16.mxu0 0
    %1183 = vmatpush2.bf16.xpose.msra.mxu0 0
    %1184 = vmatprep.subr.bf16.mxu0 0
    %1185 = vmatpush2.bf16.xpose.msra.mxu0 0
    %1186 = vmatprep.subr.bf16.mxu0 0
    %1187 = vmatpush2.bf16.xpose.msra.mxu0 0
    %1188 = vmatprep.subr.bf16.mxu0 0
    %1189 = vmatpush2.bf16.xpose.msra.mxu0 0
    %1190 = vmatprep.subr.bf16.mxu0 0
    %1191 = vmatpush2.bf16.xpose.msra.mxu0 0
    %1192 = vmatprep.subr.bf16.mxu0 0
    %1193 = vmatpush2.bf16.xpose.msra.mxu0 0
    %1194 = vmatprep.subr.bf16.mxu0 0
    %1195 = vmatpush2.bf16.xpose.msra.mxu0 0
    %1196 = vmatprep.mubr.bf16.mxu0 0
    %1197 = vmatmul.mubr.bf16.gmra.mxu0 %v1113
    %v1198 = vpop.f32.mrf.mxu0
    %v1199 = vadd.f32 0.0, %v1198
    %v1200 = vpop.f32.mrf.mxu0
    %v1201 = vpop.f32.mrf.mxu0
    %v1202 = vpop.f32.mrf.mxu0
    %1203 = vdwg.mxu0
    %1204 = vmatprep.subr.bf16.mxu0 0
    %1205 = vmatpush1.bf16.xpose.msra.mxu0 0
    %1206 = vmatprep.subr.bf16.mxu0 0
    %1207 = vmatpush1.bf16.xpose.msra.mxu0 0
    %1208 = vmatprep.subr.bf16.mxu0 0
    %1209 = vmatpush1.bf16.xpose.msra.mxu0 0
    %1210 = vmatprep.subr.bf16.mxu0 0
    %1211 = vmatpush1.bf16.xpose.msra.mxu0 0
    %1212 = vmatprep.subr.bf16.mxu0 0
    %1213 = vmatpush1.bf16.xpose.msra.mxu0 0
    %1214 = vmatprep.subr.bf16.mxu0 0
    %1215 = vmatpush1.bf16.xpose.msra.mxu0 0
    %1216 = vmatprep.subr.bf16.mxu0 0
    %1217 = vmatpush1.bf16.xpose.msra.mxu0 0
    %1218 = vmatprep.subr.bf16.mxu0 0
    %1219 = vmatpush1.bf16.xpose.msra.mxu0 %v1118
    %1220 = vmatprep.subr.bf16.mxu0 0
    %1221 = vmatpush2.bf16.xpose.msra.mxu0 0
    %1222 = vmatprep.subr.bf16.mxu0 0
    %1223 = vmatpush2.bf16.xpose.msra.mxu0 0
    %1224 = vmatprep.subr.bf16.mxu0 0
    %1225 = vmatpush2.bf16.xpose.msra.mxu0 0
    %1226 = vmatprep.subr.bf16.mxu0 0
    %1227 = vmatpush2.bf16.xpose.msra.mxu0 0
    %1228 = vmatprep.subr.bf16.mxu0 0
    %1229 = vmatpush2.bf16.xpose.msra.mxu0 0
    %1230 = vmatprep.subr.bf16.mxu0 0
    %1231 = vmatpush2.bf16.xpose.msra.mxu0 0
    %1232 = vmatprep.subr.bf16.mxu0 0
    %1233 = vmatpush2.bf16.xpose.msra.mxu0 0
    %1234 = vmatprep.subr.bf16.mxu0 0
    %1235 = vmatpush2.bf16.xpose.msra.mxu0 0
    %1236 = vmatprep.mubr.bf16.mxu0 0
    %1237 = vmatmul.mubr.bf16.gmra.mxu0 %v1114
    %v1238 = vpop.f32.mrf.mxu0
    %v1239 = vadd.f32 0.0, %v1238
    %v1240 = vpop.f32.mrf.mxu0
    %v1241 = vpop.f32.mrf.mxu0
    %v1242 = vpop.f32.mrf.mxu0
    %1243 = vdwg.mxu0
    %1244 = vmatprep.subr.bf16.mxu0 0
    %1245 = vmatpush1.bf16.xpose.msra.mxu0 0
    %1246 = vmatprep.subr.bf16.mxu0 0
    %1247 = vmatpush1.bf16.xpose.msra.mxu0 0
    %1248 = vmatprep.subr.bf16.mxu0 0
    %1249 = vmatpush1.bf16.xpose.msra.mxu0 0
    %1250 = vmatprep.subr.bf16.mxu0 0
    %1251 = vmatpush1.bf16.xpose.msra.mxu0 0
    %1252 = vmatprep.subr.bf16.mxu0 0
    %1253 = vmatpush1.bf16.xpose.msra.mxu0 0
    %1254 = vmatprep.subr.bf16.mxu0 0
    %1255 = vmatpush1.bf16.xpose.msra.mxu0 0
    %1256 = vmatprep.subr.bf16.mxu0 0
    %1257 = vmatpush1.bf16.xpose.msra.mxu0 0
    %1258 = vmatprep.subr.bf16.mxu0 0
    %1259 = vmatpush1.bf16.xpose.msra.mxu0 %v1119
    %1260 = vmatprep.subr.bf16.mxu0 0
    %1261 = vmatpush2.bf16.xpose.msra.mxu0 0
    %1262 = vmatprep.subr.bf16.mxu0 0
    %1263 = vmatpush2.bf16.xpose.msra.mxu0 0
    %1264 = vmatprep.subr.bf16.mxu0 0
    %1265 = vmatpush2.bf16.xpose.msra.mxu0 0
    %1266 = vmatprep.subr.bf16.mxu0 0
    %1267 = vmatpush2.bf16.xpose.msra.mxu0 0
    %1268 = vmatprep.subr.bf16.mxu0 0
    %1269 = vmatpush2.bf16.xpose.msra.mxu0 0
    %1270 = vmatprep.subr.bf16.mxu0 0
    %1271 = vmatpush2.bf16.xpose.msra.mxu0 0
    %1272 = vmatprep.subr.bf16.mxu0 0
    %1273 = vmatpush2.bf16.xpose.msra.mxu0 0
    %1274 = vmatprep.subr.bf16.mxu0 0
    %1275 = vmatpush2.bf16.xpose.msra.mxu0 0
    %1276 = vmatprep.mubr.bf16.mxu0 0
    %1277 = vmatmul.mubr.bf16.gmra.mxu0 %v1115
    %v1278 = vpop.f32.mrf.mxu0
    %v1279 = vadd.f32 0.0, %v1278
    %v1280 = vpop.f32.mrf.mxu0
    %v1281 = vpop.f32.mrf.mxu0
    %v1282 = vpop.f32.mrf.mxu0
    %1283 = vdwg.mxu0
    %vm1284 = vcmask 64512
    %v1285 = vsel %vm1284, %v1159, -inf
    %1286 = vmax.xlane.f32.xlu0 %v1285
    %v1287 = vpop.xlane.xlu0 %1286
    %v1288 = vsel %vm1284, %v1199, -inf
    %1289 = vmax.xlane.f32.xlu0 %v1288
    %v1290 = vpop.xlane.xlu0 %1289
    %v1291 = vsel %vm1284, %v1239, -inf
    %1292 = vmax.xlane.f32.xlu0 %v1291
    %v1293 = vpop.xlane.xlu0 %1292
    %v1294 = vsel %vm1284, %v1279, -inf
    %1295 = vmax.xlane.f32.xlu0 %v1294
    %v1296 = vpop.xlane.xlu0 %1295
    %v1297 = vsub.f32 %v1159, %v1287
    %v1298 = vsub.f32 %v1199, %v1290
    %v1299 = vsub.f32 %v1239, %v1293
    %v1300 = vsub.f32 %v1279, %v1296
    %v1301 = vmul.f32 %v1297, 1.442695
    %v1302 = vpow.pop %v1301
    %v1303 = vmul.f32 %v1298, 1.442695
    %v1304 = vpow.pop %v1303
    %v1305 = vmul.f32 %v1299, 1.442695
    %v1306 = vpow.pop %v1305
    %v1307 = vmul.f32 %v1300, 1.442695
    %v1308 = vpow.pop %v1307
    %v1309 = vsel %vm1284, %v1302, 0.0
    %1310 = vadd.xlane.f32.xlu0 %v1309
    %v1311 = vpop.xlane.xlu0 %1310
    %v1312 = vsel %vm1284, %v1304, 0.0
    %1313 = vadd.xlane.f32.xlu0 %v1312
    %v1314 = vpop.xlane.xlu0 %1313
    %v1315 = vsel %vm1284, %v1306, 0.0
    %1316 = vadd.xlane.f32.xlu0 %v1315
    %v1317 = vpop.xlane.xlu0 %1316
    %v1318 = vsel %vm1284, %v1308, 0.0
    %1319 = vadd.xlane.f32.xlu0 %v1318
    %v1320 = vpop.xlane.xlu0 %1319
    %v1321 = vrcp.pop %v1311
    %v1322 = vrcp.pop %v1314
    %v1323 = vrcp.pop %v1317
    %v1324 = vrcp.pop %v1320
    %v1325 = vmul.f32 %v1302, %v1321
    %v1326 = vmul.f32 %v1304, %v1322
    %v1327 = vmul.f32 %v1306, %v1323
    %v1328 = vmul.f32 %v1308, %v1324
    %v1329 = vpack.c.bf16 %v1325, %v1325
    %v1330 = vpack.c.bf16 %v1326, %v1326
    %v1331 = vpack.c.bf16 %v1327, %v1327
    %v1332 = vpack.c.bf16 %v1328, %v1328
    %v1334 = vsel %vm1284, %v1329, 0
    %vm1336 = vcmask 1043456
    %v1338 = vsel %vm1336, %v1120, 0
    %1340 = vmatprep.subr.bf16.mxu0 0
    %1341 = vmatpush1.bf16.msra.mxu0 0
    %1342 = vmatprep.subr.bf16.mxu0 0
    %1343 = vmatpush1.bf16.msra.mxu0 0
    %1344 = vmatprep.subr.bf16.mxu0 0
    %1345 = vmatpush1.bf16.msra.mxu0 0
    %1346 = vmatprep.subr.bf16.mxu0 0
    %1347 = vmatpush1.bf16.msra.mxu0 0
    %1348 = vmatprep.subr.bf16.mxu0 0
    %1349 = vmatpush1.bf16.msra.mxu0 0
    %1350 = vmatprep.subr.bf16.mxu0 0
    %1351 = vmatpush1.bf16.msra.mxu0 0
    %1352 = vmatprep.subr.bf16.mxu0 0
    %1353 = vmatpush1.bf16.msra.mxu0 0
    %1354 = vmatprep.subr.bf16.mxu0 0
    %1355 = vmatpush1.bf16.msra.mxu0 %v1338
    %1356 = vmatprep.subr.bf16.mxu0 0
    %1357 = vmatpush2.bf16.msra.mxu0 0
    %1358 = vmatprep.subr.bf16.mxu0 0
    %1359 = vmatpush2.bf16.msra.mxu0 0
    %1360 = vmatprep.subr.bf16.mxu0 0
    %1361 = vmatpush2.bf16.msra.mxu0 0
    %1362 = vmatprep.subr.bf16.mxu0 0
    %1363 = vmatpush2.bf16.msra.mxu0 0
    %1364 = vmatprep.subr.bf16.mxu0 0
    %1365 = vmatpush2.bf16.msra.mxu0 0
    %1366 = vmatprep.subr.bf16.mxu0 0
    %1367 = vmatpush2.bf16.msra.mxu0 0
    %1368 = vmatprep.subr.bf16.mxu0 0
    %1369 = vmatpush2.bf16.msra.mxu0 0
    %1370 = vmatprep.subr.bf16.mxu0 0
    %1371 = vmatpush2.bf16.msra.mxu0 0
    %1372 = vmatprep.mubr.bf16.mxu0 0
    %1373 = vmatmul.mubr.bf16.gmra.mxu0 %v1334
    %v1374 = vpop.f32.mrf.mxu0
    %v1375 = vadd.f32 0.0, %v1374
    %v1376 = vpop.f32.mrf.mxu0
    %v1377 = vpop.f32.mrf.mxu0
    %v1378 = vpop.f32.mrf.mxu0
    %1379 = vdwg.mxu0
    %v1381 = vsel %vm1284, %v1330, 0
    %v1384 = vsel %vm1336, %v1121, 0
    %1386 = vmatprep.subr.bf16.mxu0 0
    %1387 = vmatpush1.bf16.msra.mxu0 0
    %1388 = vmatprep.subr.bf16.mxu0 0
    %1389 = vmatpush1.bf16.msra.mxu0 0
    %1390 = vmatprep.subr.bf16.mxu0 0
    %1391 = vmatpush1.bf16.msra.mxu0 0
    %1392 = vmatprep.subr.bf16.mxu0 0
    %1393 = vmatpush1.bf16.msra.mxu0 0
    %1394 = vmatprep.subr.bf16.mxu0 0
    %1395 = vmatpush1.bf16.msra.mxu0 0
    %1396 = vmatprep.subr.bf16.mxu0 0
    %1397 = vmatpush1.bf16.msra.mxu0 0
    %1398 = vmatprep.subr.bf16.mxu0 0
    %1399 = vmatpush1.bf16.msra.mxu0 0
    %1400 = vmatprep.subr.bf16.mxu0 0
    %1401 = vmatpush1.bf16.msra.mxu0 %v1384
    %1402 = vmatprep.subr.bf16.mxu0 0
    %1403 = vmatpush2.bf16.msra.mxu0 0
    %1404 = vmatprep.subr.bf16.mxu0 0
    %1405 = vmatpush2.bf16.msra.mxu0 0
    %1406 = vmatprep.subr.bf16.mxu0 0
    %1407 = vmatpush2.bf16.msra.mxu0 0
    %1408 = vmatprep.subr.bf16.mxu0 0
    %1409 = vmatpush2.bf16.msra.mxu0 0
    %1410 = vmatprep.subr.bf16.mxu0 0
    %1411 = vmatpush2.bf16.msra.mxu0 0
    %1412 = vmatprep.subr.bf16.mxu0 0
    %1413 = vmatpush2.bf16.msra.mxu0 0
    %1414 = vmatprep.subr.bf16.mxu0 0
    %1415 = vmatpush2.bf16.msra.mxu0 0
    %1416 = vmatprep.subr.bf16.mxu0 0
    %1417 = vmatpush2.bf16.msra.mxu0 0
    %1418 = vmatprep.mubr.bf16.mxu0 0
    %1419 = vmatmul.mubr.bf16.gmra.mxu0 %v1381
    %v1420 = vpop.f32.mrf.mxu0
    %v1421 = vadd.f32 0.0, %v1420
    %v1422 = vpop.f32.mrf.mxu0
    %v1423 = vpop.f32.mrf.mxu0
    %v1424 = vpop.f32.mrf.mxu0
    %1425 = vdwg.mxu0
    %v1427 = vsel %vm1284, %v1331, 0
    %v1430 = vsel %vm1336, %v1122, 0
    %1432 = vmatprep.subr.bf16.mxu0 0
    %1433 = vmatpush1.bf16.msra.mxu0 0
    %1434 = vmatprep.subr.bf16.mxu0 0
    %1435 = vmatpush1.bf16.msra.mxu0 0
    %1436 = vmatprep.subr.bf16.mxu0 0
    %1437 = vmatpush1.bf16.msra.mxu0 0
    %1438 = vmatprep.subr.bf16.mxu0 0
    %1439 = vmatpush1.bf16.msra.mxu0 0
    %1440 = vmatprep.subr.bf16.mxu0 0
    %1441 = vmatpush1.bf16.msra.mxu0 0
    %1442 = vmatprep.subr.bf16.mxu0 0
    %1443 = vmatpush1.bf16.msra.mxu0 0
    %1444 = vmatprep.subr.bf16.mxu0 0
    %1445 = vmatpush1.bf16.msra.mxu0 0
    %1446 = vmatprep.subr.bf16.mxu0 0
    %1447 = vmatpush1.bf16.msra.mxu0 %v1430
    %1448 = vmatprep.subr.bf16.mxu0 0
    %1449 = vmatpush2.bf16.msra.mxu0 0
    %1450 = vmatprep.subr.bf16.mxu0 0
    %1451 = vmatpush2.bf16.msra.mxu0 0
    %1452 = vmatprep.subr.bf16.mxu0 0
    %1453 = vmatpush2.bf16.msra.mxu0 0
    %1454 = vmatprep.subr.bf16.mxu0 0
    %1455 = vmatpush2.bf16.msra.mxu0 0
    %1456 = vmatprep.subr.bf16.mxu0 0
    %1457 = vmatpush2.bf16.msra.mxu0 0
    %1458 = vmatprep.subr.bf16.mxu0 0
    %1459 = vmatpush2.bf16.msra.mxu0 0
    %1460 = vmatprep.subr.bf16.mxu0 0
    %1461 = vmatpush2.bf16.msra.mxu0 0
    %1462 = vmatprep.subr.bf16.mxu0 0
    %1463 = vmatpush2.bf16.msra.mxu0 0
    %1464 = vmatprep.mubr.bf16.mxu0 0
    %1465 = vmatmul.mubr.bf16.gmra.mxu0 %v1427
    %v1466 = vpop.f32.mrf.mxu0
    %v1467 = vadd.f32 0.0, %v1466
    %v1468 = vpop.f32.mrf.mxu0
    %v1469 = vpop.f32.mrf.mxu0
    %v1470 = vpop.f32.mrf.mxu0
    %1471 = vdwg.mxu0
    %v1473 = vsel %vm1284, %v1332, 0
    %v1476 = vsel %vm1336, %v1123, 0
    %1478 = vmatprep.subr.bf16.mxu0 0
    %1479 = vmatpush1.bf16.msra.mxu0 0
    %1480 = vmatprep.subr.bf16.mxu0 0
    %1481 = vmatpush1.bf16.msra.mxu0 0
    %1482 = vmatprep.subr.bf16.mxu0 0
    %1483 = vmatpush1.bf16.msra.mxu0 0
    %1484 = vmatprep.subr.bf16.mxu0 0
    %1485 = vmatpush1.bf16.msra.mxu0 0
    %1486 = vmatprep.subr.bf16.mxu0 0
    %1487 = vmatpush1.bf16.msra.mxu0 0
    %1488 = vmatprep.subr.bf16.mxu0 0
    %1489 = vmatpush1.bf16.msra.mxu0 0
    %1490 = vmatprep.subr.bf16.mxu0 0
    %1491 = vmatpush1.bf16.msra.mxu0 0
    %1492 = vmatprep.subr.bf16.mxu0 0
    %1493 = vmatpush1.bf16.msra.mxu0 %v1476
    %1494 = vmatprep.subr.bf16.mxu0 0
    %1495 = vmatpush2.bf16.msra.mxu0 0
    %1496 = vmatprep.subr.bf16.mxu0 0
    %1497 = vmatpush2.bf16.msra.mxu0 0
    %1498 = vmatprep.subr.bf16.mxu0 0
    %1499 = vmatpush2.bf16.msra.mxu0 0
    %1500 = vmatprep.subr.bf16.mxu0 0
    %1501 = vmatpush2.bf16.msra.mxu0 0
    %1502 = vmatprep.subr.bf16.mxu0 0
    %1503 = vmatpush2.bf16.msra.mxu0 0
    %1504 = vmatprep.subr.bf16.mxu0 0
    %1505 = vmatpush2.bf16.msra.mxu0 0
    %1506 = vmatprep.subr.bf16.mxu0 0
    %1507 = vmatpush2.bf16.msra.mxu0 0
    %1508 = vmatprep.subr.bf16.mxu0 0
    %1509 = vmatpush2.bf16.msra.mxu0 0
    %1510 = vmatprep.mubr.bf16.mxu0 0
    %1511 = vmatmul.mubr.bf16.gmra.mxu0 %v1473
    %v1512 = vpop.f32.mrf.mxu0
    %v1513 = vadd.f32 0.0, %v1512
    %v1514 = vpop.f32.mrf.mxu0
    %v1515 = vpop.f32.mrf.mxu0
    %v1516 = vpop.f32.mrf.mxu0
    %1517 = vdwg.mxu0
    %v1518 = vpack.c.bf16 %v1375, %v1375
    %v1519 = vpack.c.bf16 %v1421, %v1421
    %v1520 = vpack.c.bf16 %v1467, %v1467
    %v1521 = vpack.c.bf16 %v1513, %v1513
    %v1538 = vunpack.c.l.b16 %v221
    %v1539 = vunpack.c.l.b16 %v222
    %v1540 = vunpack.c.l.b16 %v223
    %v1541 = vunpack.c.l.b16 %v224
    %v1542 = vunpack.c.l.b16 %v225
    %v1543 = vunpack.c.l.b16 %v226
    %v1544 = vunpack.c.l.b16 %v227
    %v1545 = vunpack.c.l.b16 %v228
    %v1546 = vunpack.c.l.b16 %v229
    %v1547 = vunpack.c.l.b16 %v230
    %v1548 = vunpack.c.l.b16 %v231
    %v1549 = vunpack.c.l.b16 %v232
    %v1550 = vunpack.c.l.b16 %v233
    %v1551 = vunpack.c.l.b16 %v234
    %v1552 = vunpack.c.l.b16 %v235
    %v1553 = vunpack.c.l.b16 %v236
    %v1554 = vpack.c.b16 %v1539, %v1538
    %v1555 = vpack.c.b16 %v1541, %v1540
    %v1556 = vpack.c.b16 %v1543, %v1542
    %v1557 = vpack.c.b16 %v1545, %v1544
    %v1558 = vpack.c.b16 %v1547, %v1546
    %v1559 = vpack.c.b16 %v1549, %v1548
    %v1560 = vpack.c.b16 %v1551, %v1550
    %v1561 = vpack.c.b16 %v1553, %v1552
    %1570 = vmatprep.subr.bf16.mxu0 0
    %1571 = vmatpush1.bf16.msra.mxu0 %v1561
    %1572 = vmatprep.subr.bf16.mxu0 0
    %1573 = vmatpush1.bf16.msra.mxu0 %v1560
    %1574 = vmatprep.subr.bf16.mxu0 0
    %1575 = vmatpush1.bf16.msra.mxu0 %v1559
    %1576 = vmatprep.subr.bf16.mxu0 0
    %1577 = vmatpush1.bf16.msra.mxu0 %v1558
    %1578 = vmatprep.subr.bf16.mxu0 0
    %1579 = vmatpush1.bf16.msra.mxu0 %v1557
    %1580 = vmatprep.subr.bf16.mxu0 0
    %1581 = vmatpush1.bf16.msra.mxu0 %v1556
    %1582 = vmatprep.subr.bf16.mxu0 0
    %1583 = vmatpush1.bf16.msra.mxu0 %v1555
    %1584 = vmatprep.subr.bf16.mxu0 0
    %1585 = vmatpush1.bf16.msra.mxu0 %v1554
    %1586 = vmatprep.subr.bf16.mxu0 0
    %1587 = vmatpush2.bf16.msra.mxu0 0
    %1588 = vmatprep.subr.bf16.mxu0 0
    %1589 = vmatpush2.bf16.msra.mxu0 0
    %1590 = vmatprep.subr.bf16.mxu0 0
    %1591 = vmatpush2.bf16.msra.mxu0 0
    %1592 = vmatprep.subr.bf16.mxu0 0
    %1593 = vmatpush2.bf16.msra.mxu0 0
    %1594 = vmatprep.subr.bf16.mxu0 0
    %1595 = vmatpush2.bf16.msra.mxu0 0
    %1596 = vmatprep.subr.bf16.mxu0 0
    %1597 = vmatpush2.bf16.msra.mxu0 0
    %1598 = vmatprep.subr.bf16.mxu0 0
    %1599 = vmatpush2.bf16.msra.mxu0 0
    %1600 = vmatprep.subr.bf16.mxu0 0
    %1601 = vmatpush2.bf16.msra.mxu0 0
    %1602 = vmatprep.mubr.bf16.mxu0 0
    %1603 = vmatmul.mubr.bf16.gmra.mxu0 %v1518
    %v1604 = vpop.f32.mrf.mxu0
    %v1605 = vadd.f32 0.0, %v1604
    %v1606 = vpop.f32.mrf.mxu0
    %v1607 = vpop.f32.mrf.mxu0
    %v1608 = vpop.f32.mrf.mxu0
    %1609 = vdwg.mxu0
    %v1626 = vunpack.c.l.b16 %v237
    %v1627 = vunpack.c.l.b16 %v238
    %v1628 = vunpack.c.l.b16 %v239
    %v1629 = vunpack.c.l.b16 %v240
    %v1630 = vunpack.c.l.b16 %v241
    %v1631 = vunpack.c.l.b16 %v242
    %v1632 = vunpack.c.l.b16 %v243
    %v1633 = vunpack.c.l.b16 %v244
    %v1634 = vunpack.c.l.b16 %v245
    %v1635 = vunpack.c.l.b16 %v246
    %v1636 = vunpack.c.l.b16 %v247
    %v1637 = vunpack.c.l.b16 %v248
    %v1638 = vunpack.c.l.b16 %v249
    %v1639 = vunpack.c.l.b16 %v250
    %v1640 = vunpack.c.l.b16 %v251
    %v1641 = vunpack.c.l.b16 %v252
    %v1642 = vpack.c.b16 %v1627, %v1626
    %v1643 = vpack.c.b16 %v1629, %v1628
    %v1644 = vpack.c.b16 %v1631, %v1630
    %v1645 = vpack.c.b16 %v1633, %v1632
    %v1646 = vpack.c.b16 %v1635, %v1634
    %v1647 = vpack.c.b16 %v1637, %v1636
    %v1648 = vpack.c.b16 %v1639, %v1638
    %v1649 = vpack.c.b16 %v1641, %v1640
    %1658 = vmatprep.subr.bf16.mxu0 0
    %1659 = vmatpush1.bf16.msra.mxu0 %v1649
    %1660 = vmatprep.subr.bf16.mxu0 0
    %1661 = vmatpush1.bf16.msra.mxu0 %v1648
    %1662 = vmatprep.subr.bf16.mxu0 0
    %1663 = vmatpush1.bf16.msra.mxu0 %v1647
    %1664 = vmatprep.subr.bf16.mxu0 0
    %1665 = vmatpush1.bf16.msra.mxu0 %v1646
    %1666 = vmatprep.subr.bf16.mxu0 0
    %1667 = vmatpush1.bf16.msra.mxu0 %v1645
    %1668 = vmatprep.subr.bf16.mxu0 0
    %1669 = vmatpush1.bf16.msra.mxu0 %v1644
    %1670 = vmatprep.subr.bf16.mxu0 0
    %1671 = vmatpush1.bf16.msra.mxu0 %v1643
    %1672 = vmatprep.subr.bf16.mxu0 0
    %1673 = vmatpush1.bf16.msra.mxu0 %v1642
    %1674 = vmatprep.subr.bf16.mxu0 0
    %1675 = vmatpush2.bf16.msra.mxu0 0
    %1676 = vmatprep.subr.bf16.mxu0 0
    %1677 = vmatpush2.bf16.msra.mxu0 0
    %1678 = vmatprep.subr.bf16.mxu0 0
    %1679 = vmatpush2.bf16.msra.mxu0 0
    %1680 = vmatprep.subr.bf16.mxu0 0
    %1681 = vmatpush2.bf16.msra.mxu0 0
    %1682 = vmatprep.subr.bf16.mxu0 0
    %1683 = vmatpush2.bf16.msra.mxu0 0
    %1684 = vmatprep.subr.bf16.mxu0 0
    %1685 = vmatpush2.bf16.msra.mxu0 0
    %1686 = vmatprep.subr.bf16.mxu0 0
    %1687 = vmatpush2.bf16.msra.mxu0 0
    %1688 = vmatprep.subr.bf16.mxu0 0
    %1689 = vmatpush2.bf16.msra.mxu0 0
    %1690 = vmatprep.mubr.bf16.mxu0 0
    %1691 = vmatmul.mubr.bf16.gmra.mxu0 %v1519
    %v1692 = vpop.f32.mrf.mxu0
    %v1693 = vadd.f32 0.0, %v1692
    %v1694 = vpop.f32.mrf.mxu0
    %v1695 = vpop.f32.mrf.mxu0
    %v1696 = vpop.f32.mrf.mxu0
    %1697 = vdwg.mxu0
    %v1714 = vunpack.c.l.b16 %v253
    %v1715 = vunpack.c.l.b16 %v254
    %v1716 = vunpack.c.l.b16 %v255
    %v1717 = vunpack.c.l.b16 %v256
    %v1718 = vunpack.c.l.b16 %v257
    %v1719 = vunpack.c.l.b16 %v258
    %v1720 = vunpack.c.l.b16 %v259
    %v1721 = vunpack.c.l.b16 %v260
    %v1722 = vunpack.c.l.b16 %v261
    %v1723 = vunpack.c.l.b16 %v262
    %v1724 = vunpack.c.l.b16 %v263
    %v1725 = vunpack.c.l.b16 %v264
    %v1726 = vunpack.c.l.b16 %v265
    %v1727 = vunpack.c.l.b16 %v266
    %v1728 = vunpack.c.l.b16 %v267
    %v1729 = vunpack.c.l.b16 %v268
    %v1730 = vpack.c.b16 %v1715, %v1714
    %v1731 = vpack.c.b16 %v1717, %v1716
    %v1732 = vpack.c.b16 %v1719, %v1718
    %v1733 = vpack.c.b16 %v1721, %v1720
    %v1734 = vpack.c.b16 %v1723, %v1722
    %v1735 = vpack.c.b16 %v1725, %v1724
    %v1736 = vpack.c.b16 %v1727, %v1726
    %v1737 = vpack.c.b16 %v1729, %v1728
    %1746 = vmatprep.subr.bf16.mxu0 0
    %1747 = vmatpush1.bf16.msra.mxu0 %v1737
    %1748 = vmatprep.subr.bf16.mxu0 0
    %1749 = vmatpush1.bf16.msra.mxu0 %v1736
    %1750 = vmatprep.subr.bf16.mxu0 0
    %1751 = vmatpush1.bf16.msra.mxu0 %v1735
    %1752 = vmatprep.subr.bf16.mxu0 0
    %1753 = vmatpush1.bf16.msra.mxu0 %v1734
    %1754 = vmatprep.subr.bf16.mxu0 0
    %1755 = vmatpush1.bf16.msra.mxu0 %v1733
    %1756 = vmatprep.subr.bf16.mxu0 0
    %1757 = vmatpush1.bf16.msra.mxu0 %v1732
    %1758 = vmatprep.subr.bf16.mxu0 0
    %1759 = vmatpush1.bf16.msra.mxu0 %v1731
    %1760 = vmatprep.subr.bf16.mxu0 0
    %1761 = vmatpush1.bf16.msra.mxu0 %v1730
    %1762 = vmatprep.subr.bf16.mxu0 0
    %1763 = vmatpush2.bf16.msra.mxu0 0
    %1764 = vmatprep.subr.bf16.mxu0 0
    %1765 = vmatpush2.bf16.msra.mxu0 0
    %1766 = vmatprep.subr.bf16.mxu0 0
    %1767 = vmatpush2.bf16.msra.mxu0 0
    %1768 = vmatprep.subr.bf16.mxu0 0
    %1769 = vmatpush2.bf16.msra.mxu0 0
    %1770 = vmatprep.subr.bf16.mxu0 0
    %1771 = vmatpush2.bf16.msra.mxu0 0
    %1772 = vmatprep.subr.bf16.mxu0 0
    %1773 = vmatpush2.bf16.msra.mxu0 0
    %1774 = vmatprep.subr.bf16.mxu0 0
    %1775 = vmatpush2.bf16.msra.mxu0 0
    %1776 = vmatprep.subr.bf16.mxu0 0
    %1777 = vmatpush2.bf16.msra.mxu0 0
    %1778 = vmatprep.mubr.bf16.mxu0 0
    %1779 = vmatmul.mubr.bf16.gmra.mxu0 %v1520
    %v1780 = vpop.f32.mrf.mxu0
    %v1781 = vadd.f32 0.0, %v1780
    %v1782 = vpop.f32.mrf.mxu0
    %v1783 = vpop.f32.mrf.mxu0
    %v1784 = vpop.f32.mrf.mxu0
    %1785 = vdwg.mxu0
    %v1802 = vunpack.c.l.b16 %v269
    %v1803 = vunpack.c.l.b16 %v270
    %v1804 = vunpack.c.l.b16 %v271
    %v1805 = vunpack.c.l.b16 %v272
    %v1806 = vunpack.c.l.b16 %v273
    %v1807 = vunpack.c.l.b16 %v274
    %v1808 = vunpack.c.l.b16 %v275
    %v1809 = vunpack.c.l.b16 %v276
    %v1810 = vunpack.c.l.b16 %v277
    %v1811 = vunpack.c.l.b16 %v278
    %v1812 = vunpack.c.l.b16 %v279
    %v1813 = vunpack.c.l.b16 %v280
    %v1814 = vunpack.c.l.b16 %v281
    %v1815 = vunpack.c.l.b16 %v282
    %v1816 = vunpack.c.l.b16 %v283
    %v1817 = vunpack.c.l.b16 %v284
    %v1818 = vpack.c.b16 %v1803, %v1802
    %v1819 = vpack.c.b16 %v1805, %v1804
    %v1820 = vpack.c.b16 %v1807, %v1806
    %v1821 = vpack.c.b16 %v1809, %v1808
    %v1822 = vpack.c.b16 %v1811, %v1810
    %v1823 = vpack.c.b16 %v1813, %v1812
    %v1824 = vpack.c.b16 %v1815, %v1814
    %v1825 = vpack.c.b16 %v1817, %v1816
    %1834 = vmatprep.subr.bf16.mxu0 0
    %1835 = vmatpush1.bf16.msra.mxu0 %v1825
    %1836 = vmatprep.subr.bf16.mxu0 0
    %1837 = vmatpush1.bf16.msra.mxu0 %v1824
    %1838 = vmatprep.subr.bf16.mxu0 0
    %1839 = vmatpush1.bf16.msra.mxu0 %v1823
    %1840 = vmatprep.subr.bf16.mxu0 0
    %1841 = vmatpush1.bf16.msra.mxu0 %v1822
    %1842 = vmatprep.subr.bf16.mxu0 0
    %1843 = vmatpush1.bf16.msra.mxu0 %v1821
    %1844 = vmatprep.subr.bf16.mxu0 0
    %1845 = vmatpush1.bf16.msra.mxu0 %v1820
    %1846 = vmatprep.subr.bf16.mxu0 0
    %1847 = vmatpush1.bf16.msra.mxu0 %v1819
    %1848 = vmatprep.subr.bf16.mxu0 0
    %1849 = vmatpush1.bf16.msra.mxu0 %v1818
    %1850 = vmatprep.subr.bf16.mxu0 0
    %1851 = vmatpush2.bf16.msra.mxu0 0
    %1852 = vmatprep.subr.bf16.mxu0 0
    %1853 = vmatpush2.bf16.msra.mxu0 0
    %1854 = vmatprep.subr.bf16.mxu0 0
    %1855 = vmatpush2.bf16.msra.mxu0 0
    %1856 = vmatprep.subr.bf16.mxu0 0
    %1857 = vmatpush2.bf16.msra.mxu0 0
    %1858 = vmatprep.subr.bf16.mxu0 0
    %1859 = vmatpush2.bf16.msra.mxu0 0
    %1860 = vmatprep.subr.bf16.mxu0 0
    %1861 = vmatpush2.bf16.msra.mxu0 0
    %1862 = vmatprep.subr.bf16.mxu0 0
    %1863 = vmatpush2.bf16.msra.mxu0 0
    %1864 = vmatprep.subr.bf16.mxu0 0
    %1865 = vmatpush2.bf16.msra.mxu0 0
    %1866 = vmatprep.mubr.bf16.mxu0 0
    %1867 = vmatmul.mubr.bf16.gmra.mxu0 %v1521
    %v1868 = vpop.f32.mrf.mxu0
    %v1869 = vadd.f32 0.0, %v1868
    %v1870 = vpop.f32.mrf.mxu0
    %v1871 = vpop.f32.mrf.mxu0
    %v1872 = vpop.f32.mrf.mxu0
    %1873 = vdwg.mxu0
    %v1874 = vadd.f32 %v1605, %v1693
    %v1875 = vadd.f32 %v1874, %v1781
    %v1876 = vadd.f32 %v1875, %v1869
    %v1877 = vpack.c.bf16 %v893, %v893
    %v1878 = vpack.c.bf16 %v895, %v895
    %v1879 = vpack.c.bf16 %v936, %v936
    %v1880 = vpack.c.bf16 %v938, %v938
    %v1881 = vpack.c.bf16 %v979, %v979
    %v1882 = vpack.c.bf16 %v981, %v981
    %v1883 = vpack.c.bf16 %v1022, %v1022
    %v1884 = vpack.c.bf16 %v1024, %v1024
    %v1885 = vpack.c.bf16 %v1065, %v1065
    %v1886 = vpack.c.bf16 %v1067, %v1067
    %v1887 = vpack.c.bf16 %v1108, %v1108
    %v1888 = vpack.c.bf16 %v1110, %v1110
    %1889 = vmatprep.subr.bf16.mxu0 0
    %1890 = vmatpush1.bf16.xpose.msra.mxu0 0
    %1891 = vmatprep.subr.bf16.mxu0 0
    %1892 = vmatpush1.bf16.xpose.msra.mxu0 0
    %1893 = vmatprep.subr.bf16.mxu0 0
    %1894 = vmatpush1.bf16.xpose.msra.mxu0 0
    %1895 = vmatprep.subr.bf16.mxu0 0
    %1896 = vmatpush1.bf16.xpose.msra.mxu0 0
    %1897 = vmatprep.subr.bf16.mxu0 0
    %1898 = vmatpush1.bf16.xpose.msra.mxu0 0
    %1899 = vmatprep.subr.bf16.mxu0 0
    %1900 = vmatpush1.bf16.xpose.msra.mxu0 0
    %1901 = vmatprep.subr.bf16.mxu0 0
    %1902 = vmatpush1.bf16.xpose.msra.mxu0 0
    %1903 = vmatprep.subr.bf16.mxu0 0
    %1904 = vmatpush1.bf16.xpose.msra.mxu0 %v1881
    %1905 = vmatprep.subr.bf16.mxu0 0
    %1906 = vmatpush2.bf16.xpose.msra.mxu0 0
    %1907 = vmatprep.subr.bf16.mxu0 0
    %1908 = vmatpush2.bf16.xpose.msra.mxu0 0
    %1909 = vmatprep.subr.bf16.mxu0 0
    %1910 = vmatpush2.bf16.xpose.msra.mxu0 0
    %1911 = vmatprep.subr.bf16.mxu0 0
    %1912 = vmatpush2.bf16.xpose.msra.mxu0 0
    %1913 = vmatprep.subr.bf16.mxu0 0
    %1914 = vmatpush2.bf16.xpose.msra.mxu0 0
    %1915 = vmatprep.subr.bf16.mxu0 0
    %1916 = vmatpush2.bf16.xpose.msra.mxu0 0
    %1917 = vmatprep.subr.bf16.mxu0 0
    %1918 = vmatpush2.bf16.xpose.msra.mxu0 0
    %1919 = vmatprep.subr.bf16.mxu0 0
    %1920 = vmatpush2.bf16.xpose.msra.mxu0 0
    %1921 = vmatprep.mubr.bf16.mxu0 0
    %1922 = vmatmul.mubr.bf16.gmra.mxu0 %v1877
    %v1923 = vpop.f32.mrf.mxu0
    %v1924 = vadd.f32 0.0, %v1923
    %v1925 = vpop.f32.mrf.mxu0
    %v1926 = vpop.f32.mrf.mxu0
    %v1927 = vpop.f32.mrf.mxu0
    %1928 = vdwg.mxu0
    %1929 = vmatprep.subr.bf16.mxu0 0
    %1930 = vmatpush1.bf16.xpose.msra.mxu0 0
    %1931 = vmatprep.subr.bf16.mxu0 0
    %1932 = vmatpush1.bf16.xpose.msra.mxu0 0
    %1933 = vmatprep.subr.bf16.mxu0 0
    %1934 = vmatpush1.bf16.xpose.msra.mxu0 0
    %1935 = vmatprep.subr.bf16.mxu0 0
    %1936 = vmatpush1.bf16.xpose.msra.mxu0 0
    %1937 = vmatprep.subr.bf16.mxu0 0
    %1938 = vmatpush1.bf16.xpose.msra.mxu0 0
    %1939 = vmatprep.subr.bf16.mxu0 0
    %1940 = vmatpush1.bf16.xpose.msra.mxu0 0
    %1941 = vmatprep.subr.bf16.mxu0 0
    %1942 = vmatpush1.bf16.xpose.msra.mxu0 0
    %1943 = vmatprep.subr.bf16.mxu0 0
    %1944 = vmatpush1.bf16.xpose.msra.mxu0 %v1882
    %1945 = vmatprep.subr.bf16.mxu0 0
    %1946 = vmatpush2.bf16.xpose.msra.mxu0 0
    %1947 = vmatprep.subr.bf16.mxu0 0
    %1948 = vmatpush2.bf16.xpose.msra.mxu0 0
    %1949 = vmatprep.subr.bf16.mxu0 0
    %1950 = vmatpush2.bf16.xpose.msra.mxu0 0
    %1951 = vmatprep.subr.bf16.mxu0 0
    %1952 = vmatpush2.bf16.xpose.msra.mxu0 0
    %1953 = vmatprep.subr.bf16.mxu0 0
    %1954 = vmatpush2.bf16.xpose.msra.mxu0 0
    %1955 = vmatprep.subr.bf16.mxu0 0
    %1956 = vmatpush2.bf16.xpose.msra.mxu0 0
    %1957 = vmatprep.subr.bf16.mxu0 0
    %1958 = vmatpush2.bf16.xpose.msra.mxu0 0
    %1959 = vmatprep.subr.bf16.mxu0 0
    %1960 = vmatpush2.bf16.xpose.msra.mxu0 0
    %1961 = vmatprep.mubr.bf16.mxu0 0
    %1962 = vmatmul.mubr.bf16.gmra.mxu0 %v1878
    %v1963 = vpop.f32.mrf.mxu0
    %v1964 = vadd.f32 0.0, %v1963
    %v1965 = vpop.f32.mrf.mxu0
    %v1966 = vpop.f32.mrf.mxu0
    %v1967 = vpop.f32.mrf.mxu0
    %1968 = vdwg.mxu0
    %1969 = vmatprep.subr.bf16.mxu0 0
    %1970 = vmatpush1.bf16.xpose.msra.mxu0 0
    %1971 = vmatprep.subr.bf16.mxu0 0
    %1972 = vmatpush1.bf16.xpose.msra.mxu0 0
    %1973 = vmatprep.subr.bf16.mxu0 0
    %1974 = vmatpush1.bf16.xpose.msra.mxu0 0
    %1975 = vmatprep.subr.bf16.mxu0 0
    %1976 = vmatpush1.bf16.xpose.msra.mxu0 0
    %1977 = vmatprep.subr.bf16.mxu0 0
    %1978 = vmatpush1.bf16.xpose.msra.mxu0 0
    %1979 = vmatprep.subr.bf16.mxu0 0
    %1980 = vmatpush1.bf16.xpose.msra.mxu0 0
    %1981 = vmatprep.subr.bf16.mxu0 0
    %1982 = vmatpush1.bf16.xpose.msra.mxu0 0
    %1983 = vmatprep.subr.bf16.mxu0 0
    %1984 = vmatpush1.bf16.xpose.msra.mxu0 %v1883
    %1985 = vmatprep.subr.bf16.mxu0 0
    %1986 = vmatpush2.bf16.xpose.msra.mxu0 0
    %1987 = vmatprep.subr.bf16.mxu0 0
    %1988 = vmatpush2.bf16.xpose.msra.mxu0 0
    %1989 = vmatprep.subr.bf16.mxu0 0
    %1990 = vmatpush2.bf16.xpose.msra.mxu0 0
    %1991 = vmatprep.subr.bf16.mxu0 0
    %1992 = vmatpush2.bf16.xpose.msra.mxu0 0
    %1993 = vmatprep.subr.bf16.mxu0 0
    %1994 = vmatpush2.bf16.xpose.msra.mxu0 0
    %1995 = vmatprep.subr.bf16.mxu0 0
    %1996 = vmatpush2.bf16.xpose.msra.mxu0 0
    %1997 = vmatprep.subr.bf16.mxu0 0
    %1998 = vmatpush2.bf16.xpose.msra.mxu0 0
    %1999 = vmatprep.subr.bf16.mxu0 0
    %2000 = vmatpush2.bf16.xpose.msra.mxu0 0
    %2001 = vmatprep.mubr.bf16.mxu0 0
    %2002 = vmatmul.mubr.bf16.gmra.mxu0 %v1879
    %v2003 = vpop.f32.mrf.mxu0
    %v2004 = vadd.f32 0.0, %v2003
    %v2005 = vpop.f32.mrf.mxu0
    %v2006 = vpop.f32.mrf.mxu0
    %v2007 = vpop.f32.mrf.mxu0
    %2008 = vdwg.mxu0
    %2009 = vmatprep.subr.bf16.mxu0 0
    %2010 = vmatpush1.bf16.xpose.msra.mxu0 0
    %2011 = vmatprep.subr.bf16.mxu0 0
    %2012 = vmatpush1.bf16.xpose.msra.mxu0 0
    %2013 = vmatprep.subr.bf16.mxu0 0
    %2014 = vmatpush1.bf16.xpose.msra.mxu0 0
    %2015 = vmatprep.subr.bf16.mxu0 0
    %2016 = vmatpush1.bf16.xpose.msra.mxu0 0
    %2017 = vmatprep.subr.bf16.mxu0 0
    %2018 = vmatpush1.bf16.xpose.msra.mxu0 0
    %2019 = vmatprep.subr.bf16.mxu0 0
    %2020 = vmatpush1.bf16.xpose.msra.mxu0 0
    %2021 = vmatprep.subr.bf16.mxu0 0
    %2022 = vmatpush1.bf16.xpose.msra.mxu0 0
    %2023 = vmatprep.subr.bf16.mxu0 0
    %2024 = vmatpush1.bf16.xpose.msra.mxu0 %v1884
    %2025 = vmatprep.subr.bf16.mxu0 0
    %2026 = vmatpush2.bf16.xpose.msra.mxu0 0
    %2027 = vmatprep.subr.bf16.mxu0 0
    %2028 = vmatpush2.bf16.xpose.msra.mxu0 0
    %2029 = vmatprep.subr.bf16.mxu0 0
    %2030 = vmatpush2.bf16.xpose.msra.mxu0 0
    %2031 = vmatprep.subr.bf16.mxu0 0
    %2032 = vmatpush2.bf16.xpose.msra.mxu0 0
    %2033 = vmatprep.subr.bf16.mxu0 0
    %2034 = vmatpush2.bf16.xpose.msra.mxu0 0
    %2035 = vmatprep.subr.bf16.mxu0 0
    %2036 = vmatpush2.bf16.xpose.msra.mxu0 0
    %2037 = vmatprep.subr.bf16.mxu0 0
    %2038 = vmatpush2.bf16.xpose.msra.mxu0 0
    %2039 = vmatprep.subr.bf16.mxu0 0
    %2040 = vmatpush2.bf16.xpose.msra.mxu0 0
    %2041 = vmatprep.mubr.bf16.mxu0 0
    %2042 = vmatmul.mubr.bf16.gmra.mxu0 %v1880
    %v2043 = vpop.f32.mrf.mxu0
    %v2044 = vadd.f32 0.0, %v2043
    %v2045 = vpop.f32.mrf.mxu0
    %v2046 = vpop.f32.mrf.mxu0
    %v2047 = vpop.f32.mrf.mxu0
    %2048 = vdwg.mxu0
    %v2049 = vsel %vm1284, %v1924, -inf
    %2050 = vmax.xlane.f32.xlu0 %v2049
    %v2051 = vpop.xlane.xlu0 %2050
    %v2052 = vsel %vm1284, %v1964, -inf
    %2053 = vmax.xlane.f32.xlu0 %v2052
    %v2054 = vpop.xlane.xlu0 %2053
    %v2055 = vsel %vm1284, %v2004, -inf
    %2056 = vmax.xlane.f32.xlu0 %v2055
    %v2057 = vpop.xlane.xlu0 %2056
    %v2058 = vsel %vm1284, %v2044, -inf
    %2059 = vmax.xlane.f32.xlu0 %v2058
    %v2060 = vpop.xlane.xlu0 %2059
    %v2061 = vsub.f32 %v1924, %v2051
    %v2062 = vsub.f32 %v1964, %v2054
    %v2063 = vsub.f32 %v2004, %v2057
    %v2064 = vsub.f32 %v2044, %v2060
    %v2065 = vmul.f32 %v2061, 1.442695
    %v2066 = vpow.pop %v2065
    %v2067 = vmul.f32 %v2062, 1.442695
    %v2068 = vpow.pop %v2067
    %v2069 = vmul.f32 %v2063, 1.442695
    %v2070 = vpow.pop %v2069
    %v2071 = vmul.f32 %v2064, 1.442695
    %v2072 = vpow.pop %v2071
    %v2073 = vsel %vm1284, %v2066, 0.0
    %2074 = vadd.xlane.f32.xlu0 %v2073
    %v2075 = vpop.xlane.xlu0 %2074
    %v2076 = vsel %vm1284, %v2068, 0.0
    %2077 = vadd.xlane.f32.xlu0 %v2076
    %v2078 = vpop.xlane.xlu0 %2077
    %v2079 = vsel %vm1284, %v2070, 0.0
    %2080 = vadd.xlane.f32.xlu0 %v2079
    %v2081 = vpop.xlane.xlu0 %2080
    %v2082 = vsel %vm1284, %v2072, 0.0
    %2083 = vadd.xlane.f32.xlu0 %v2082
    %v2084 = vpop.xlane.xlu0 %2083
    %v2085 = vrcp.pop %v2075
    %v2086 = vrcp.pop %v2078
    %v2087 = vrcp.pop %v2081
    %v2088 = vrcp.pop %v2084
    %v2089 = vmul.f32 %v2066, %v2085
    %v2090 = vmul.f32 %v2068, %v2086
    %v2091 = vmul.f32 %v2070, %v2087
    %v2092 = vmul.f32 %v2072, %v2088
    %v2093 = vpack.c.bf16 %v2089, %v2089
    %v2094 = vpack.c.bf16 %v2090, %v2090
    %v2095 = vpack.c.bf16 %v2091, %v2091
    %v2096 = vpack.c.bf16 %v2092, %v2092
    %v2098 = vsel %vm1284, %v2093, 0
    %v2101 = vsel %vm1336, %v1885, 0
    %2103 = vmatprep.subr.bf16.mxu0 0
    %2104 = vmatpush1.bf16.msra.mxu0 0
    %2105 = vmatprep.subr.bf16.mxu0 0
    %2106 = vmatpush1.bf16.msra.mxu0 0
    %2107 = vmatprep.subr.bf16.mxu0 0
    %2108 = vmatpush1.bf16.msra.mxu0 0
    %2109 = vmatprep.subr.bf16.mxu0 0
    %2110 = vmatpush1.bf16.msra.mxu0 0
    %2111 = vmatprep.subr.bf16.mxu0 0
    %2112 = vmatpush1.bf16.msra.mxu0 0
    %2113 = vmatprep.subr.bf16.mxu0 0
    %2114 = vmatpush1.bf16.msra.mxu0 0
    %2115 = vmatprep.subr.bf16.mxu0 0
    %2116 = vmatpush1.bf16.msra.mxu0 0
    %2117 = vmatprep.subr.bf16.mxu0 0
    %2118 = vmatpush1.bf16.msra.mxu0 %v2101
    %2119 = vmatprep.subr.bf16.mxu0 0
    %2120 = vmatpush2.bf16.msra.mxu0 0
    %2121 = vmatprep.subr.bf16.mxu0 0
    %2122 = vmatpush2.bf16.msra.mxu0 0
    %2123 = vmatprep.subr.bf16.mxu0 0
    %2124 = vmatpush2.bf16.msra.mxu0 0
    %2125 = vmatprep.subr.bf16.mxu0 0
    %2126 = vmatpush2.bf16.msra.mxu0 0
    %2127 = vmatprep.subr.bf16.mxu0 0
    %2128 = vmatpush2.bf16.msra.mxu0 0
    %2129 = vmatprep.subr.bf16.mxu0 0
    %2130 = vmatpush2.bf16.msra.mxu0 0
    %2131 = vmatprep.subr.bf16.mxu0 0
    %2132 = vmatpush2.bf16.msra.mxu0 0
    %2133 = vmatprep.subr.bf16.mxu0 0
    %2134 = vmatpush2.bf16.msra.mxu0 0
    %2135 = vmatprep.mubr.bf16.mxu0 0
    %2136 = vmatmul.mubr.bf16.gmra.mxu0 %v2098
    %v2137 = vpop.f32.mrf.mxu0
    %v2138 = vadd.f32 0.0, %v2137
    %v2139 = vpop.f32.mrf.mxu0
    %v2140 = vpop.f32.mrf.mxu0
    %v2141 = vpop.f32.mrf.mxu0
    %2142 = vdwg.mxu0
    %v2144 = vsel %vm1284, %v2094, 0
    %v2147 = vsel %vm1336, %v1886, 0
    %2149 = vmatprep.subr.bf16.mxu0 0
    %2150 = vmatpush1.bf16.msra.mxu0 0
    %2151 = vmatprep.subr.bf16.mxu0 0
    %2152 = vmatpush1.bf16.msra.mxu0 0
    %2153 = vmatprep.subr.bf16.mxu0 0
    %2154 = vmatpush1.bf16.msra.mxu0 0
    %2155 = vmatprep.subr.bf16.mxu0 0
    %2156 = vmatpush1.bf16.msra.mxu0 0
    %2157 = vmatprep.subr.bf16.mxu0 0
    %2158 = vmatpush1.bf16.msra.mxu0 0
    %2159 = vmatprep.subr.bf16.mxu0 0
    %2160 = vmatpush1.bf16.msra.mxu0 0
    %2161 = vmatprep.subr.bf16.mxu0 0
    %2162 = vmatpush1.bf16.msra.mxu0 0
    %2163 = vmatprep.subr.bf16.mxu0 0
    %2164 = vmatpush1.bf16.msra.mxu0 %v2147
    %2165 = vmatprep.subr.bf16.mxu0 0
    %2166 = vmatpush2.bf16.msra.mxu0 0
    %2167 = vmatprep.subr.bf16.mxu0 0
    %2168 = vmatpush2.bf16.msra.mxu0 0
    %2169 = vmatprep.subr.bf16.mxu0 0
    %2170 = vmatpush2.bf16.msra.mxu0 0
    %2171 = vmatprep.subr.bf16.mxu0 0
    %2172 = vmatpush2.bf16.msra.mxu0 0
    %2173 = vmatprep.subr.bf16.mxu0 0
    %2174 = vmatpush2.bf16.msra.mxu0 0
    %2175 = vmatprep.subr.bf16.mxu0 0
    %2176 = vmatpush2.bf16.msra.mxu0 0
    %2177 = vmatprep.subr.bf16.mxu0 0
    %2178 = vmatpush2.bf16.msra.mxu0 0
    %2179 = vmatprep.subr.bf16.mxu0 0
    %2180 = vmatpush2.bf16.msra.mxu0 0
    %2181 = vmatprep.mubr.bf16.mxu0 0
    %2182 = vmatmul.mubr.bf16.gmra.mxu0 %v2144
    %v2183 = vpop.f32.mrf.mxu0
    %v2184 = vadd.f32 0.0, %v2183
    %v2185 = vpop.f32.mrf.mxu0
    %v2186 = vpop.f32.mrf.mxu0
    %v2187 = vpop.f32.mrf.mxu0
    %2188 = vdwg.mxu0
    %v2190 = vsel %vm1284, %v2095, 0
    %v2193 = vsel %vm1336, %v1887, 0
    %2195 = vmatprep.subr.bf16.mxu0 0
    %2196 = vmatpush1.bf16.msra.mxu0 0
    %2197 = vmatprep.subr.bf16.mxu0 0
    %2198 = vmatpush1.bf16.msra.mxu0 0
    %2199 = vmatprep.subr.bf16.mxu0 0
    %2200 = vmatpush1.bf16.msra.mxu0 0
    %2201 = vmatprep.subr.bf16.mxu0 0
    %2202 = vmatpush1.bf16.msra.mxu0 0
    %2203 = vmatprep.subr.bf16.mxu0 0
    %2204 = vmatpush1.bf16.msra.mxu0 0
    %2205 = vmatprep.subr.bf16.mxu0 0
    %2206 = vmatpush1.bf16.msra.mxu0 0
    %2207 = vmatprep.subr.bf16.mxu0 0
    %2208 = vmatpush1.bf16.msra.mxu0 0
    %2209 = vmatprep.subr.bf16.mxu0 0
    %2210 = vmatpush1.bf16.msra.mxu0 %v2193
    %2211 = vmatprep.subr.bf16.mxu0 0
    %2212 = vmatpush2.bf16.msra.mxu0 0
    %2213 = vmatprep.subr.bf16.mxu0 0
    %2214 = vmatpush2.bf16.msra.mxu0 0
    %2215 = vmatprep.subr.bf16.mxu0 0
    %2216 = vmatpush2.bf16.msra.mxu0 0
    %2217 = vmatprep.subr.bf16.mxu0 0
    %2218 = vmatpush2.bf16.msra.mxu0 0
    %2219 = vmatprep.subr.bf16.mxu0 0
    %2220 = vmatpush2.bf16.msra.mxu0 0
    %2221 = vmatprep.subr.bf16.mxu0 0
    %2222 = vmatpush2.bf16.msra.mxu0 0
    %2223 = vmatprep.subr.bf16.mxu0 0
    %2224 = vmatpush2.bf16.msra.mxu0 0
    %2225 = vmatprep.subr.bf16.mxu0 0
    %2226 = vmatpush2.bf16.msra.mxu0 0
    %2227 = vmatprep.mubr.bf16.mxu0 0
    %2228 = vmatmul.mubr.bf16.gmra.mxu0 %v2190
    %v2229 = vpop.f32.mrf.mxu0
    %v2230 = vadd.f32 0.0, %v2229
    %v2231 = vpop.f32.mrf.mxu0
    %v2232 = vpop.f32.mrf.mxu0
    %v2233 = vpop.f32.mrf.mxu0
    %2234 = vdwg.mxu0
    %v2236 = vsel %vm1284, %v2096, 0
    %v2239 = vsel %vm1336, %v1888, 0
    %2241 = vmatprep.subr.bf16.mxu0 0
    %2242 = vmatpush1.bf16.msra.mxu0 0
    %2243 = vmatprep.subr.bf16.mxu0 0
    %2244 = vmatpush1.bf16.msra.mxu0 0
    %2245 = vmatprep.subr.bf16.mxu0 0
    %2246 = vmatpush1.bf16.msra.mxu0 0
    %2247 = vmatprep.subr.bf16.mxu0 0
    %2248 = vmatpush1.bf16.msra.mxu0 0
    %2249 = vmatprep.subr.bf16.mxu0 0
    %2250 = vmatpush1.bf16.msra.mxu0 0
    %2251 = vmatprep.subr.bf16.mxu0 0
    %2252 = vmatpush1.bf16.msra.mxu0 0
    %2253 = vmatprep.subr.bf16.mxu0 0
    %2254 = vmatpush1.bf16.msra.mxu0 0
    %2255 = vmatprep.subr.bf16.mxu0 0
    %2256 = vmatpush1.bf16.msra.mxu0 %v2239
    %2257 = vmatprep.subr.bf16.mxu0 0
    %2258 = vmatpush2.bf16.msra.mxu0 0
    %2259 = vmatprep.subr.bf16.mxu0 0
    %2260 = vmatpush2.bf16.msra.mxu0 0
    %2261 = vmatprep.subr.bf16.mxu0 0
    %2262 = vmatpush2.bf16.msra.mxu0 0
    %2263 = vmatprep.subr.bf16.mxu0 0
    %2264 = vmatpush2.bf16.msra.mxu0 0
    %2265 = vmatprep.subr.bf16.mxu0 0
    %2266 = vmatpush2.bf16.msra.mxu0 0
    %2267 = vmatprep.subr.bf16.mxu0 0
    %2268 = vmatpush2.bf16.msra.mxu0 0
    %2269 = vmatprep.subr.bf16.mxu0 0
    %2270 = vmatpush2.bf16.msra.mxu0 0
    %2271 = vmatprep.subr.bf16.mxu0 0
    %2272 = vmatpush2.bf16.msra.mxu0 0
    %2273 = vmatprep.mubr.bf16.mxu0 0
    %2274 = vmatmul.mubr.bf16.gmra.mxu0 %v2236
    %v2275 = vpop.f32.mrf.mxu0
    %v2276 = vadd.f32 0.0, %v2275
    %v2277 = vpop.f32.mrf.mxu0
    %v2278 = vpop.f32.mrf.mxu0
    %v2279 = vpop.f32.mrf.mxu0
    %2280 = vdwg.mxu0
    %v2281 = vpack.c.bf16 %v2138, %v2138
    %v2282 = vpack.c.bf16 %v2184, %v2184
    %v2283 = vpack.c.bf16 %v2230, %v2230
    %v2284 = vpack.c.bf16 %v2276, %v2276
    %2285 = vmatprep.subr.bf16.mxu0 0
    %2286 = vmatpush1.bf16.msra.mxu0 %v1561
    %2287 = vmatprep.subr.bf16.mxu0 0
    %2288 = vmatpush1.bf16.msra.mxu0 %v1560
    %2289 = vmatprep.subr.bf16.mxu0 0
    %2290 = vmatpush1.bf16.msra.mxu0 %v1559
    %2291 = vmatprep.subr.bf16.mxu0 0
    %2292 = vmatpush1.bf16.msra.mxu0 %v1558
    %2293 = vmatprep.subr.bf16.mxu0 0
    %2294 = vmatpush1.bf16.msra.mxu0 %v1557
    %2295 = vmatprep.subr.bf16.mxu0 0
    %2296 = vmatpush1.bf16.msra.mxu0 %v1556
    %2297 = vmatprep.subr.bf16.mxu0 0
    %2298 = vmatpush1.bf16.msra.mxu0 %v1555
    %2299 = vmatprep.subr.bf16.mxu0 0
    %2300 = vmatpush1.bf16.msra.mxu0 %v1554
    %2301 = vmatprep.subr.bf16.mxu0 0
    %2302 = vmatpush2.bf16.msra.mxu0 0
    %2303 = vmatprep.subr.bf16.mxu0 0
    %2304 = vmatpush2.bf16.msra.mxu0 0
    %2305 = vmatprep.subr.bf16.mxu0 0
    %2306 = vmatpush2.bf16.msra.mxu0 0
    %2307 = vmatprep.subr.bf16.mxu0 0
    %2308 = vmatpush2.bf16.msra.mxu0 0
    %2309 = vmatprep.subr.bf16.mxu0 0
    %2310 = vmatpush2.bf16.msra.mxu0 0
    %2311 = vmatprep.subr.bf16.mxu0 0
    %2312 = vmatpush2.bf16.msra.mxu0 0
    %2313 = vmatprep.subr.bf16.mxu0 0
    %2314 = vmatpush2.bf16.msra.mxu0 0
    %2315 = vmatprep.subr.bf16.mxu0 0
    %2316 = vmatpush2.bf16.msra.mxu0 0
    %2317 = vmatprep.mubr.bf16.mxu0 0
    %2318 = vmatmul.mubr.bf16.gmra.mxu0 %v2281
    %v2319 = vpop.f32.mrf.mxu0
    %v2320 = vadd.f32 0.0, %v2319
    %v2321 = vpop.f32.mrf.mxu0
    %v2322 = vpop.f32.mrf.mxu0
    %v2323 = vpop.f32.mrf.mxu0
    %2324 = vdwg.mxu0
    %2325 = vmatprep.subr.bf16.mxu0 0
    %2326 = vmatpush1.bf16.msra.mxu0 %v1649
    %2327 = vmatprep.subr.bf16.mxu0 0
    %2328 = vmatpush1.bf16.msra.mxu0 %v1648
    %2329 = vmatprep.subr.bf16.mxu0 0
    %2330 = vmatpush1.bf16.msra.mxu0 %v1647
    %2331 = vmatprep.subr.bf16.mxu0 0
    %2332 = vmatpush1.bf16.msra.mxu0 %v1646
    %2333 = vmatprep.subr.bf16.mxu0 0
    %2334 = vmatpush1.bf16.msra.mxu0 %v1645
    %2335 = vmatprep.subr.bf16.mxu0 0
    %2336 = vmatpush1.bf16.msra.mxu0 %v1644
    %2337 = vmatprep.subr.bf16.mxu0 0
    %2338 = vmatpush1.bf16.msra.mxu0 %v1643
    %2339 = vmatprep.subr.bf16.mxu0 0
    %2340 = vmatpush1.bf16.msra.mxu0 %v1642
    %2341 = vmatprep.subr.bf16.mxu0 0
    %2342 = vmatpush2.bf16.msra.mxu0 0
    %2343 = vmatprep.subr.bf16.mxu0 0
    %2344 = vmatpush2.bf16.msra.mxu0 0
    %2345 = vmatprep.subr.bf16.mxu0 0
    %2346 = vmatpush2.bf16.msra.mxu0 0
    %2347 = vmatprep.subr.bf16.mxu0 0
    %2348 = vmatpush2.bf16.msra.mxu0 0
    %2349 = vmatprep.subr.bf16.mxu0 0
    %2350 = vmatpush2.bf16.msra.mxu0 0
    %2351 = vmatprep.subr.bf16.mxu0 0
    %2352 = vmatpush2.bf16.msra.mxu0 0
    %2353 = vmatprep.subr.bf16.mxu0 0
    %2354 = vmatpush2.bf16.msra.mxu0 0
    %2355 = vmatprep.subr.bf16.mxu0 0
    %2356 = vmatpush2.bf16.msra.mxu0 0
    %2357 = vmatprep.mubr.bf16.mxu0 0
    %2358 = vmatmul.mubr.bf16.gmra.mxu0 %v2282
    %v2359 = vpop.f32.mrf.mxu0
    %v2360 = vadd.f32 0.0, %v2359
    %v2361 = vpop.f32.mrf.mxu0
    %v2362 = vpop.f32.mrf.mxu0
    %v2363 = vpop.f32.mrf.mxu0
    %2364 = vdwg.mxu0
    %2365 = vmatprep.subr.bf16.mxu0 0
    %2366 = vmatpush1.bf16.msra.mxu0 %v1737
    %2367 = vmatprep.subr.bf16.mxu0 0
    %2368 = vmatpush1.bf16.msra.mxu0 %v1736
    %2369 = vmatprep.subr.bf16.mxu0 0
    %2370 = vmatpush1.bf16.msra.mxu0 %v1735
    %2371 = vmatprep.subr.bf16.mxu0 0
    %2372 = vmatpush1.bf16.msra.mxu0 %v1734
    %2373 = vmatprep.subr.bf16.mxu0 0
    %2374 = vmatpush1.bf16.msra.mxu0 %v1733
    %2375 = vmatprep.subr.bf16.mxu0 0
    %2376 = vmatpush1.bf16.msra.mxu0 %v1732
    %2377 = vmatprep.subr.bf16.mxu0 0
    %2378 = vmatpush1.bf16.msra.mxu0 %v1731
    %2379 = vmatprep.subr.bf16.mxu0 0
    %2380 = vmatpush1.bf16.msra.mxu0 %v1730
    %2381 = vmatprep.subr.bf16.mxu0 0
    %2382 = vmatpush2.bf16.msra.mxu0 0
    %2383 = vmatprep.subr.bf16.mxu0 0
    %2384 = vmatpush2.bf16.msra.mxu0 0
    %2385 = vmatprep.subr.bf16.mxu0 0
    %2386 = vmatpush2.bf16.msra.mxu0 0
    %2387 = vmatprep.subr.bf16.mxu0 0
    %2388 = vmatpush2.bf16.msra.mxu0 0
    %2389 = vmatprep.subr.bf16.mxu0 0
    %2390 = vmatpush2.bf16.msra.mxu0 0
    %2391 = vmatprep.subr.bf16.mxu0 0
    %2392 = vmatpush2.bf16.msra.mxu0 0
    %2393 = vmatprep.subr.bf16.mxu0 0
    %2394 = vmatpush2.bf16.msra.mxu0 0
    %2395 = vmatprep.subr.bf16.mxu0 0
    %2396 = vmatpush2.bf16.msra.mxu0 0
    %2397 = vmatprep.mubr.bf16.mxu0 0
    %2398 = vmatmul.mubr.bf16.gmra.mxu0 %v2283
    %v2399 = vpop.f32.mrf.mxu0
    %v2400 = vadd.f32 0.0, %v2399
    %v2401 = vpop.f32.mrf.mxu0
    %v2402 = vpop.f32.mrf.mxu0
    %v2403 = vpop.f32.mrf.mxu0
    %2404 = vdwg.mxu0
    %2405 = vmatprep.subr.bf16.mxu0 0
    %2406 = vmatpush1.bf16.msra.mxu0 %v1825
    %2407 = vmatprep.subr.bf16.mxu0 0
    %2408 = vmatpush1.bf16.msra.mxu0 %v1824
    %2409 = vmatprep.subr.bf16.mxu0 0
    %2410 = vmatpush1.bf16.msra.mxu0 %v1823
    %2411 = vmatprep.subr.bf16.mxu0 0
    %2412 = vmatpush1.bf16.msra.mxu0 %v1822
    %2413 = vmatprep.subr.bf16.mxu0 0
    %2414 = vmatpush1.bf16.msra.mxu0 %v1821
    %2415 = vmatprep.subr.bf16.mxu0 0
    %2416 = vmatpush1.bf16.msra.mxu0 %v1820
    %2417 = vmatprep.subr.bf16.mxu0 0
    %2418 = vmatpush1.bf16.msra.mxu0 %v1819
    %2419 = vmatprep.subr.bf16.mxu0 0
    %2420 = vmatpush1.bf16.msra.mxu0 %v1818
    %2421 = vmatprep.subr.bf16.mxu0 0
    %2422 = vmatpush2.bf16.msra.mxu0 0
    %2423 = vmatprep.subr.bf16.mxu0 0
    %2424 = vmatpush2.bf16.msra.mxu0 0
    %2425 = vmatprep.subr.bf16.mxu0 0
    %2426 = vmatpush2.bf16.msra.mxu0 0
    %2427 = vmatprep.subr.bf16.mxu0 0
    %2428 = vmatpush2.bf16.msra.mxu0 0
    %2429 = vmatprep.subr.bf16.mxu0 0
    %2430 = vmatpush2.bf16.msra.mxu0 0
    %2431 = vmatprep.subr.bf16.mxu0 0
    %2432 = vmatpush2.bf16.msra.mxu0 0
    %2433 = vmatprep.subr.bf16.mxu0 0
    %2434 = vmatpush2.bf16.msra.mxu0 0
    %2435 = vmatprep.subr.bf16.mxu0 0
    %2436 = vmatpush2.bf16.msra.mxu0 0
    %2437 = vmatprep.mubr.bf16.mxu0 0
    %2438 = vmatmul.mubr.bf16.gmra.mxu0 %v2284
    %v2439 = vpop.f32.mrf.mxu0
    %v2440 = vadd.f32 0.0, %v2439
    %v2441 = vpop.f32.mrf.mxu0
    %v2442 = vpop.f32.mrf.mxu0
    %v2443 = vpop.f32.mrf.mxu0
    %2444 = vdwg.mxu0
    %v2445 = vadd.f32 %v2320, %v2360
    %v2446 = vadd.f32 %v2445, %v2400
    %v2447 = vadd.f32 %v2446, %v2440
    %v2448 = vadd.f32 %v119, %v1876
    %v2449 = vadd.f32 %v120, %v2447
    %2450 = vadd.xlane.f32.xlu0 %v2448
    %v2451 = vpop.xlane.xlu0 %2450
    %2452 = vadd.xlane.f32.xlu0 %v2449
    %v2453 = vpop.xlane.xlu0 %2452
    %v2454 = vmul.f32 %v2451, 0.03125
    %v2455 = vmul.f32 %v2453, 0.03125
    %v2456 = vsub.f32 %v2448, %v2454
    %v2457 = vsub.f32 %v2449, %v2455
    %v2458 = vmul.f32 %v2456, %v118
    %v2459 = vmul.f32 %v2457, %v118
    %v2460 = vmul.f32 %v2458, %v2458
    %v2461 = vmul.f32 %v2459, %v2459
    %2462 = vadd.xlane.f32.xlu0 %v2460
    %v2463 = vpop.xlane.xlu0 %2462
    %2464 = vadd.xlane.f32.xlu0 %v2461
    %v2465 = vpop.xlane.xlu0 %2464
    %v2466 = vmul.f32 %v2463, 0.032258064
    %v2467 = vmul.f32 %v2465, 0.032258064
    %v2469 = vlaneseq
    %v2470 = vshrl.u32 %v2469, 7
    %v2471 = vsub.s32 0, %v2470
    %v2472 = vrot.slane %v123, %v2471
    %v2474 = vmul.f32 %v2472, %v2458
    %v2475 = vmul.f32 %v2472, %v2459
    %v2476 = vrsqrt.pop %v2466
    %v2477 = vmul.f32 %v2466, %v2476
    %vm2478 = vcmp.eq.f32.partialorder %v2466, inf
    %v2479 = vsel %vm2478, %v2466, %v2477
    %vm2480 = vcmp.eq.f32.partialorder %v2466, 0.0
    %v2481 = vand.u32 %v2466, 2147483648
    %v2482 = vsel %vm2480, %v2481, %v2479
    %v2483 = vrsqrt.pop %v2467
    %v2484 = vmul.f32 %v2467, %v2483
    %vm2485 = vcmp.eq.f32.partialorder %v2467, inf
    %v2486 = vsel %vm2485, %v2467, %v2484
    %vm2487 = vcmp.eq.f32.partialorder %v2467, 0.0
    %v2488 = vand.u32 %v2467, 2147483648
    %v2489 = vsel %vm2487, %v2488, %v2486
    %v2490 = vadd.f32 %v2482, 1e-06
    %v2491 = vadd.f32 %v2489, 1e-06
    %v2492 = vrcp.pop %v2490
    %v2493 = vmul.f32 %v2474, %v2492
    %v2494 = vrcp.pop %v2491
    %v2495 = vmul.f32 %v2475, %v2494
    %v2497 = vlaneseq
    %v2498 = vshrl.u32 %v2497, 7
    %v2499 = vsub.s32 0, %v2498
    %v2500 = vrot.slane %v124, %v2499
    %v2502 = vadd.f32 %v2493, %v2500
    %v2503 = vadd.f32 %v2495, %v2500
    %v2504 = vpack.c.bf16 %v2503, %v2502
    %v2506 = vlaneseq
    %v2507 = vshrl.u32 %v2506, 7
    %v2508 = vsub.s32 0, %v2507
    %v2509 = vrot.slane %v301, %v2508
    %v2527 = vunpack.c.l.b16 %v285
    %v2528 = vunpack.c.l.b16 %v286
    %v2529 = vunpack.c.l.b16 %v287
    %v2530 = vunpack.c.l.b16 %v288
    %v2531 = vunpack.c.l.b16 %v289
    %v2532 = vunpack.c.l.b16 %v290
    %v2533 = vunpack.c.l.b16 %v291
    %v2534 = vunpack.c.l.b16 %v292
    %v2535 = vunpack.c.l.b16 %v293
    %v2536 = vunpack.c.l.b16 %v294
    %v2537 = vunpack.c.l.b16 %v295
    %v2538 = vunpack.c.l.b16 %v296
    %v2539 = vunpack.c.l.b16 %v297
    %v2540 = vunpack.c.l.b16 %v298
    %v2541 = vunpack.c.l.b16 %v299
    %v2542 = vunpack.c.l.b16 %v300
    %v2543 = vpack.c.b16 %v2528, %v2527
    %v2544 = vpack.c.b16 %v2530, %v2529
    %v2545 = vpack.c.b16 %v2532, %v2531
    %v2546 = vpack.c.b16 %v2534, %v2533
    %v2547 = vpack.c.b16 %v2536, %v2535
    %v2548 = vpack.c.b16 %v2538, %v2537
    %v2549 = vpack.c.b16 %v2540, %v2539
    %v2550 = vpack.c.b16 %v2542, %v2541
    %2559 = vmatprep.subr.bf16.mxu0 0
    %2560 = vmatpush1.bf16.msra.mxu0 %v2550
    %2561 = vmatprep.subr.bf16.mxu0 0
    %2562 = vmatpush1.bf16.msra.mxu0 %v2549
    %2563 = vmatprep.subr.bf16.mxu0 0
    %2564 = vmatpush1.bf16.msra.mxu0 %v2548
    %2565 = vmatprep.subr.bf16.mxu0 0
    %2566 = vmatpush1.bf16.msra.mxu0 %v2547
    %2567 = vmatprep.subr.bf16.mxu0 0
    %2568 = vmatpush1.bf16.msra.mxu0 %v2546
    %2569 = vmatprep.subr.bf16.mxu0 0
    %2570 = vmatpush1.bf16.msra.mxu0 %v2545
    %2571 = vmatprep.subr.bf16.mxu0 0
    %2572 = vmatpush1.bf16.msra.mxu0 %v2544
    %2573 = vmatprep.subr.bf16.mxu0 0
    %2574 = vmatpush1.bf16.msra.mxu0 %v2543
    %2575 = vmatprep.subr.bf16.mxu0 0
    %2576 = vmatpush2.bf16.msra.mxu0 0
    %2577 = vmatprep.subr.bf16.mxu0 0
    %2578 = vmatpush2.bf16.msra.mxu0 0
    %2579 = vmatprep.subr.bf16.mxu0 0
    %2580 = vmatpush2.bf16.msra.mxu0 0
    %2581 = vmatprep.subr.bf16.mxu0 0
    %2582 = vmatpush2.bf16.msra.mxu0 0
    %2583 = vmatprep.subr.bf16.mxu0 0
    %2584 = vmatpush2.bf16.msra.mxu0 0
    %2585 = vmatprep.subr.bf16.mxu0 0
    %2586 = vmatpush2.bf16.msra.mxu0 0
    %2587 = vmatprep.subr.bf16.mxu0 0
    %2588 = vmatpush2.bf16.msra.mxu0 0
    %2589 = vmatprep.subr.bf16.mxu0 0
    %2590 = vmatpush2.bf16.msra.mxu0 0
    %2591 = vmatprep.mubr.bf16.mxu0 0
    %2592 = vmatmul.mubr.bf16.gmra.mxu0 %v2504
    %v2593 = vpop.f32.mrf.mxu0
    %v2594 = vadd.f32 %v2509, %v2593
    %v2595 = vpop.f32.mrf.mxu0
    %v2596 = vpop.f32.mrf.mxu0
    %v2597 = vadd.f32 %v2509, %v2596
    %v2598 = vpop.f32.mrf.mxu0
    %2599 = vdwg.mxu0
    %v2600 = vmax.f32 %v2594, 0.0
    %v2601 = vmax.f32 %v2597, 0.0
    %v2602 = vpack.c.bf16 %v2601, %v2600
    %v2604 = vlaneseq
    %v2605 = vshrl.u32 %v2604, 7
    %v2606 = vsub.s32 0, %v2605
    %v2607 = vrot.slane %v318, %v2606
    %v2625 = vunpack.c.l.b16 %v302
    %v2626 = vunpack.c.l.b16 %v303
    %v2627 = vunpack.c.l.b16 %v304
    %v2628 = vunpack.c.l.b16 %v305
    %v2629 = vunpack.c.l.b16 %v306
    %v2630 = vunpack.c.l.b16 %v307
    %v2631 = vunpack.c.l.b16 %v308
    %v2632 = vunpack.c.l.b16 %v309
    %v2633 = vunpack.c.l.b16 %v310
    %v2634 = vunpack.c.l.b16 %v311
    %v2635 = vunpack.c.l.b16 %v312
    %v2636 = vunpack.c.l.b16 %v313
    %v2637 = vunpack.c.l.b16 %v314
    %v2638 = vunpack.c.l.b16 %v315
    %v2639 = vunpack.c.l.b16 %v316
    %v2640 = vunpack.c.l.b16 %v317
    %v2641 = vpack.c.b16 %v2626, %v2625
    %v2642 = vpack.c.b16 %v2628, %v2627
    %v2643 = vpack.c.b16 %v2630, %v2629
    %v2644 = vpack.c.b16 %v2632, %v2631
    %v2645 = vpack.c.b16 %v2634, %v2633
    %v2646 = vpack.c.b16 %v2636, %v2635
    %v2647 = vpack.c.b16 %v2638, %v2637
    %v2648 = vpack.c.b16 %v2640, %v2639
    %2657 = vmatprep.subr.bf16.mxu0 0
    %2658 = vmatpush1.bf16.msra.mxu0 %v2648
    %2659 = vmatprep.subr.bf16.mxu0 0
    %2660 = vmatpush1.bf16.msra.mxu0 %v2647
    %2661 = vmatprep.subr.bf16.mxu0 0
    %2662 = vmatpush1.bf16.msra.mxu0 %v2646
    %2663 = vmatprep.subr.bf16.mxu0 0
    %2664 = vmatpush1.bf16.msra.mxu0 %v2645
    %2665 = vmatprep.subr.bf16.mxu0 0
    %2666 = vmatpush1.bf16.msra.mxu0 %v2644
    %2667 = vmatprep.subr.bf16.mxu0 0
    %2668 = vmatpush1.bf16.msra.mxu0 %v2643
    %2669 = vmatprep.subr.bf16.mxu0 0
    %2670 = vmatpush1.bf16.msra.mxu0 %v2642
    %2671 = vmatprep.subr.bf16.mxu0 0
    %2672 = vmatpush1.bf16.msra.mxu0 %v2641
    %2673 = vmatprep.subr.bf16.mxu0 0
    %2674 = vmatpush2.bf16.msra.mxu0 0
    %2675 = vmatprep.subr.bf16.mxu0 0
    %2676 = vmatpush2.bf16.msra.mxu0 0
    %2677 = vmatprep.subr.bf16.mxu0 0
    %2678 = vmatpush2.bf16.msra.mxu0 0
    %2679 = vmatprep.subr.bf16.mxu0 0
    %2680 = vmatpush2.bf16.msra.mxu0 0
    %2681 = vmatprep.subr.bf16.mxu0 0
    %2682 = vmatpush2.bf16.msra.mxu0 0
    %2683 = vmatprep.subr.bf16.mxu0 0
    %2684 = vmatpush2.bf16.msra.mxu0 0
    %2685 = vmatprep.subr.bf16.mxu0 0
    %2686 = vmatpush2.bf16.msra.mxu0 0
    %2687 = vmatprep.subr.bf16.mxu0 0
    %2688 = vmatpush2.bf16.msra.mxu0 0
    %2689 = vmatprep.mubr.bf16.mxu0 0
    %2690 = vmatmul.mubr.bf16.gmra.mxu0 %v2602
    %v2691 = vpop.f32.mrf.mxu0
    %v2692 = vadd.f32 %v2607, %v2691
    %v2693 = vpop.f32.mrf.mxu0
    %v2694 = vpop.f32.mrf.mxu0
    %v2695 = vadd.f32 %v2607, %v2694
    %v2696 = vpop.f32.mrf.mxu0
    %2697 = vdwg.mxu0
    %v2698 = vadd.f32 %v2448, %v2692
    %v2699 = vadd.f32 %v2449, %v2695
    %s2700 = scalar_lea.vmem %s3, 1
    %v2701 = vld [vmem:[%s2700] sm:$0x1]
    %s2702 = scalar_lea.vmem %s4, 1
    %v2703 = vld [vmem:[%s2702] sm:$0x1]
    %s2704 = scalar_lea.vmem %s5, 1
    %v2705 = vld [vmem:[%s2704] sm:$0x1]
    %s2706 = scalar_lea.vmem %s6, 1
    %v2707 = vld [vmem:[%s2706] sm:$0x1]
    %s2708 = scalar_lea.vmem [#allocation5], 768
    %v2709 = vld [vmem:[%s2708] sm:$0xff]
    %v2710 = vld [vmem:[%s2708 + $0x8] sm:$0xff]
    %v2711 = vld [vmem:[%s2708 + $0x10] sm:$0xff]
    %v2712 = vld [vmem:[%s2708 + $0x18] sm:$0xff]
    %v2713 = vld [vmem:[%s2708 + $0x20] sm:$0xff]
    %v2714 = vld [vmem:[%s2708 + $0x28] sm:$0xff]
    %v2715 = vld [vmem:[%s2708 + $0x30] sm:$0xff]
    %v2716 = vld [vmem:[%s2708 + $0x38] sm:$0xff]
    %v2717 = vld [vmem:[%s2708 + $0x40] sm:$0xff]
    %v2718 = vld [vmem:[%s2708 + $0x48] sm:$0xff]
    %v2719 = vld [vmem:[%s2708 + $0x50] sm:$0xff]
    %v2720 = vld [vmem:[%s2708 + $0x58] sm:$0xff]
    %v2721 = vld [vmem:[%s2708 + $0x60] sm:$0xff]
    %v2722 = vld [vmem:[%s2708 + $0x68] sm:$0xff]
    %v2723 = vld [vmem:[%s2708 + $0x70] sm:$0xff]
    %v2724 = vld [vmem:[%s2708 + $0x78] sm:$0xff]
    %v2725 = vld [vmem:[%s2708 + $0x80] sm:$0xff]
    %v2726 = vld [vmem:[%s2708 + $0x88] sm:$0xff]
    %v2727 = vld [vmem:[%s2708 + $0x90] sm:$0xff]
    %v2728 = vld [vmem:[%s2708 + $0x98] sm:$0xff]
    %v2729 = vld [vmem:[%s2708 + $0xa0] sm:$0xff]
    %v2730 = vld [vmem:[%s2708 + $0xa8] sm:$0xff]
    %v2731 = vld [vmem:[%s2708 + $0xb0] sm:$0xff]
    %v2732 = vld [vmem:[%s2708 + $0xb8] sm:$0xff]
    %v2733 = vld [vmem:[%s2708 + $0xc0] sm:$0xff]
    %v2734 = vld [vmem:[%s2708 + $0xc8] sm:$0xff]
    %v2735 = vld [vmem:[%s2708 + $0xd0] sm:$0xff]
    %v2736 = vld [vmem:[%s2708 + $0xd8] sm:$0xff]
    %v2737 = vld [vmem:[%s2708 + $0xe0] sm:$0xff]
    %v2738 = vld [vmem:[%s2708 + $0xe8] sm:$0xff]
    %v2739 = vld [vmem:[%s2708 + $0xf0] sm:$0xff]
    %v2740 = vld [vmem:[%s2708 + $0xf8] sm:$0xff]
    %v2741 = vld [vmem:[%s2708 + $0x100] sm:$0xff]
    %v2742 = vld [vmem:[%s2708 + $0x108] sm:$0xff]
    %v2743 = vld [vmem:[%s2708 + $0x110] sm:$0xff]
    %v2744 = vld [vmem:[%s2708 + $0x118] sm:$0xff]
    %v2745 = vld [vmem:[%s2708 + $0x120] sm:$0xff]
    %v2746 = vld [vmem:[%s2708 + $0x128] sm:$0xff]
    %v2747 = vld [vmem:[%s2708 + $0x130] sm:$0xff]
    %v2748 = vld [vmem:[%s2708 + $0x138] sm:$0xff]
    %v2749 = vld [vmem:[%s2708 + $0x140] sm:$0xff]
    %v2750 = vld [vmem:[%s2708 + $0x148] sm:$0xff]
    %v2751 = vld [vmem:[%s2708 + $0x150] sm:$0xff]
    %v2752 = vld [vmem:[%s2708 + $0x158] sm:$0xff]
    %v2753 = vld [vmem:[%s2708 + $0x160] sm:$0xff]
    %v2754 = vld [vmem:[%s2708 + $0x168] sm:$0xff]
    %v2755 = vld [vmem:[%s2708 + $0x170] sm:$0xff]
    %v2756 = vld [vmem:[%s2708 + $0x178] sm:$0xff]
    %v2757 = vld [vmem:[%s2708 + $0x180] sm:$0xff]
    %v2758 = vld [vmem:[%s2708 + $0x188] sm:$0xff]
    %v2759 = vld [vmem:[%s2708 + $0x190] sm:$0xff]
    %v2760 = vld [vmem:[%s2708 + $0x198] sm:$0xff]
    %v2761 = vld [vmem:[%s2708 + $0x1a0] sm:$0xff]
    %v2762 = vld [vmem:[%s2708 + $0x1a8] sm:$0xff]
    %v2763 = vld [vmem:[%s2708 + $0x1b0] sm:$0xff]
    %v2764 = vld [vmem:[%s2708 + $0x1b8] sm:$0xff]
    %v2765 = vld [vmem:[%s2708 + $0x1c0] sm:$0xff]
    %v2766 = vld [vmem:[%s2708 + $0x1c8] sm:$0xff]
    %v2767 = vld [vmem:[%s2708 + $0x1d0] sm:$0xff]
    %v2768 = vld [vmem:[%s2708 + $0x1d8] sm:$0xff]
    %v2769 = vld [vmem:[%s2708 + $0x1e0] sm:$0xff]
    %v2770 = vld [vmem:[%s2708 + $0x1e8] sm:$0xff]
    %v2771 = vld [vmem:[%s2708 + $0x1f0] sm:$0xff]
    %v2772 = vld [vmem:[%s2708 + $0x1f8] sm:$0xff]
    %v2773 = vld [vmem:[%s2708 + $0x200] sm:$0xff]
    %v2774 = vld [vmem:[%s2708 + $0x208] sm:$0xff]
    %v2775 = vld [vmem:[%s2708 + $0x210] sm:$0xff]
    %v2776 = vld [vmem:[%s2708 + $0x218] sm:$0xff]
    %v2777 = vld [vmem:[%s2708 + $0x220] sm:$0xff]
    %v2778 = vld [vmem:[%s2708 + $0x228] sm:$0xff]
    %v2779 = vld [vmem:[%s2708 + $0x230] sm:$0xff]
    %v2780 = vld [vmem:[%s2708 + $0x238] sm:$0xff]
    %v2781 = vld [vmem:[%s2708 + $0x240] sm:$0xff]
    %v2782 = vld [vmem:[%s2708 + $0x248] sm:$0xff]
    %v2783 = vld [vmem:[%s2708 + $0x250] sm:$0xff]
    %v2784 = vld [vmem:[%s2708 + $0x258] sm:$0xff]
    %v2785 = vld [vmem:[%s2708 + $0x260] sm:$0xff]
    %v2786 = vld [vmem:[%s2708 + $0x268] sm:$0xff]
    %v2787 = vld [vmem:[%s2708 + $0x270] sm:$0xff]
    %v2788 = vld [vmem:[%s2708 + $0x278] sm:$0xff]
    %v2789 = vld [vmem:[%s2708 + $0x280] sm:$0xff]
    %v2790 = vld [vmem:[%s2708 + $0x288] sm:$0xff]
    %v2791 = vld [vmem:[%s2708 + $0x290] sm:$0xff]
    %v2792 = vld [vmem:[%s2708 + $0x298] sm:$0xff]
    %v2793 = vld [vmem:[%s2708 + $0x2a0] sm:$0xff]
    %v2794 = vld [vmem:[%s2708 + $0x2a8] sm:$0xff]
    %v2795 = vld [vmem:[%s2708 + $0x2b0] sm:$0xff]
    %v2796 = vld [vmem:[%s2708 + $0x2b8] sm:$0xff]
    %v2797 = vld [vmem:[%s2708 + $0x2c0] sm:$0xff]
    %v2798 = vld [vmem:[%s2708 + $0x2c8] sm:$0xff]
    %v2799 = vld [vmem:[%s2708 + $0x2d0] sm:$0xff]
    %v2800 = vld [vmem:[%s2708 + $0x2d8] sm:$0xff]
    %v2801 = vld [vmem:[%s2708 + $0x2e0] sm:$0xff]
    %v2802 = vld [vmem:[%s2708 + $0x2e8] sm:$0xff]
    %v2803 = vld [vmem:[%s2708 + $0x2f0] sm:$0xff]
    %v2804 = vld [vmem:[%s2708 + $0x2f8] sm:$0xff]
    %s2805 = scalar_lea.vmem [#allocation7], 256
    %v2806 = vld [vmem:[%s2805] sm:$0xf]
    %v2807 = vld [vmem:[%s2805 + $0x4] sm:$0xf]
    %v2808 = vld [vmem:[%s2805 + $0x8] sm:$0xf]
    %v2809 = vld [vmem:[%s2805 + $0xc] sm:$0xf]
    %v2810 = vld [vmem:[%s2805 + $0x10] sm:$0xf]
    %v2811 = vld [vmem:[%s2805 + $0x14] sm:$0xf]
    %v2812 = vld [vmem:[%s2805 + $0x18] sm:$0xf]
    %v2813 = vld [vmem:[%s2805 + $0x1c] sm:$0xf]
    %v2814 = vld [vmem:[%s2805 + $0x20] sm:$0xf]
    %v2815 = vld [vmem:[%s2805 + $0x24] sm:$0xf]
    %v2816 = vld [vmem:[%s2805 + $0x28] sm:$0xf]
    %v2817 = vld [vmem:[%s2805 + $0x2c] sm:$0xf]
    %v2818 = vld [vmem:[%s2805 + $0x30] sm:$0xf]
    %v2819 = vld [vmem:[%s2805 + $0x34] sm:$0xf]
    %v2820 = vld [vmem:[%s2805 + $0x38] sm:$0xf]
    %v2821 = vld [vmem:[%s2805 + $0x3c] sm:$0xf]
    %v2822 = vld [vmem:[%s2805 + $0x40] sm:$0xf]
    %v2823 = vld [vmem:[%s2805 + $0x44] sm:$0xf]
    %v2824 = vld [vmem:[%s2805 + $0x48] sm:$0xf]
    %v2825 = vld [vmem:[%s2805 + $0x4c] sm:$0xf]
    %v2826 = vld [vmem:[%s2805 + $0x50] sm:$0xf]
    %v2827 = vld [vmem:[%s2805 + $0x54] sm:$0xf]
    %v2828 = vld [vmem:[%s2805 + $0x58] sm:$0xf]
    %v2829 = vld [vmem:[%s2805 + $0x5c] sm:$0xf]
    %v2830 = vld [vmem:[%s2805 + $0x60] sm:$0xf]
    %v2831 = vld [vmem:[%s2805 + $0x64] sm:$0xf]
    %v2832 = vld [vmem:[%s2805 + $0x68] sm:$0xf]
    %v2833 = vld [vmem:[%s2805 + $0x6c] sm:$0xf]
    %v2834 = vld [vmem:[%s2805 + $0x70] sm:$0xf]
    %v2835 = vld [vmem:[%s2805 + $0x74] sm:$0xf]
    %v2836 = vld [vmem:[%s2805 + $0x78] sm:$0xf]
    %v2837 = vld [vmem:[%s2805 + $0x7c] sm:$0xf]
    %v2838 = vld [vmem:[%s2805 + $0x80] sm:$0xf]
    %v2839 = vld [vmem:[%s2805 + $0x84] sm:$0xf]
    %v2840 = vld [vmem:[%s2805 + $0x88] sm:$0xf]
    %v2841 = vld [vmem:[%s2805 + $0x8c] sm:$0xf]
    %v2842 = vld [vmem:[%s2805 + $0x90] sm:$0xf]
    %v2843 = vld [vmem:[%s2805 + $0x94] sm:$0xf]
    %v2844 = vld [vmem:[%s2805 + $0x98] sm:$0xf]
    %v2845 = vld [vmem:[%s2805 + $0x9c] sm:$0xf]
    %v2846 = vld [vmem:[%s2805 + $0xa0] sm:$0xf]
    %v2847 = vld [vmem:[%s2805 + $0xa4] sm:$0xf]
    %v2848 = vld [vmem:[%s2805 + $0xa8] sm:$0xf]
    %v2849 = vld [vmem:[%s2805 + $0xac] sm:$0xf]
    %v2850 = vld [vmem:[%s2805 + $0xb0] sm:$0xf]
    %v2851 = vld [vmem:[%s2805 + $0xb4] sm:$0xf]
    %v2852 = vld [vmem:[%s2805 + $0xb8] sm:$0xf]
    %v2853 = vld [vmem:[%s2805 + $0xbc] sm:$0xf]
    %v2854 = vld [vmem:[%s2805 + $0xc0] sm:$0xf]
    %v2855 = vld [vmem:[%s2805 + $0xc4] sm:$0xf]
    %v2856 = vld [vmem:[%s2805 + $0xc8] sm:$0xf]
    %v2857 = vld [vmem:[%s2805 + $0xcc] sm:$0xf]
    %v2858 = vld [vmem:[%s2805 + $0xd0] sm:$0xf]
    %v2859 = vld [vmem:[%s2805 + $0xd4] sm:$0xf]
    %v2860 = vld [vmem:[%s2805 + $0xd8] sm:$0xf]
    %v2861 = vld [vmem:[%s2805 + $0xdc] sm:$0xf]
    %v2862 = vld [vmem:[%s2805 + $0xe0] sm:$0xf]
    %v2863 = vld [vmem:[%s2805 + $0xe4] sm:$0xf]
    %v2864 = vld [vmem:[%s2805 + $0xe8] sm:$0xf]
    %v2865 = vld [vmem:[%s2805 + $0xec] sm:$0xf]
    %v2866 = vld [vmem:[%s2805 + $0xf0] sm:$0xf]
    %v2867 = vld [vmem:[%s2805 + $0xf4] sm:$0xf]
    %v2868 = vld [vmem:[%s2805 + $0xf8] sm:$0xf]
    %v2869 = vld [vmem:[%s2805 + $0xfc] sm:$0xf]
    %s2870 = scalar_lea.vmem [#allocation8], 64
    %v2871 = vld [vmem:[%s2870] sm:$0xf]
    %v2872 = vld [vmem:[%s2870 + $0x4] sm:$0xf]
    %v2873 = vld [vmem:[%s2870 + $0x8] sm:$0xf]
    %v2874 = vld [vmem:[%s2870 + $0xc] sm:$0xf]
    %v2875 = vld [vmem:[%s2870 + $0x10] sm:$0xf]
    %v2876 = vld [vmem:[%s2870 + $0x14] sm:$0xf]
    %v2877 = vld [vmem:[%s2870 + $0x18] sm:$0xf]
    %v2878 = vld [vmem:[%s2870 + $0x1c] sm:$0xf]
    %v2879 = vld [vmem:[%s2870 + $0x20] sm:$0xf]
    %v2880 = vld [vmem:[%s2870 + $0x24] sm:$0xf]
    %v2881 = vld [vmem:[%s2870 + $0x28] sm:$0xf]
    %v2882 = vld [vmem:[%s2870 + $0x2c] sm:$0xf]
    %v2883 = vld [vmem:[%s2870 + $0x30] sm:$0xf]
    %v2884 = vld [vmem:[%s2870 + $0x34] sm:$0xf]
    %v2885 = vld [vmem:[%s2870 + $0x38] sm:$0xf]
    %v2886 = vld [vmem:[%s2870 + $0x3c] sm:$0xf]
    %s2887 = scalar_lea.vmem %s8, 1
    %v2888 = vld [vmem:[%s2887] sm:$0x1]
    %s2889 = scalar_lea.vmem [#allocation10], 64
    %v2890 = vld [vmem:[%s2889] sm:$0xf]
    %v2891 = vld [vmem:[%s2889 + $0x4] sm:$0xf]
    %v2892 = vld [vmem:[%s2889 + $0x8] sm:$0xf]
    %v2893 = vld [vmem:[%s2889 + $0xc] sm:$0xf]
    %v2894 = vld [vmem:[%s2889 + $0x10] sm:$0xf]
    %v2895 = vld [vmem:[%s2889 + $0x14] sm:$0xf]
    %v2896 = vld [vmem:[%s2889 + $0x18] sm:$0xf]
    %v2897 = vld [vmem:[%s2889 + $0x1c] sm:$0xf]
    %v2898 = vld [vmem:[%s2889 + $0x20] sm:$0xf]
    %v2899 = vld [vmem:[%s2889 + $0x24] sm:$0xf]
    %v2900 = vld [vmem:[%s2889 + $0x28] sm:$0xf]
    %v2901 = vld [vmem:[%s2889 + $0x2c] sm:$0xf]
    %v2902 = vld [vmem:[%s2889 + $0x30] sm:$0xf]
    %v2903 = vld [vmem:[%s2889 + $0x34] sm:$0xf]
    %v2904 = vld [vmem:[%s2889 + $0x38] sm:$0xf]
    %v2905 = vld [vmem:[%s2889 + $0x3c] sm:$0xf]
    %s2906 = scalar_lea.vmem %s10, 1
    %v2907 = vld [vmem:[%s2906] sm:$0x1]
    %2908 = vadd.xlane.f32.xlu0 %v2698
    %v2909 = vpop.xlane.xlu0 %2908
    %2910 = vadd.xlane.f32.xlu0 %v2699
    %v2911 = vpop.xlane.xlu0 %2910
    %v2912 = vmul.f32 %v2909, 0.03125
    %v2913 = vmul.f32 %v2911, 0.03125
    %v2914 = vsub.f32 %v2698, %v2912
    %v2915 = vsub.f32 %v2699, %v2913
    %v2916 = vmul.f32 %v2914, %v118
    %v2917 = vmul.f32 %v2915, %v118
    %v2918 = vmul.f32 %v2916, %v2916
    %v2919 = vmul.f32 %v2917, %v2917
    %2920 = vadd.xlane.f32.xlu0 %v2918
    %v2921 = vpop.xlane.xlu0 %2920
    %2922 = vadd.xlane.f32.xlu0 %v2919
    %v2923 = vpop.xlane.xlu0 %2922
    %v2924 = vmul.f32 %v2921, 0.032258064
    %v2925 = vmul.f32 %v2923, 0.032258064
    %v2927 = vlaneseq
    %v2928 = vshrl.u32 %v2927, 7
    %v2929 = vsub.s32 0, %v2928
    %v2930 = vrot.slane %v2701, %v2929
    %v2932 = vmul.f32 %v2930, %v2916
    %v2933 = vmul.f32 %v2930, %v2917
    %v2934 = vrsqrt.pop %v2924
    %v2935 = vmul.f32 %v2924, %v2934
    %vm2936 = vcmp.eq.f32.partialorder %v2924, inf
    %v2937 = vsel %vm2936, %v2924, %v2935
    %vm2938 = vcmp.eq.f32.partialorder %v2924, 0.0
    %v2939 = vand.u32 %v2924, 2147483648
    %v2940 = vsel %vm2938, %v2939, %v2937
    %v2941 = vrsqrt.pop %v2925
    %v2942 = vmul.f32 %v2925, %v2941
    %vm2943 = vcmp.eq.f32.partialorder %v2925, inf
    %v2944 = vsel %vm2943, %v2925, %v2942
    %vm2945 = vcmp.eq.f32.partialorder %v2925, 0.0
    %v2946 = vand.u32 %v2925, 2147483648
    %v2947 = vsel %vm2945, %v2946, %v2944
    %v2948 = vadd.f32 %v2940, 1e-06
    %v2949 = vadd.f32 %v2947, 1e-06
    %v2950 = vrcp.pop %v2948
    %v2951 = vmul.f32 %v2932, %v2950
    %v2952 = vrcp.pop %v2949
    %v2953 = vmul.f32 %v2933, %v2952
    %v2955 = vlaneseq
    %v2956 = vshrl.u32 %v2955, 7
    %v2957 = vsub.s32 0, %v2956
    %v2958 = vrot.slane %v2703, %v2957
    %v2960 = vadd.f32 %v2951, %v2958
    %v2961 = vadd.f32 %v2953, %v2958
    %v2962 = vpack.c.bf16 %v2961, %v2960
    %v3059 = vunpack.c.l.b16 %v2709
    %v3060 = vunpack.c.h.b16 %v2709
    %v3061 = vunpack.c.l.b16 %v2710
    %v3062 = vunpack.c.h.b16 %v2710
    %v3063 = vunpack.c.l.b16 %v2711
    %v3064 = vunpack.c.h.b16 %v2711
    %v3065 = vunpack.c.l.b16 %v2712
    %v3066 = vunpack.c.h.b16 %v2712
    %v3067 = vunpack.c.l.b16 %v2713
    %v3068 = vunpack.c.h.b16 %v2713
    %v3069 = vunpack.c.l.b16 %v2714
    %v3070 = vunpack.c.h.b16 %v2714
    %v3071 = vunpack.c.l.b16 %v2715
    %v3072 = vunpack.c.h.b16 %v2715
    %v3073 = vunpack.c.l.b16 %v2716
    %v3074 = vunpack.c.h.b16 %v2716
    %v3075 = vunpack.c.l.b16 %v2717
    %v3076 = vunpack.c.h.b16 %v2717
    %v3077 = vunpack.c.l.b16 %v2718
    %v3078 = vunpack.c.h.b16 %v2718
    %v3079 = vunpack.c.l.b16 %v2719
    %v3080 = vunpack.c.h.b16 %v2719
    %v3081 = vunpack.c.l.b16 %v2720
    %v3082 = vunpack.c.h.b16 %v2720
    %v3083 = vunpack.c.l.b16 %v2721
    %v3084 = vunpack.c.h.b16 %v2721
    %v3085 = vunpack.c.l.b16 %v2722
    %v3086 = vunpack.c.h.b16 %v2722
    %v3087 = vunpack.c.l.b16 %v2723
    %v3088 = vunpack.c.h.b16 %v2723
    %v3089 = vunpack.c.l.b16 %v2724
    %v3090 = vunpack.c.h.b16 %v2724
    %v3091 = vunpack.c.l.b16 %v2725
    %v3092 = vunpack.c.h.b16 %v2725
    %v3093 = vunpack.c.l.b16 %v2726
    %v3094 = vunpack.c.h.b16 %v2726
    %v3095 = vunpack.c.l.b16 %v2727
    %v3096 = vunpack.c.h.b16 %v2727
    %v3097 = vunpack.c.l.b16 %v2728
    %v3098 = vunpack.c.h.b16 %v2728
    %v3099 = vunpack.c.l.b16 %v2729
    %v3100 = vunpack.c.h.b16 %v2729
    %v3101 = vunpack.c.l.b16 %v2730
    %v3102 = vunpack.c.h.b16 %v2730
    %v3103 = vunpack.c.l.b16 %v2731
    %v3104 = vunpack.c.h.b16 %v2731
    %v3105 = vunpack.c.l.b16 %v2732
    %v3106 = vunpack.c.h.b16 %v2732
    %v3107 = vunpack.c.l.b16 %v2733
    %v3108 = vunpack.c.h.b16 %v2733
    %v3109 = vunpack.c.l.b16 %v2734
    %v3110 = vunpack.c.h.b16 %v2734
    %v3111 = vunpack.c.l.b16 %v2735
    %v3112 = vunpack.c.h.b16 %v2735
    %v3113 = vunpack.c.l.b16 %v2736
    %v3114 = vunpack.c.h.b16 %v2736
    %v3115 = vunpack.c.l.b16 %v2737
    %v3116 = vunpack.c.h.b16 %v2737
    %v3117 = vunpack.c.l.b16 %v2738
    %v3118 = vunpack.c.h.b16 %v2738
    %v3119 = vunpack.c.l.b16 %v2739
    %v3120 = vunpack.c.h.b16 %v2739
    %v3121 = vunpack.c.l.b16 %v2740
    %v3122 = vunpack.c.h.b16 %v2740
    %v3123 = vunpack.c.l.b16 %v2741
    %v3124 = vunpack.c.h.b16 %v2741
    %v3125 = vunpack.c.l.b16 %v2742
    %v3126 = vunpack.c.h.b16 %v2742
    %v3127 = vunpack.c.l.b16 %v2743
    %v3128 = vunpack.c.h.b16 %v2743
    %v3129 = vunpack.c.l.b16 %v2744
    %v3130 = vunpack.c.h.b16 %v2744
    %v3131 = vunpack.c.l.b16 %v2745
    %v3132 = vunpack.c.h.b16 %v2745
    %v3133 = vunpack.c.l.b16 %v2746
    %v3134 = vunpack.c.h.b16 %v2746
    %v3135 = vunpack.c.l.b16 %v2747
    %v3136 = vunpack.c.h.b16 %v2747
    %v3137 = vunpack.c.l.b16 %v2748
    %v3138 = vunpack.c.h.b16 %v2748
    %v3139 = vunpack.c.l.b16 %v2749
    %v3140 = vunpack.c.h.b16 %v2749
    %v3141 = vunpack.c.l.b16 %v2750
    %v3142 = vunpack.c.h.b16 %v2750
    %v3143 = vunpack.c.l.b16 %v2751
    %v3144 = vunpack.c.h.b16 %v2751
    %v3145 = vunpack.c.l.b16 %v2752
    %v3146 = vunpack.c.h.b16 %v2752
    %v3147 = vunpack.c.l.b16 %v2753
    %v3148 = vunpack.c.h.b16 %v2753
    %v3149 = vunpack.c.l.b16 %v2754
    %v3150 = vunpack.c.h.b16 %v2754
    %v3151 = vunpack.c.l.b16 %v2755
    %v3152 = vunpack.c.h.b16 %v2755
    %v3153 = vunpack.c.l.b16 %v2756
    %v3154 = vunpack.c.h.b16 %v2756
    %v3155 = vunpack.c.l.b16 %v2757
    %v3156 = vunpack.c.h.b16 %v2757
    %v3157 = vunpack.c.l.b16 %v2758
    %v3158 = vunpack.c.h.b16 %v2758
    %v3159 = vunpack.c.l.b16 %v2759
    %v3160 = vunpack.c.h.b16 %v2759
    %v3161 = vunpack.c.l.b16 %v2760
    %v3162 = vunpack.c.h.b16 %v2760
    %v3163 = vunpack.c.l.b16 %v2761
    %v3164 = vunpack.c.h.b16 %v2761
    %v3165 = vunpack.c.l.b16 %v2762
    %v3166 = vunpack.c.h.b16 %v2762
    %v3167 = vunpack.c.l.b16 %v2763
    %v3168 = vunpack.c.h.b16 %v2763
    %v3169 = vunpack.c.l.b16 %v2764
    %v3170 = vunpack.c.h.b16 %v2764
    %v3171 = vunpack.c.l.b16 %v2765
    %v3172 = vunpack.c.h.b16 %v2765
    %v3173 = vunpack.c.l.b16 %v2766
    %v3174 = vunpack.c.h.b16 %v2766
    %v3175 = vunpack.c.l.b16 %v2767
    %v3176 = vunpack.c.h.b16 %v2767
    %v3177 = vunpack.c.l.b16 %v2768
    %v3178 = vunpack.c.h.b16 %v2768
    %v3179 = vunpack.c.l.b16 %v2769
    %v3180 = vunpack.c.h.b16 %v2769
    %v3181 = vunpack.c.l.b16 %v2770
    %v3182 = vunpack.c.h.b16 %v2770
    %v3183 = vunpack.c.l.b16 %v2771
    %v3184 = vunpack.c.h.b16 %v2771
    %v3185 = vunpack.c.l.b16 %v2772
    %v3186 = vunpack.c.h.b16 %v2772
    %v3187 = vunpack.c.l.b16 %v2773
    %v3188 = vunpack.c.h.b16 %v2773
    %v3189 = vunpack.c.l.b16 %v2774
    %v3190 = vunpack.c.h.b16 %v2774
    %v3191 = vunpack.c.l.b16 %v2775
    %v3192 = vunpack.c.h.b16 %v2775
    %v3193 = vunpack.c.l.b16 %v2776
    %v3194 = vunpack.c.h.b16 %v2776
    %v3195 = vunpack.c.l.b16 %v2777
    %v3196 = vunpack.c.h.b16 %v2777
    %v3197 = vunpack.c.l.b16 %v2778
    %v3198 = vunpack.c.h.b16 %v2778
    %v3199 = vunpack.c.l.b16 %v2779
    %v3200 = vunpack.c.h.b16 %v2779
    %v3201 = vunpack.c.l.b16 %v2780
    %v3202 = vunpack.c.h.b16 %v2780
    %v3203 = vunpack.c.l.b16 %v2781
    %v3204 = vunpack.c.h.b16 %v2781
    %v3205 = vunpack.c.l.b16 %v2782
    %v3206 = vunpack.c.h.b16 %v2782
    %v3207 = vunpack.c.l.b16 %v2783
    %v3208 = vunpack.c.h.b16 %v2783
    %v3209 = vunpack.c.l.b16 %v2784
    %v3210 = vunpack.c.h.b16 %v2784
    %v3211 = vunpack.c.l.b16 %v2785
    %v3212 = vunpack.c.h.b16 %v2785
    %v3213 = vunpack.c.l.b16 %v2786
    %v3214 = vunpack.c.h.b16 %v2786
    %v3215 = vunpack.c.l.b16 %v2787
    %v3216 = vunpack.c.h.b16 %v2787
    %v3217 = vunpack.c.l.b16 %v2788
    %v3218 = vunpack.c.h.b16 %v2788
    %v3219 = vunpack.c.l.b16 %v2789
    %v3220 = vunpack.c.h.b16 %v2789
    %v3221 = vunpack.c.l.b16 %v2790
    %v3222 = vunpack.c.h.b16 %v2790
    %v3223 = vunpack.c.l.b16 %v2791
    %v3224 = vunpack.c.h.b16 %v2791
    %v3225 = vunpack.c.l.b16 %v2792
    %v3226 = vunpack.c.h.b16 %v2792
    %v3227 = vunpack.c.l.b16 %v2793
    %v3228 = vunpack.c.h.b16 %v2793
    %v3229 = vunpack.c.l.b16 %v2794
    %v3230 = vunpack.c.h.b16 %v2794
    %v3231 = vunpack.c.l.b16 %v2795
    %v3232 = vunpack.c.h.b16 %v2795
    %v3233 = vunpack.c.l.b16 %v2796
    %v3234 = vunpack.c.h.b16 %v2796
    %v3235 = vunpack.c.l.b16 %v2797
    %v3236 = vunpack.c.h.b16 %v2797
    %v3237 = vunpack.c.l.b16 %v2798
    %v3238 = vunpack.c.h.b16 %v2798
    %v3239 = vunpack.c.l.b16 %v2799
    %v3240 = vunpack.c.h.b16 %v2799
    %v3241 = vunpack.c.l.b16 %v2800
    %v3242 = vunpack.c.h.b16 %v2800
    %v3243 = vunpack.c.l.b16 %v2801
    %v3244 = vunpack.c.h.b16 %v2801
    %v3245 = vunpack.c.l.b16 %v2802
    %v3246 = vunpack.c.h.b16 %v2802
    %v3247 = vunpack.c.l.b16 %v2803
    %v3248 = vunpack.c.h.b16 %v2803
    %v3249 = vunpack.c.l.b16 %v2804
    %v3250 = vunpack.c.h.b16 %v2804
    %v3251 = vpack.c.b16 %v3071, %v3059
    %v3252 = vpack.c.b16 %v3072, %v3060
    %v3253 = vpack.c.b16 %v3073, %v3061
    %v3254 = vpack.c.b16 %v3074, %v3062
    %v3255 = vpack.c.b16 %v3075, %v3063
    %v3256 = vpack.c.b16 %v3076, %v3064
    %v3257 = vpack.c.b16 %v3077, %v3065
    %v3258 = vpack.c.b16 %v3078, %v3066
    %v3259 = vpack.c.b16 %v3079, %v3067
    %v3260 = vpack.c.b16 %v3080, %v3068
    %v3261 = vpack.c.b16 %v3081, %v3069
    %v3262 = vpack.c.b16 %v3082, %v3070
    %v3263 = vpack.c.b16 %v3095, %v3083
    %v3264 = vpack.c.b16 %v3096, %v3084
    %v3265 = vpack.c.b16 %v3097, %v3085
    %v3266 = vpack.c.b16 %v3098, %v3086
    %v3267 = vpack.c.b16 %v3099, %v3087
    %v3268 = vpack.c.b16 %v3100, %v3088
    %v3269 = vpack.c.b16 %v3101, %v3089
    %v3270 = vpack.c.b16 %v3102, %v3090
    %v3271 = vpack.c.b16 %v3103, %v3091
    %v3272 = vpack.c.b16 %v3104, %v3092
    %v3273 = vpack.c.b16 %v3105, %v3093
    %v3274 = vpack.c.b16 %v3106, %v3094
    %v3275 = vpack.c.b16 %v3119, %v3107
    %v3276 = vpack.c.b16 %v3120, %v3108
    %v3277 = vpack.c.b16 %v3121, %v3109
    %v3278 = vpack.c.b16 %v3122, %v3110
    %v3279 = vpack.c.b16 %v3123, %v3111
    %v3280 = vpack.c.b16 %v3124, %v3112
    %v3281 = vpack.c.b16 %v3125, %v3113
    %v3282 = vpack.c.b16 %v3126, %v3114
    %v3283 = vpack.c.b16 %v3127, %v3115
    %v3284 = vpack.c.b16 %v3128, %v3116
    %v3285 = vpack.c.b16 %v3129, %v3117
    %v3286 = vpack.c.b16 %v3130, %v3118
    %v3287 = vpack.c.b16 %v3143, %v3131
    %v3288 = vpack.c.b16 %v3144, %v3132
    %v3289 = vpack.c.b16 %v3145, %v3133
    %v3290 = vpack.c.b16 %v3146, %v3134
    %v3291 = vpack.c.b16 %v3147, %v3135
    %v3292 = vpack.c.b16 %v3148, %v3136
    %v3293 = vpack.c.b16 %v3149, %v3137
    %v3294 = vpack.c.b16 %v3150, %v3138
    %v3295 = vpack.c.b16 %v3151, %v3139
    %v3296 = vpack.c.b16 %v3152, %v3140
    %v3297 = vpack.c.b16 %v3153, %v3141
    %v3298 = vpack.c.b16 %v3154, %v3142
    %v3299 = vpack.c.b16 %v3167, %v3155
    %v3300 = vpack.c.b16 %v3168, %v3156
    %v3301 = vpack.c.b16 %v3169, %v3157
    %v3302 = vpack.c.b16 %v3170, %v3158
    %v3303 = vpack.c.b16 %v3171, %v3159
    %v3304 = vpack.c.b16 %v3172, %v3160
    %v3305 = vpack.c.b16 %v3173, %v3161
    %v3306 = vpack.c.b16 %v3174, %v3162
    %v3307 = vpack.c.b16 %v3175, %v3163
    %v3308 = vpack.c.b16 %v3176, %v3164
    %v3309 = vpack.c.b16 %v3177, %v3165
    %v3310 = vpack.c.b16 %v3178, %v3166
    %v3311 = vpack.c.b16 %v3191, %v3179
    %v3312 = vpack.c.b16 %v3192, %v3180
    %v3313 = vpack.c.b16 %v3193, %v3181
    %v3314 = vpack.c.b16 %v3194, %v3182
    %v3315 = vpack.c.b16 %v3195, %v3183
    %v3316 = vpack.c.b16 %v3196, %v3184
    %v3317 = vpack.c.b16 %v3197, %v3185
    %v3318 = vpack.c.b16 %v3198, %v3186
    %v3319 = vpack.c.b16 %v3199, %v3187
    %v3320 = vpack.c.b16 %v3200, %v3188
    %v3321 = vpack.c.b16 %v3201, %v3189
    %v3322 = vpack.c.b16 %v3202, %v3190
    %v3323 = vpack.c.b16 %v3215, %v3203
    %v3324 = vpack.c.b16 %v3216, %v3204
    %v3325 = vpack.c.b16 %v3217, %v3205
    %v3326 = vpack.c.b16 %v3218, %v3206
    %v3327 = vpack.c.b16 %v3219, %v3207
    %v3328 = vpack.c.b16 %v3220, %v3208
    %v3329 = vpack.c.b16 %v3221, %v3209
    %v3330 = vpack.c.b16 %v3222, %v3210
    %v3331 = vpack.c.b16 %v3223, %v3211
    %v3332 = vpack.c.b16 %v3224, %v3212
    %v3333 = vpack.c.b16 %v3225, %v3213
    %v3334 = vpack.c.b16 %v3226, %v3214
    %v3335 = vpack.c.b16 %v3239, %v3227
    %v3336 = vpack.c.b16 %v3240, %v3228
    %v3337 = vpack.c.b16 %v3241, %v3229
    %v3338 = vpack.c.b16 %v3242, %v3230
    %v3339 = vpack.c.b16 %v3243, %v3231
    %v3340 = vpack.c.b16 %v3244, %v3232
    %v3341 = vpack.c.b16 %v3245, %v3233
    %v3342 = vpack.c.b16 %v3246, %v3234
    %v3343 = vpack.c.b16 %v3247, %v3235
    %v3344 = vpack.c.b16 %v3248, %v3236
    %v3345 = vpack.c.b16 %v3249, %v3237
    %v3346 = vpack.c.b16 %v3250, %v3238
    %3443 = vmatprep.subr.bf16.mxu0 %v3336
    %3444 = vmatpush1.bf16.msra.mxu0 %v3335
    %3445 = vmatprep.subr.bf16.mxu0 %v3324
    %3446 = vmatpush1.bf16.msra.mxu0 %v3323
    %3447 = vmatprep.subr.bf16.mxu0 %v3312
    %3448 = vmatpush1.bf16.msra.mxu0 %v3311
    %3449 = vmatprep.subr.bf16.mxu0 %v3300
    %3450 = vmatpush1.bf16.msra.mxu0 %v3299
    %3451 = vmatprep.subr.bf16.mxu0 %v3288
    %3452 = vmatpush1.bf16.msra.mxu0 %v3287
    %3453 = vmatprep.subr.bf16.mxu0 %v3276
    %3454 = vmatpush1.bf16.msra.mxu0 %v3275
    %3455 = vmatprep.subr.bf16.mxu0 %v3264
    %3456 = vmatpush1.bf16.msra.mxu0 %v3263
    %3457 = vmatprep.subr.bf16.mxu0 %v3252
    %3458 = vmatpush1.bf16.msra.mxu0 %v3251
    %3459 = vmatprep.subr.bf16.mxu0 0
    %3460 = vmatpush2.bf16.msra.mxu0 0
    %3461 = vmatprep.subr.bf16.mxu0 0
    %3462 = vmatpush2.bf16.msra.mxu0 0
    %3463 = vmatprep.subr.bf16.mxu0 0
    %3464 = vmatpush2.bf16.msra.mxu0 0
    %3465 = vmatprep.subr.bf16.mxu0 0
    %3466 = vmatpush2.bf16.msra.mxu0 0
    %3467 = vmatprep.subr.bf16.mxu0 0
    %3468 = vmatpush2.bf16.msra.mxu0 0
    %3469 = vmatprep.subr.bf16.mxu0 0
    %3470 = vmatpush2.bf16.msra.mxu0 0
    %3471 = vmatprep.subr.bf16.mxu0 0
    %3472 = vmatpush2.bf16.msra.mxu0 0
    %3473 = vmatprep.subr.bf16.mxu0 0
    %3474 = vmatpush2.bf16.msra.mxu0 0
    %3475 = vmatprep.mubr.bf16.mxu0 0
    %3476 = vmatmul.mubr.bf16.gmra.mxu0 %v2962
    %v3477 = vpop.f32.mrf.mxu0
    %v3478 = vadd.f32 0.0, %v3477
    %v3479 = vpop.f32.mrf.mxu0
    %v3480 = vadd.f32 0.0, %v3479
    %v3481 = vpop.f32.mrf.mxu0
    %v3482 = vadd.f32 0.0, %v3481
    %v3483 = vpop.f32.mrf.mxu0
    %v3484 = vadd.f32 0.0, %v3483
    %3485 = vdwg.mxu0
    %3486 = vmatprep.subr.bf16.mxu0 %v3338
    %3487 = vmatpush1.bf16.msra.mxu0 %v3337
    %3488 = vmatprep.subr.bf16.mxu0 %v3326
    %3489 = vmatpush1.bf16.msra.mxu0 %v3325
    %3490 = vmatprep.subr.bf16.mxu0 %v3314
    %3491 = vmatpush1.bf16.msra.mxu0 %v3313
    %3492 = vmatprep.subr.bf16.mxu0 %v3302
    %3493 = vmatpush1.bf16.msra.mxu0 %v3301
    %3494 = vmatprep.subr.bf16.mxu0 %v3290
    %3495 = vmatpush1.bf16.msra.mxu0 %v3289
    %3496 = vmatprep.subr.bf16.mxu0 %v3278
    %3497 = vmatpush1.bf16.msra.mxu0 %v3277
    %3498 = vmatprep.subr.bf16.mxu0 %v3266
    %3499 = vmatpush1.bf16.msra.mxu0 %v3265
    %3500 = vmatprep.subr.bf16.mxu0 %v3254
    %3501 = vmatpush1.bf16.msra.mxu0 %v3253
    %3502 = vmatprep.subr.bf16.mxu0 0
    %3503 = vmatpush2.bf16.msra.mxu0 0
    %3504 = vmatprep.subr.bf16.mxu0 0
    %3505 = vmatpush2.bf16.msra.mxu0 0
    %3506 = vmatprep.subr.bf16.mxu0 0
    %3507 = vmatpush2.bf16.msra.mxu0 0
    %3508 = vmatprep.subr.bf16.mxu0 0
    %3509 = vmatpush2.bf16.msra.mxu0 0
    %3510 = vmatprep.subr.bf16.mxu0 0
    %3511 = vmatpush2.bf16.msra.mxu0 0
    %3512 = vmatprep.subr.bf16.mxu0 0
    %3513 = vmatpush2.bf16.msra.mxu0 0
    %3514 = vmatprep.subr.bf16.mxu0 0
    %3515 = vmatpush2.bf16.msra.mxu0 0
    %3516 = vmatprep.subr.bf16.mxu0 0
    %3517 = vmatpush2.bf16.msra.mxu0 0
    %3518 = vmatprep.mubr.bf16.mxu0 0
    %3519 = vmatmul.mubr.bf16.gmra.mxu0 %v2962
    %v3520 = vpop.f32.mrf.mxu0
    %v3521 = vadd.f32 0.0, %v3520
    %v3522 = vpop.f32.mrf.mxu0
    %v3523 = vadd.f32 0.0, %v3522
    %v3524 = vpop.f32.mrf.mxu0
    %v3525 = vadd.f32 0.0, %v3524
    %v3526 = vpop.f32.mrf.mxu0
    %v3527 = vadd.f32 0.0, %v3526
    %3528 = vdwg.mxu0
    %3529 = vmatprep.subr.bf16.mxu0 %v3340
    %3530 = vmatpush1.bf16.msra.mxu0 %v3339
    %3531 = vmatprep.subr.bf16.mxu0 %v3328
    %3532 = vmatpush1.bf16.msra.mxu0 %v3327
    %3533 = vmatprep.subr.bf16.mxu0 %v3316
    %3534 = vmatpush1.bf16.msra.mxu0 %v3315
    %3535 = vmatprep.subr.bf16.mxu0 %v3304
    %3536 = vmatpush1.bf16.msra.mxu0 %v3303
    %3537 = vmatprep.subr.bf16.mxu0 %v3292
    %3538 = vmatpush1.bf16.msra.mxu0 %v3291
    %3539 = vmatprep.subr.bf16.mxu0 %v3280
    %3540 = vmatpush1.bf16.msra.mxu0 %v3279
    %3541 = vmatprep.subr.bf16.mxu0 %v3268
    %3542 = vmatpush1.bf16.msra.mxu0 %v3267
    %3543 = vmatprep.subr.bf16.mxu0 %v3256
    %3544 = vmatpush1.bf16.msra.mxu0 %v3255
    %3545 = vmatprep.subr.bf16.mxu0 0
    %3546 = vmatpush2.bf16.msra.mxu0 0
    %3547 = vmatprep.subr.bf16.mxu0 0
    %3548 = vmatpush2.bf16.msra.mxu0 0
    %3549 = vmatprep.subr.bf16.mxu0 0
    %3550 = vmatpush2.bf16.msra.mxu0 0
    %3551 = vmatprep.subr.bf16.mxu0 0
    %3552 = vmatpush2.bf16.msra.mxu0 0
    %3553 = vmatprep.subr.bf16.mxu0 0
    %3554 = vmatpush2.bf16.msra.mxu0 0
    %3555 = vmatprep.subr.bf16.mxu0 0
    %3556 = vmatpush2.bf16.msra.mxu0 0
    %3557 = vmatprep.subr.bf16.mxu0 0
    %3558 = vmatpush2.bf16.msra.mxu0 0
    %3559 = vmatprep.subr.bf16.mxu0 0
    %3560 = vmatpush2.bf16.msra.mxu0 0
    %3561 = vmatprep.mubr.bf16.mxu0 0
    %3562 = vmatmul.mubr.bf16.gmra.mxu0 %v2962
    %v3563 = vpop.f32.mrf.mxu0
    %v3564 = vadd.f32 0.0, %v3563
    %v3565 = vpop.f32.mrf.mxu0
    %v3566 = vadd.f32 0.0, %v3565
    %v3567 = vpop.f32.mrf.mxu0
    %v3568 = vadd.f32 0.0, %v3567
    %v3569 = vpop.f32.mrf.mxu0
    %v3570 = vadd.f32 0.0, %v3569
    %3571 = vdwg.mxu0
    %3572 = vmatprep.subr.bf16.mxu0 %v3342
    %3573 = vmatpush1.bf16.msra.mxu0 %v3341
    %3574 = vmatprep.subr.bf16.mxu0 %v3330
    %3575 = vmatpush1.bf16.msra.mxu0 %v3329
    %3576 = vmatprep.subr.bf16.mxu0 %v3318
    %3577 = vmatpush1.bf16.msra.mxu0 %v3317
    %3578 = vmatprep.subr.bf16.mxu0 %v3306
    %3579 = vmatpush1.bf16.msra.mxu0 %v3305
    %3580 = vmatprep.subr.bf16.mxu0 %v3294
    %3581 = vmatpush1.bf16.msra.mxu0 %v3293
    %3582 = vmatprep.subr.bf16.mxu0 %v3282
    %3583 = vmatpush1.bf16.msra.mxu0 %v3281
    %3584 = vmatprep.subr.bf16.mxu0 %v3270
    %3585 = vmatpush1.bf16.msra.mxu0 %v3269
    %3586 = vmatprep.subr.bf16.mxu0 %v3258
    %3587 = vmatpush1.bf16.msra.mxu0 %v3257
    %3588 = vmatprep.subr.bf16.mxu0 0
    %3589 = vmatpush2.bf16.msra.mxu0 0
    %3590 = vmatprep.subr.bf16.mxu0 0
    %3591 = vmatpush2.bf16.msra.mxu0 0
    %3592 = vmatprep.subr.bf16.mxu0 0
    %3593 = vmatpush2.bf16.msra.mxu0 0
    %3594 = vmatprep.subr.bf16.mxu0 0
    %3595 = vmatpush2.bf16.msra.mxu0 0
    %3596 = vmatprep.subr.bf16.mxu0 0
    %3597 = vmatpush2.bf16.msra.mxu0 0
    %3598 = vmatprep.subr.bf16.mxu0 0
    %3599 = vmatpush2.bf16.msra.mxu0 0
    %3600 = vmatprep.subr.bf16.mxu0 0
    %3601 = vmatpush2.bf16.msra.mxu0 0
    %3602 = vmatprep.subr.bf16.mxu0 0
    %3603 = vmatpush2.bf16.msra.mxu0 0
    %3604 = vmatprep.mubr.bf16.mxu0 0
    %3605 = vmatmul.mubr.bf16.gmra.mxu0 %v2962
    %v3606 = vpop.f32.mrf.mxu0
    %v3607 = vadd.f32 0.0, %v3606
    %v3608 = vpop.f32.mrf.mxu0
    %v3609 = vadd.f32 0.0, %v3608
    %v3610 = vpop.f32.mrf.mxu0
    %v3611 = vadd.f32 0.0, %v3610
    %v3612 = vpop.f32.mrf.mxu0
    %v3613 = vadd.f32 0.0, %v3612
    %3614 = vdwg.mxu0
    %3615 = vmatprep.subr.bf16.mxu0 %v3344
    %3616 = vmatpush1.bf16.msra.mxu0 %v3343
    %3617 = vmatprep.subr.bf16.mxu0 %v3332
    %3618 = vmatpush1.bf16.msra.mxu0 %v3331
    %3619 = vmatprep.subr.bf16.mxu0 %v3320
    %3620 = vmatpush1.bf16.msra.mxu0 %v3319
    %3621 = vmatprep.subr.bf16.mxu0 %v3308
    %3622 = vmatpush1.bf16.msra.mxu0 %v3307
    %3623 = vmatprep.subr.bf16.mxu0 %v3296
    %3624 = vmatpush1.bf16.msra.mxu0 %v3295
    %3625 = vmatprep.subr.bf16.mxu0 %v3284
    %3626 = vmatpush1.bf16.msra.mxu0 %v3283
    %3627 = vmatprep.subr.bf16.mxu0 %v3272
    %3628 = vmatpush1.bf16.msra.mxu0 %v3271
    %3629 = vmatprep.subr.bf16.mxu0 %v3260
    %3630 = vmatpush1.bf16.msra.mxu0 %v3259
    %3631 = vmatprep.subr.bf16.mxu0 0
    %3632 = vmatpush2.bf16.msra.mxu0 0
    %3633 = vmatprep.subr.bf16.mxu0 0
    %3634 = vmatpush2.bf16.msra.mxu0 0
    %3635 = vmatprep.subr.bf16.mxu0 0
    %3636 = vmatpush2.bf16.msra.mxu0 0
    %3637 = vmatprep.subr.bf16.mxu0 0
    %3638 = vmatpush2.bf16.msra.mxu0 0
    %3639 = vmatprep.subr.bf16.mxu0 0
    %3640 = vmatpush2.bf16.msra.mxu0 0
    %3641 = vmatprep.subr.bf16.mxu0 0
    %3642 = vmatpush2.bf16.msra.mxu0 0
    %3643 = vmatprep.subr.bf16.mxu0 0
    %3644 = vmatpush2.bf16.msra.mxu0 0
    %3645 = vmatprep.subr.bf16.mxu0 0
    %3646 = vmatpush2.bf16.msra.mxu0 0
    %3647 = vmatprep.mubr.bf16.mxu0 0
    %3648 = vmatmul.mubr.bf16.gmra.mxu0 %v2962
    %v3649 = vpop.f32.mrf.mxu0
    %v3650 = vadd.f32 0.0, %v3649
    %v3651 = vpop.f32.mrf.mxu0
    %v3652 = vadd.f32 0.0, %v3651
    %v3653 = vpop.f32.mrf.mxu0
    %v3654 = vadd.f32 0.0, %v3653
    %v3655 = vpop.f32.mrf.mxu0
    %v3656 = vadd.f32 0.0, %v3655
    %3657 = vdwg.mxu0
    %3658 = vmatprep.subr.bf16.mxu0 %v3346
    %3659 = vmatpush1.bf16.msra.mxu0 %v3345
    %3660 = vmatprep.subr.bf16.mxu0 %v3334
    %3661 = vmatpush1.bf16.msra.mxu0 %v3333
    %3662 = vmatprep.subr.bf16.mxu0 %v3322
    %3663 = vmatpush1.bf16.msra.mxu0 %v3321
    %3664 = vmatprep.subr.bf16.mxu0 %v3310
    %3665 = vmatpush1.bf16.msra.mxu0 %v3309
    %3666 = vmatprep.subr.bf16.mxu0 %v3298
    %3667 = vmatpush1.bf16.msra.mxu0 %v3297
    %3668 = vmatprep.subr.bf16.mxu0 %v3286
    %3669 = vmatpush1.bf16.msra.mxu0 %v3285
    %3670 = vmatprep.subr.bf16.mxu0 %v3274
    %3671 = vmatpush1.bf16.msra.mxu0 %v3273
    %3672 = vmatprep.subr.bf16.mxu0 %v3262
    %3673 = vmatpush1.bf16.msra.mxu0 %v3261
    %3674 = vmatprep.subr.bf16.mxu0 0
    %3675 = vmatpush2.bf16.msra.mxu0 0
    %3676 = vmatprep.subr.bf16.mxu0 0
    %3677 = vmatpush2.bf16.msra.mxu0 0
    %3678 = vmatprep.subr.bf16.mxu0 0
    %3679 = vmatpush2.bf16.msra.mxu0 0
    %3680 = vmatprep.subr.bf16.mxu0 0
    %3681 = vmatpush2.bf16.msra.mxu0 0
    %3682 = vmatprep.subr.bf16.mxu0 0
    %3683 = vmatpush2.bf16.msra.mxu0 0
    %3684 = vmatprep.subr.bf16.mxu0 0
    %3685 = vmatpush2.bf16.msra.mxu0 0
    %3686 = vmatprep.subr.bf16.mxu0 0
    %3687 = vmatpush2.bf16.msra.mxu0 0
    %3688 = vmatprep.subr.bf16.mxu0 0
    %3689 = vmatpush2.bf16.msra.mxu0 0
    %3690 = vmatprep.mubr.bf16.mxu0 0
    %3691 = vmatmul.mubr.bf16.gmra.mxu0 %v2962
    %v3692 = vpop.f32.mrf.mxu0
    %v3693 = vadd.f32 0.0, %v3692
    %v3694 = vpop.f32.mrf.mxu0
    %v3695 = vadd.f32 0.0, %v3694
    %v3696 = vpop.f32.mrf.mxu0
    %v3697 = vadd.f32 0.0, %v3696
    %v3698 = vpop.f32.mrf.mxu0
    %v3699 = vadd.f32 0.0, %v3698
    %3700 = vdwg.mxu0
    %v3701 = vpack.c.bf16 %v3478, %v3478
    %v3702 = vpack.c.bf16 %v3480, %v3480
    %v3703 = vpack.c.bf16 %v3521, %v3521
    %v3704 = vpack.c.bf16 %v3523, %v3523
    %v3705 = vpack.c.bf16 %v3564, %v3564
    %v3706 = vpack.c.bf16 %v3566, %v3566
    %v3707 = vpack.c.bf16 %v3607, %v3607
    %v3708 = vpack.c.bf16 %v3609, %v3609
    %v3709 = vpack.c.bf16 %v3650, %v3650
    %v3710 = vpack.c.bf16 %v3652, %v3652
    %v3711 = vpack.c.bf16 %v3693, %v3693
    %v3712 = vpack.c.bf16 %v3695, %v3695
    %3713 = vmatprep.subr.bf16.mxu0 0
    %3714 = vmatpush1.bf16.xpose.msra.mxu0 0
    %3715 = vmatprep.subr.bf16.mxu0 0
    %3716 = vmatpush1.bf16.xpose.msra.mxu0 0
    %3717 = vmatprep.subr.bf16.mxu0 0
    %3718 = vmatpush1.bf16.xpose.msra.mxu0 0
    %3719 = vmatprep.subr.bf16.mxu0 0
    %3720 = vmatpush1.bf16.xpose.msra.mxu0 0
    %3721 = vmatprep.subr.bf16.mxu0 0
    %3722 = vmatpush1.bf16.xpose.msra.mxu0 0
    %3723 = vmatprep.subr.bf16.mxu0 0
    %3724 = vmatpush1.bf16.xpose.msra.mxu0 0
    %3725 = vmatprep.subr.bf16.mxu0 0
    %3726 = vmatpush1.bf16.xpose.msra.mxu0 0
    %3727 = vmatprep.subr.bf16.mxu0 0
    %3728 = vmatpush1.bf16.xpose.msra.mxu0 %v3705
    %3729 = vmatprep.subr.bf16.mxu0 0
    %3730 = vmatpush2.bf16.xpose.msra.mxu0 0
    %3731 = vmatprep.subr.bf16.mxu0 0
    %3732 = vmatpush2.bf16.xpose.msra.mxu0 0
    %3733 = vmatprep.subr.bf16.mxu0 0
    %3734 = vmatpush2.bf16.xpose.msra.mxu0 0
    %3735 = vmatprep.subr.bf16.mxu0 0
    %3736 = vmatpush2.bf16.xpose.msra.mxu0 0
    %3737 = vmatprep.subr.bf16.mxu0 0
    %3738 = vmatpush2.bf16.xpose.msra.mxu0 0
    %3739 = vmatprep.subr.bf16.mxu0 0
    %3740 = vmatpush2.bf16.xpose.msra.mxu0 0
    %3741 = vmatprep.subr.bf16.mxu0 0
    %3742 = vmatpush2.bf16.xpose.msra.mxu0 0
    %3743 = vmatprep.subr.bf16.mxu0 0
    %3744 = vmatpush2.bf16.xpose.msra.mxu0 0
    %3745 = vmatprep.mubr.bf16.mxu0 0
    %3746 = vmatmul.mubr.bf16.gmra.mxu0 %v3701
    %v3747 = vpop.f32.mrf.mxu0
    %v3748 = vadd.f32 0.0, %v3747
    %v3749 = vpop.f32.mrf.mxu0
    %v3750 = vpop.f32.mrf.mxu0
    %v3751 = vpop.f32.mrf.mxu0
    %3752 = vdwg.mxu0
    %3753 = vmatprep.subr.bf16.mxu0 0
    %3754 = vmatpush1.bf16.xpose.msra.mxu0 0
    %3755 = vmatprep.subr.bf16.mxu0 0
    %3756 = vmatpush1.bf16.xpose.msra.mxu0 0
    %3757 = vmatprep.subr.bf16.mxu0 0
    %3758 = vmatpush1.bf16.xpose.msra.mxu0 0
    %3759 = vmatprep.subr.bf16.mxu0 0
    %3760 = vmatpush1.bf16.xpose.msra.mxu0 0
    %3761 = vmatprep.subr.bf16.mxu0 0
    %3762 = vmatpush1.bf16.xpose.msra.mxu0 0
    %3763 = vmatprep.subr.bf16.mxu0 0
    %3764 = vmatpush1.bf16.xpose.msra.mxu0 0
    %3765 = vmatprep.subr.bf16.mxu0 0
    %3766 = vmatpush1.bf16.xpose.msra.mxu0 0
    %3767 = vmatprep.subr.bf16.mxu0 0
    %3768 = vmatpush1.bf16.xpose.msra.mxu0 %v3706
    %3769 = vmatprep.subr.bf16.mxu0 0
    %3770 = vmatpush2.bf16.xpose.msra.mxu0 0
    %3771 = vmatprep.subr.bf16.mxu0 0
    %3772 = vmatpush2.bf16.xpose.msra.mxu0 0
    %3773 = vmatprep.subr.bf16.mxu0 0
    %3774 = vmatpush2.bf16.xpose.msra.mxu0 0
    %3775 = vmatprep.subr.bf16.mxu0 0
    %3776 = vmatpush2.bf16.xpose.msra.mxu0 0
    %3777 = vmatprep.subr.bf16.mxu0 0
    %3778 = vmatpush2.bf16.xpose.msra.mxu0 0
    %3779 = vmatprep.subr.bf16.mxu0 0
    %3780 = vmatpush2.bf16.xpose.msra.mxu0 0
    %3781 = vmatprep.subr.bf16.mxu0 0
    %3782 = vmatpush2.bf16.xpose.msra.mxu0 0
    %3783 = vmatprep.subr.bf16.mxu0 0
    %3784 = vmatpush2.bf16.xpose.msra.mxu0 0
    %3785 = vmatprep.mubr.bf16.mxu0 0
    %3786 = vmatmul.mubr.bf16.gmra.mxu0 %v3702
    %v3787 = vpop.f32.mrf.mxu0
    %v3788 = vadd.f32 0.0, %v3787
    %v3789 = vpop.f32.mrf.mxu0
    %v3790 = vpop.f32.mrf.mxu0
    %v3791 = vpop.f32.mrf.mxu0
    %3792 = vdwg.mxu0
    %3793 = vmatprep.subr.bf16.mxu0 0
    %3794 = vmatpush1.bf16.xpose.msra.mxu0 0
    %3795 = vmatprep.subr.bf16.mxu0 0
    %3796 = vmatpush1.bf16.xpose.msra.mxu0 0
    %3797 = vmatprep.subr.bf16.mxu0 0
    %3798 = vmatpush1.bf16.xpose.msra.mxu0 0
    %3799 = vmatprep.subr.bf16.mxu0 0
    %3800 = vmatpush1.bf16.xpose.msra.mxu0 0
    %3801 = vmatprep.subr.bf16.mxu0 0
    %3802 = vmatpush1.bf16.xpose.msra.mxu0 0
    %3803 = vmatprep.subr.bf16.mxu0 0
    %3804 = vmatpush1.bf16.xpose.msra.mxu0 0
    %3805 = vmatprep.subr.bf16.mxu0 0
    %3806 = vmatpush1.bf16.xpose.msra.mxu0 0
    %3807 = vmatprep.subr.bf16.mxu0 0
    %3808 = vmatpush1.bf16.xpose.msra.mxu0 %v3707
    %3809 = vmatprep.subr.bf16.mxu0 0
    %3810 = vmatpush2.bf16.xpose.msra.mxu0 0
    %3811 = vmatprep.subr.bf16.mxu0 0
    %3812 = vmatpush2.bf16.xpose.msra.mxu0 0
    %3813 = vmatprep.subr.bf16.mxu0 0
    %3814 = vmatpush2.bf16.xpose.msra.mxu0 0
    %3815 = vmatprep.subr.bf16.mxu0 0
    %3816 = vmatpush2.bf16.xpose.msra.mxu0 0
    %3817 = vmatprep.subr.bf16.mxu0 0
    %3818 = vmatpush2.bf16.xpose.msra.mxu0 0
    %3819 = vmatprep.subr.bf16.mxu0 0
    %3820 = vmatpush2.bf16.xpose.msra.mxu0 0
    %3821 = vmatprep.subr.bf16.mxu0 0
    %3822 = vmatpush2.bf16.xpose.msra.mxu0 0
    %3823 = vmatprep.subr.bf16.mxu0 0
    %3824 = vmatpush2.bf16.xpose.msra.mxu0 0
    %3825 = vmatprep.mubr.bf16.mxu0 0
    %3826 = vmatmul.mubr.bf16.gmra.mxu0 %v3703
    %v3827 = vpop.f32.mrf.mxu0
    %v3828 = vadd.f32 0.0, %v3827
    %v3829 = vpop.f32.mrf.mxu0
    %v3830 = vpop.f32.mrf.mxu0
    %v3831 = vpop.f32.mrf.mxu0
    %3832 = vdwg.mxu0
    %3833 = vmatprep.subr.bf16.mxu0 0
    %3834 = vmatpush1.bf16.xpose.msra.mxu0 0
    %3835 = vmatprep.subr.bf16.mxu0 0
    %3836 = vmatpush1.bf16.xpose.msra.mxu0 0
    %3837 = vmatprep.subr.bf16.mxu0 0
    %3838 = vmatpush1.bf16.xpose.msra.mxu0 0
    %3839 = vmatprep.subr.bf16.mxu0 0
    %3840 = vmatpush1.bf16.xpose.msra.mxu0 0
    %3841 = vmatprep.subr.bf16.mxu0 0
    %3842 = vmatpush1.bf16.xpose.msra.mxu0 0
    %3843 = vmatprep.subr.bf16.mxu0 0
    %3844 = vmatpush1.bf16.xpose.msra.mxu0 0
    %3845 = vmatprep.subr.bf16.mxu0 0
    %3846 = vmatpush1.bf16.xpose.msra.mxu0 0
    %3847 = vmatprep.subr.bf16.mxu0 0
    %3848 = vmatpush1.bf16.xpose.msra.mxu0 %v3708
    %3849 = vmatprep.subr.bf16.mxu0 0
    %3850 = vmatpush2.bf16.xpose.msra.mxu0 0
    %3851 = vmatprep.subr.bf16.mxu0 0
    %3852 = vmatpush2.bf16.xpose.msra.mxu0 0
    %3853 = vmatprep.subr.bf16.mxu0 0
    %3854 = vmatpush2.bf16.xpose.msra.mxu0 0
    %3855 = vmatprep.subr.bf16.mxu0 0
    %3856 = vmatpush2.bf16.xpose.msra.mxu0 0
    %3857 = vmatprep.subr.bf16.mxu0 0
    %3858 = vmatpush2.bf16.xpose.msra.mxu0 0
    %3859 = vmatprep.subr.bf16.mxu0 0
    %3860 = vmatpush2.bf16.xpose.msra.mxu0 0
    %3861 = vmatprep.subr.bf16.mxu0 0
    %3862 = vmatpush2.bf16.xpose.msra.mxu0 0
    %3863 = vmatprep.subr.bf16.mxu0 0
    %3864 = vmatpush2.bf16.xpose.msra.mxu0 0
    %3865 = vmatprep.mubr.bf16.mxu0 0
    %3866 = vmatmul.mubr.bf16.gmra.mxu0 %v3704
    %v3867 = vpop.f32.mrf.mxu0
    %v3868 = vadd.f32 0.0, %v3867
    %v3869 = vpop.f32.mrf.mxu0
    %v3870 = vpop.f32.mrf.mxu0
    %v3871 = vpop.f32.mrf.mxu0
    %3872 = vdwg.mxu0
    %v3873 = vsel %vm1284, %v3748, -inf
    %3874 = vmax.xlane.f32.xlu0 %v3873
    %v3875 = vpop.xlane.xlu0 %3874
    %v3876 = vsel %vm1284, %v3788, -inf
    %3877 = vmax.xlane.f32.xlu0 %v3876
    %v3878 = vpop.xlane.xlu0 %3877
    %v3879 = vsel %vm1284, %v3828, -inf
    %3880 = vmax.xlane.f32.xlu0 %v3879
    %v3881 = vpop.xlane.xlu0 %3880
    %v3882 = vsel %vm1284, %v3868, -inf
    %3883 = vmax.xlane.f32.xlu0 %v3882
    %v3884 = vpop.xlane.xlu0 %3883
    %v3885 = vsub.f32 %v3748, %v3875
    %v3886 = vsub.f32 %v3788, %v3878
    %v3887 = vsub.f32 %v3828, %v3881
    %v3888 = vsub.f32 %v3868, %v3884
    %v3889 = vmul.f32 %v3885, 1.442695
    %v3890 = vpow.pop %v3889
    %v3891 = vmul.f32 %v3886, 1.442695
    %v3892 = vpow.pop %v3891
    %v3893 = vmul.f32 %v3887, 1.442695
    %v3894 = vpow.pop %v3893
    %v3895 = vmul.f32 %v3888, 1.442695
    %v3896 = vpow.pop %v3895
    %v3897 = vsel %vm1284, %v3890, 0.0
    %3898 = vadd.xlane.f32.xlu0 %v3897
    %v3899 = vpop.xlane.xlu0 %3898
    %v3900 = vsel %vm1284, %v3892, 0.0
    %3901 = vadd.xlane.f32.xlu0 %v3900
    %v3902 = vpop.xlane.xlu0 %3901
    %v3903 = vsel %vm1284, %v3894, 0.0
    %3904 = vadd.xlane.f32.xlu0 %v3903
    %v3905 = vpop.xlane.xlu0 %3904
    %v3906 = vsel %vm1284, %v3896, 0.0
    %3907 = vadd.xlane.f32.xlu0 %v3906
    %v3908 = vpop.xlane.xlu0 %3907
    %v3909 = vrcp.pop %v3899
    %v3910 = vrcp.pop %v3902
    %v3911 = vrcp.pop %v3905
    %v3912 = vrcp.pop %v3908
    %v3913 = vmul.f32 %v3890, %v3909
    %v3914 = vmul.f32 %v3892, %v3910
    %v3915 = vmul.f32 %v3894, %v3911
    %v3916 = vmul.f32 %v3896, %v3912
    %v3917 = vpack.c.bf16 %v3913, %v3913
    %v3918 = vpack.c.bf16 %v3914, %v3914
    %v3919 = vpack.c.bf16 %v3915, %v3915
    %v3920 = vpack.c.bf16 %v3916, %v3916
    %v3922 = vsel %vm1284, %v3917, 0
    %v3925 = vsel %vm1336, %v3709, 0
    %3927 = vmatprep.subr.bf16.mxu0 0
    %3928 = vmatpush1.bf16.msra.mxu0 0
    %3929 = vmatprep.subr.bf16.mxu0 0
    %3930 = vmatpush1.bf16.msra.mxu0 0
    %3931 = vmatprep.subr.bf16.mxu0 0
    %3932 = vmatpush1.bf16.msra.mxu0 0
    %3933 = vmatprep.subr.bf16.mxu0 0
    %3934 = vmatpush1.bf16.msra.mxu0 0
    %3935 = vmatprep.subr.bf16.mxu0 0
    %3936 = vmatpush1.bf16.msra.mxu0 0
    %3937 = vmatprep.subr.bf16.mxu0 0
    %3938 = vmatpush1.bf16.msra.mxu0 0
    %3939 = vmatprep.subr.bf16.mxu0 0
    %3940 = vmatpush1.bf16.msra.mxu0 0
    %3941 = vmatprep.subr.bf16.mxu0 0
    %3942 = vmatpush1.bf16.msra.mxu0 %v3925
    %3943 = vmatprep.subr.bf16.mxu0 0
    %3944 = vmatpush2.bf16.msra.mxu0 0
    %3945 = vmatprep.subr.bf16.mxu0 0
    %3946 = vmatpush2.bf16.msra.mxu0 0
    %3947 = vmatprep.subr.bf16.mxu0 0
    %3948 = vmatpush2.bf16.msra.mxu0 0
    %3949 = vmatprep.subr.bf16.mxu0 0
    %3950 = vmatpush2.bf16.msra.mxu0 0
    %3951 = vmatprep.subr.bf16.mxu0 0
    %3952 = vmatpush2.bf16.msra.mxu0 0
    %3953 = vmatprep.subr.bf16.mxu0 0
    %3954 = vmatpush2.bf16.msra.mxu0 0
    %3955 = vmatprep.subr.bf16.mxu0 0
    %3956 = vmatpush2.bf16.msra.mxu0 0
    %3957 = vmatprep.subr.bf16.mxu0 0
    %3958 = vmatpush2.bf16.msra.mxu0 0
    %3959 = vmatprep.mubr.bf16.mxu0 0
    %3960 = vmatmul.mubr.bf16.gmra.mxu0 %v3922
    %v3961 = vpop.f32.mrf.mxu0
    %v3962 = vadd.f32 0.0, %v3961
    %v3963 = vpop.f32.mrf.mxu0
    %v3964 = vpop.f32.mrf.mxu0
    %v3965 = vpop.f32.mrf.mxu0
    %3966 = vdwg.mxu0
    %v3968 = vsel %vm1284, %v3918, 0
    %v3971 = vsel %vm1336, %v3710, 0
    %3973 = vmatprep.subr.bf16.mxu0 0
    %3974 = vmatpush1.bf16.msra.mxu0 0
    %3975 = vmatprep.subr.bf16.mxu0 0
    %3976 = vmatpush1.bf16.msra.mxu0 0
    %3977 = vmatprep.subr.bf16.mxu0 0
    %3978 = vmatpush1.bf16.msra.mxu0 0
    %3979 = vmatprep.subr.bf16.mxu0 0
    %3980 = vmatpush1.bf16.msra.mxu0 0
    %3981 = vmatprep.subr.bf16.mxu0 0
    %3982 = vmatpush1.bf16.msra.mxu0 0
    %3983 = vmatprep.subr.bf16.mxu0 0
    %3984 = vmatpush1.bf16.msra.mxu0 0
    %3985 = vmatprep.subr.bf16.mxu0 0
    %3986 = vmatpush1.bf16.msra.mxu0 0
    %3987 = vmatprep.subr.bf16.mxu0 0
    %3988 = vmatpush1.bf16.msra.mxu0 %v3971
    %3989 = vmatprep.subr.bf16.mxu0 0
    %3990 = vmatpush2.bf16.msra.mxu0 0
    %3991 = vmatprep.subr.bf16.mxu0 0
    %3992 = vmatpush2.bf16.msra.mxu0 0
    %3993 = vmatprep.subr.bf16.mxu0 0
    %3994 = vmatpush2.bf16.msra.mxu0 0
    %3995 = vmatprep.subr.bf16.mxu0 0
    %3996 = vmatpush2.bf16.msra.mxu0 0
    %3997 = vmatprep.subr.bf16.mxu0 0
    %3998 = vmatpush2.bf16.msra.mxu0 0
    %3999 = vmatprep.subr.bf16.mxu0 0
    %4000 = vmatpush2.bf16.msra.mxu0 0
    %4001 = vmatprep.subr.bf16.mxu0 0
    %4002 = vmatpush2.bf16.msra.mxu0 0
    %4003 = vmatprep.subr.bf16.mxu0 0
    %4004 = vmatpush2.bf16.msra.mxu0 0
    %4005 = vmatprep.mubr.bf16.mxu0 0
    %4006 = vmatmul.mubr.bf16.gmra.mxu0 %v3968
    %v4007 = vpop.f32.mrf.mxu0
    %v4008 = vadd.f32 0.0, %v4007
    %v4009 = vpop.f32.mrf.mxu0
    %v4010 = vpop.f32.mrf.mxu0
    %v4011 = vpop.f32.mrf.mxu0
    %4012 = vdwg.mxu0
    %v4014 = vsel %vm1284, %v3919, 0
    %v4017 = vsel %vm1336, %v3711, 0
    %4019 = vmatprep.subr.bf16.mxu0 0
    %4020 = vmatpush1.bf16.msra.mxu0 0
    %4021 = vmatprep.subr.bf16.mxu0 0
    %4022 = vmatpush1.bf16.msra.mxu0 0
    %4023 = vmatprep.subr.bf16.mxu0 0
    %4024 = vmatpush1.bf16.msra.mxu0 0
    %4025 = vmatprep.subr.bf16.mxu0 0
    %4026 = vmatpush1.bf16.msra.mxu0 0
    %4027 = vmatprep.subr.bf16.mxu0 0
    %4028 = vmatpush1.bf16.msra.mxu0 0
    %4029 = vmatprep.subr.bf16.mxu0 0
    %4030 = vmatpush1.bf16.msra.mxu0 0
    %4031 = vmatprep.subr.bf16.mxu0 0
    %4032 = vmatpush1.bf16.msra.mxu0 0
    %4033 = vmatprep.subr.bf16.mxu0 0
    %4034 = vmatpush1.bf16.msra.mxu0 %v4017
    %4035 = vmatprep.subr.bf16.mxu0 0
    %4036 = vmatpush2.bf16.msra.mxu0 0
    %4037 = vmatprep.subr.bf16.mxu0 0
    %4038 = vmatpush2.bf16.msra.mxu0 0
    %4039 = vmatprep.subr.bf16.mxu0 0
    %4040 = vmatpush2.bf16.msra.mxu0 0
    %4041 = vmatprep.subr.bf16.mxu0 0
    %4042 = vmatpush2.bf16.msra.mxu0 0
    %4043 = vmatprep.subr.bf16.mxu0 0
    %4044 = vmatpush2.bf16.msra.mxu0 0
    %4045 = vmatprep.subr.bf16.mxu0 0
    %4046 = vmatpush2.bf16.msra.mxu0 0
    %4047 = vmatprep.subr.bf16.mxu0 0
    %4048 = vmatpush2.bf16.msra.mxu0 0
    %4049 = vmatprep.subr.bf16.mxu0 0
    %4050 = vmatpush2.bf16.msra.mxu0 0
    %4051 = vmatprep.mubr.bf16.mxu0 0
    %4052 = vmatmul.mubr.bf16.gmra.mxu0 %v4014
    %v4053 = vpop.f32.mrf.mxu0
    %v4054 = vadd.f32 0.0, %v4053
    %v4055 = vpop.f32.mrf.mxu0
    %v4056 = vpop.f32.mrf.mxu0
    %v4057 = vpop.f32.mrf.mxu0
    %4058 = vdwg.mxu0
    %v4060 = vsel %vm1284, %v3920, 0
    %v4063 = vsel %vm1336, %v3712, 0
    %4065 = vmatprep.subr.bf16.mxu0 0
    %4066 = vmatpush1.bf16.msra.mxu0 0
    %4067 = vmatprep.subr.bf16.mxu0 0
    %4068 = vmatpush1.bf16.msra.mxu0 0
    %4069 = vmatprep.subr.bf16.mxu0 0
    %4070 = vmatpush1.bf16.msra.mxu0 0
    %4071 = vmatprep.subr.bf16.mxu0 0
    %4072 = vmatpush1.bf16.msra.mxu0 0
    %4073 = vmatprep.subr.bf16.mxu0 0
    %4074 = vmatpush1.bf16.msra.mxu0 0
    %4075 = vmatprep.subr.bf16.mxu0 0
    %4076 = vmatpush1.bf16.msra.mxu0 0
    %4077 = vmatprep.subr.bf16.mxu0 0
    %4078 = vmatpush1.bf16.msra.mxu0 0
    %4079 = vmatprep.subr.bf16.mxu0 0
    %4080 = vmatpush1.bf16.msra.mxu0 %v4063
    %4081 = vmatprep.subr.bf16.mxu0 0
    %4082 = vmatpush2.bf16.msra.mxu0 0
    %4083 = vmatprep.subr.bf16.mxu0 0
    %4084 = vmatpush2.bf16.msra.mxu0 0
    %4085 = vmatprep.subr.bf16.mxu0 0
    %4086 = vmatpush2.bf16.msra.mxu0 0
    %4087 = vmatprep.subr.bf16.mxu0 0
    %4088 = vmatpush2.bf16.msra.mxu0 0
    %4089 = vmatprep.subr.bf16.mxu0 0
    %4090 = vmatpush2.bf16.msra.mxu0 0
    %4091 = vmatprep.subr.bf16.mxu0 0
    %4092 = vmatpush2.bf16.msra.mxu0 0
    %4093 = vmatprep.subr.bf16.mxu0 0
    %4094 = vmatpush2.bf16.msra.mxu0 0
    %4095 = vmatprep.subr.bf16.mxu0 0
    %4096 = vmatpush2.bf16.msra.mxu0 0
    %4097 = vmatprep.mubr.bf16.mxu0 0
    %4098 = vmatmul.mubr.bf16.gmra.mxu0 %v4060
    %v4099 = vpop.f32.mrf.mxu0
    %v4100 = vadd.f32 0.0, %v4099
    %v4101 = vpop.f32.mrf.mxu0
    %v4102 = vpop.f32.mrf.mxu0
    %v4103 = vpop.f32.mrf.mxu0
    %4104 = vdwg.mxu0
    %v4105 = vpack.c.bf16 %v3962, %v3962
    %v4106 = vpack.c.bf16 %v4008, %v4008
    %v4107 = vpack.c.bf16 %v4054, %v4054
    %v4108 = vpack.c.bf16 %v4100, %v4100
    %v4125 = vunpack.c.l.b16 %v2806
    %v4126 = vunpack.c.l.b16 %v2807
    %v4127 = vunpack.c.l.b16 %v2808
    %v4128 = vunpack.c.l.b16 %v2809
    %v4129 = vunpack.c.l.b16 %v2810
    %v4130 = vunpack.c.l.b16 %v2811
    %v4131 = vunpack.c.l.b16 %v2812
    %v4132 = vunpack.c.l.b16 %v2813
    %v4133 = vunpack.c.l.b16 %v2814
    %v4134 = vunpack.c.l.b16 %v2815
    %v4135 = vunpack.c.l.b16 %v2816
    %v4136 = vunpack.c.l.b16 %v2817
    %v4137 = vunpack.c.l.b16 %v2818
    %v4138 = vunpack.c.l.b16 %v2819
    %v4139 = vunpack.c.l.b16 %v2820
    %v4140 = vunpack.c.l.b16 %v2821
    %v4141 = vpack.c.b16 %v4126, %v4125
    %v4142 = vpack.c.b16 %v4128, %v4127
    %v4143 = vpack.c.b16 %v4130, %v4129
    %v4144 = vpack.c.b16 %v4132, %v4131
    %v4145 = vpack.c.b16 %v4134, %v4133
    %v4146 = vpack.c.b16 %v4136, %v4135
    %v4147 = vpack.c.b16 %v4138, %v4137
    %v4148 = vpack.c.b16 %v4140, %v4139
    %4157 = vmatprep.subr.bf16.mxu0 0
    %4158 = vmatpush1.bf16.msra.mxu0 %v4148
    %4159 = vmatprep.subr.bf16.mxu0 0
    %4160 = vmatpush1.bf16.msra.mxu0 %v4147
    %4161 = vmatprep.subr.bf16.mxu0 0
    %4162 = vmatpush1.bf16.msra.mxu0 %v4146
    %4163 = vmatprep.subr.bf16.mxu0 0
    %4164 = vmatpush1.bf16.msra.mxu0 %v4145
    %4165 = vmatprep.subr.bf16.mxu0 0
    %4166 = vmatpush1.bf16.msra.mxu0 %v4144
    %4167 = vmatprep.subr.bf16.mxu0 0
    %4168 = vmatpush1.bf16.msra.mxu0 %v4143
    %4169 = vmatprep.subr.bf16.mxu0 0
    %4170 = vmatpush1.bf16.msra.mxu0 %v4142
    %4171 = vmatprep.subr.bf16.mxu0 0
    %4172 = vmatpush1.bf16.msra.mxu0 %v4141
    %4173 = vmatprep.subr.bf16.mxu0 0
    %4174 = vmatpush2.bf16.msra.mxu0 0
    %4175 = vmatprep.subr.bf16.mxu0 0
    %4176 = vmatpush2.bf16.msra.mxu0 0
    %4177 = vmatprep.subr.bf16.mxu0 0
    %4178 = vmatpush2.bf16.msra.mxu0 0
    %4179 = vmatprep.subr.bf16.mxu0 0
    %4180 = vmatpush2.bf16.msra.mxu0 0
    %4181 = vmatprep.subr.bf16.mxu0 0
    %4182 = vmatpush2.bf16.msra.mxu0 0
    %4183 = vmatprep.subr.bf16.mxu0 0
    %4184 = vmatpush2.bf16.msra.mxu0 0
    %4185 = vmatprep.subr.bf16.mxu0 0
    %4186 = vmatpush2.bf16.msra.mxu0 0
    %4187 = vmatprep.subr.bf16.mxu0 0
    %4188 = vmatpush2.bf16.msra.mxu0 0
    %4189 = vmatprep.mubr.bf16.mxu0 0
    %4190 = vmatmul.mubr.bf16.gmra.mxu0 %v4105
    %v4191 = vpop.f32.mrf.mxu0
    %v4192 = vadd.f32 0.0, %v4191
    %v4193 = vpop.f32.mrf.mxu0
    %v4194 = vpop.f32.mrf.mxu0
    %v4195 = vpop.f32.mrf.mxu0
    %4196 = vdwg.mxu0
    %v4213 = vunpack.c.l.b16 %v2822
    %v4214 = vunpack.c.l.b16 %v2823
    %v4215 = vunpack.c.l.b16 %v2824
    %v4216 = vunpack.c.l.b16 %v2825
    %v4217 = vunpack.c.l.b16 %v2826
    %v4218 = vunpack.c.l.b16 %v2827
    %v4219 = vunpack.c.l.b16 %v2828
    %v4220 = vunpack.c.l.b16 %v2829
    %v4221 = vunpack.c.l.b16 %v2830
    %v4222 = vunpack.c.l.b16 %v2831
    %v4223 = vunpack.c.l.b16 %v2832
    %v4224 = vunpack.c.l.b16 %v2833
    %v4225 = vunpack.c.l.b16 %v2834
    %v4226 = vunpack.c.l.b16 %v2835
    %v4227 = vunpack.c.l.b16 %v2836
    %v4228 = vunpack.c.l.b16 %v2837
    %v4229 = vpack.c.b16 %v4214, %v4213
    %v4230 = vpack.c.b16 %v4216, %v4215
    %v4231 = vpack.c.b16 %v4218, %v4217
    %v4232 = vpack.c.b16 %v4220, %v4219
    %v4233 = vpack.c.b16 %v4222, %v4221
    %v4234 = vpack.c.b16 %v4224, %v4223
    %v4235 = vpack.c.b16 %v4226, %v4225
    %v4236 = vpack.c.b16 %v4228, %v4227
    %4245 = vmatprep.subr.bf16.mxu0 0
    %4246 = vmatpush1.bf16.msra.mxu0 %v4236
    %4247 = vmatprep.subr.bf16.mxu0 0
    %4248 = vmatpush1.bf16.msra.mxu0 %v4235
    %4249 = vmatprep.subr.bf16.mxu0 0
    %4250 = vmatpush1.bf16.msra.mxu0 %v4234
    %4251 = vmatprep.subr.bf16.mxu0 0
    %4252 = vmatpush1.bf16.msra.mxu0 %v4233
    %4253 = vmatprep.subr.bf16.mxu0 0
    %4254 = vmatpush1.bf16.msra.mxu0 %v4232
    %4255 = vmatprep.subr.bf16.mxu0 0
    %4256 = vmatpush1.bf16.msra.mxu0 %v4231
    %4257 = vmatprep.subr.bf16.mxu0 0
    %4258 = vmatpush1.bf16.msra.mxu0 %v4230
    %4259 = vmatprep.subr.bf16.mxu0 0
    %4260 = vmatpush1.bf16.msra.mxu0 %v4229
    %4261 = vmatprep.subr.bf16.mxu0 0
    %4262 = vmatpush2.bf16.msra.mxu0 0
    %4263 = vmatprep.subr.bf16.mxu0 0
    %4264 = vmatpush2.bf16.msra.mxu0 0
    %4265 = vmatprep.subr.bf16.mxu0 0
    %4266 = vmatpush2.bf16.msra.mxu0 0
    %4267 = vmatprep.subr.bf16.mxu0 0
    %4268 = vmatpush2.bf16.msra.mxu0 0
    %4269 = vmatprep.subr.bf16.mxu0 0
    %4270 = vmatpush2.bf16.msra.mxu0 0
    %4271 = vmatprep.subr.bf16.mxu0 0
    %4272 = vmatpush2.bf16.msra.mxu0 0
    %4273 = vmatprep.subr.bf16.mxu0 0
    %4274 = vmatpush2.bf16.msra.mxu0 0
    %4275 = vmatprep.subr.bf16.mxu0 0
    %4276 = vmatpush2.bf16.msra.mxu0 0
    %4277 = vmatprep.mubr.bf16.mxu0 0
    %4278 = vmatmul.mubr.bf16.gmra.mxu0 %v4106
    %v4279 = vpop.f32.mrf.mxu0
    %v4280 = vadd.f32 0.0, %v4279
    %v4281 = vpop.f32.mrf.mxu0
    %v4282 = vpop.f32.mrf.mxu0
    %v4283 = vpop.f32.mrf.mxu0
    %4284 = vdwg.mxu0
    %v4301 = vunpack.c.l.b16 %v2838
    %v4302 = vunpack.c.l.b16 %v2839
    %v4303 = vunpack.c.l.b16 %v2840
    %v4304 = vunpack.c.l.b16 %v2841
    %v4305 = vunpack.c.l.b16 %v2842
    %v4306 = vunpack.c.l.b16 %v2843
    %v4307 = vunpack.c.l.b16 %v2844
    %v4308 = vunpack.c.l.b16 %v2845
    %v4309 = vunpack.c.l.b16 %v2846
    %v4310 = vunpack.c.l.b16 %v2847
    %v4311 = vunpack.c.l.b16 %v2848
    %v4312 = vunpack.c.l.b16 %v2849
    %v4313 = vunpack.c.l.b16 %v2850
    %v4314 = vunpack.c.l.b16 %v2851
    %v4315 = vunpack.c.l.b16 %v2852
    %v4316 = vunpack.c.l.b16 %v2853
    %v4317 = vpack.c.b16 %v4302, %v4301
    %v4318 = vpack.c.b16 %v4304, %v4303
    %v4319 = vpack.c.b16 %v4306, %v4305
    %v4320 = vpack.c.b16 %v4308, %v4307
    %v4321 = vpack.c.b16 %v4310, %v4309
    %v4322 = vpack.c.b16 %v4312, %v4311
    %v4323 = vpack.c.b16 %v4314, %v4313
    %v4324 = vpack.c.b16 %v4316, %v4315
    %4333 = vmatprep.subr.bf16.mxu0 0
    %4334 = vmatpush1.bf16.msra.mxu0 %v4324
    %4335 = vmatprep.subr.bf16.mxu0 0
    %4336 = vmatpush1.bf16.msra.mxu0 %v4323
    %4337 = vmatprep.subr.bf16.mxu0 0
    %4338 = vmatpush1.bf16.msra.mxu0 %v4322
    %4339 = vmatprep.subr.bf16.mxu0 0
    %4340 = vmatpush1.bf16.msra.mxu0 %v4321
    %4341 = vmatprep.subr.bf16.mxu0 0
    %4342 = vmatpush1.bf16.msra.mxu0 %v4320
    %4343 = vmatprep.subr.bf16.mxu0 0
    %4344 = vmatpush1.bf16.msra.mxu0 %v4319
    %4345 = vmatprep.subr.bf16.mxu0 0
    %4346 = vmatpush1.bf16.msra.mxu0 %v4318
    %4347 = vmatprep.subr.bf16.mxu0 0
    %4348 = vmatpush1.bf16.msra.mxu0 %v4317
    %4349 = vmatprep.subr.bf16.mxu0 0
    %4350 = vmatpush2.bf16.msra.mxu0 0
    %4351 = vmatprep.subr.bf16.mxu0 0
    %4352 = vmatpush2.bf16.msra.mxu0 0
    %4353 = vmatprep.subr.bf16.mxu0 0
    %4354 = vmatpush2.bf16.msra.mxu0 0
    %4355 = vmatprep.subr.bf16.mxu0 0
    %4356 = vmatpush2.bf16.msra.mxu0 0
    %4357 = vmatprep.subr.bf16.mxu0 0
    %4358 = vmatpush2.bf16.msra.mxu0 0
    %4359 = vmatprep.subr.bf16.mxu0 0
    %4360 = vmatpush2.bf16.msra.mxu0 0
    %4361 = vmatprep.subr.bf16.mxu0 0
    %4362 = vmatpush2.bf16.msra.mxu0 0
    %4363 = vmatprep.subr.bf16.mxu0 0
    %4364 = vmatpush2.bf16.msra.mxu0 0
    %4365 = vmatprep.mubr.bf16.mxu0 0
    %4366 = vmatmul.mubr.bf16.gmra.mxu0 %v4107
    %v4367 = vpop.f32.mrf.mxu0
    %v4368 = vadd.f32 0.0, %v4367
    %v4369 = vpop.f32.mrf.mxu0
    %v4370 = vpop.f32.mrf.mxu0
    %v4371 = vpop.f32.mrf.mxu0
    %4372 = vdwg.mxu0
    %v4389 = vunpack.c.l.b16 %v2854
    %v4390 = vunpack.c.l.b16 %v2855
    %v4391 = vunpack.c.l.b16 %v2856
    %v4392 = vunpack.c.l.b16 %v2857
    %v4393 = vunpack.c.l.b16 %v2858
    %v4394 = vunpack.c.l.b16 %v2859
    %v4395 = vunpack.c.l.b16 %v2860
    %v4396 = vunpack.c.l.b16 %v2861
    %v4397 = vunpack.c.l.b16 %v2862
    %v4398 = vunpack.c.l.b16 %v2863
    %v4399 = vunpack.c.l.b16 %v2864
    %v4400 = vunpack.c.l.b16 %v2865
    %v4401 = vunpack.c.l.b16 %v2866
    %v4402 = vunpack.c.l.b16 %v2867
    %v4403 = vunpack.c.l.b16 %v2868
    %v4404 = vunpack.c.l.b16 %v2869
    %v4405 = vpack.c.b16 %v4390, %v4389
    %v4406 = vpack.c.b16 %v4392, %v4391
    %v4407 = vpack.c.b16 %v4394, %v4393
    %v4408 = vpack.c.b16 %v4396, %v4395
    %v4409 = vpack.c.b16 %v4398, %v4397
    %v4410 = vpack.c.b16 %v4400, %v4399
    %v4411 = vpack.c.b16 %v4402, %v4401
    %v4412 = vpack.c.b16 %v4404, %v4403
    %4421 = vmatprep.subr.bf16.mxu0 0
    %4422 = vmatpush1.bf16.msra.mxu0 %v4412
    %4423 = vmatprep.subr.bf16.mxu0 0
    %4424 = vmatpush1.bf16.msra.mxu0 %v4411
    %4425 = vmatprep.subr.bf16.mxu0 0
    %4426 = vmatpush1.bf16.msra.mxu0 %v4410
    %4427 = vmatprep.subr.bf16.mxu0 0
    %4428 = vmatpush1.bf16.msra.mxu0 %v4409
    %4429 = vmatprep.subr.bf16.mxu0 0
    %4430 = vmatpush1.bf16.msra.mxu0 %v4408
    %4431 = vmatprep.subr.bf16.mxu0 0
    %4432 = vmatpush1.bf16.msra.mxu0 %v4407
    %4433 = vmatprep.subr.bf16.mxu0 0
    %4434 = vmatpush1.bf16.msra.mxu0 %v4406
    %4435 = vmatprep.subr.bf16.mxu0 0
    %4436 = vmatpush1.bf16.msra.mxu0 %v4405
    %4437 = vmatprep.subr.bf16.mxu0 0
    %4438 = vmatpush2.bf16.msra.mxu0 0
    %4439 = vmatprep.subr.bf16.mxu0 0
    %4440 = vmatpush2.bf16.msra.mxu0 0
    %4441 = vmatprep.subr.bf16.mxu0 0
    %4442 = vmatpush2.bf16.msra.mxu0 0
    %4443 = vmatprep.subr.bf16.mxu0 0
    %4444 = vmatpush2.bf16.msra.mxu0 0
    %4445 = vmatprep.subr.bf16.mxu0 0
    %4446 = vmatpush2.bf16.msra.mxu0 0
    %4447 = vmatprep.subr.bf16.mxu0 0
    %4448 = vmatpush2.bf16.msra.mxu0 0
    %4449 = vmatprep.subr.bf16.mxu0 0
    %4450 = vmatpush2.bf16.msra.mxu0 0
    %4451 = vmatprep.subr.bf16.mxu0 0
    %4452 = vmatpush2.bf16.msra.mxu0 0
    %4453 = vmatprep.mubr.bf16.mxu0 0
    %4454 = vmatmul.mubr.bf16.gmra.mxu0 %v4108
    %v4455 = vpop.f32.mrf.mxu0
    %v4456 = vadd.f32 0.0, %v4455
    %v4457 = vpop.f32.mrf.mxu0
    %v4458 = vpop.f32.mrf.mxu0
    %v4459 = vpop.f32.mrf.mxu0
    %4460 = vdwg.mxu0
    %v4461 = vadd.f32 %v4192, %v4280
    %v4462 = vadd.f32 %v4461, %v4368
    %v4463 = vadd.f32 %v4462, %v4456
    %v4464 = vpack.c.bf16 %v3482, %v3482
    %v4465 = vpack.c.bf16 %v3484, %v3484
    %v4466 = vpack.c.bf16 %v3525, %v3525
    %v4467 = vpack.c.bf16 %v3527, %v3527
    %v4468 = vpack.c.bf16 %v3568, %v3568
    %v4469 = vpack.c.bf16 %v3570, %v3570
    %v4470 = vpack.c.bf16 %v3611, %v3611
    %v4471 = vpack.c.bf16 %v3613, %v3613
    %v4472 = vpack.c.bf16 %v3654, %v3654
    %v4473 = vpack.c.bf16 %v3656, %v3656
    %v4474 = vpack.c.bf16 %v3697, %v3697
    %v4475 = vpack.c.bf16 %v3699, %v3699
    %4476 = vmatprep.subr.bf16.mxu0 0
    %4477 = vmatpush1.bf16.xpose.msra.mxu0 0
    %4478 = vmatprep.subr.bf16.mxu0 0
    %4479 = vmatpush1.bf16.xpose.msra.mxu0 0
    %4480 = vmatprep.subr.bf16.mxu0 0
    %4481 = vmatpush1.bf16.xpose.msra.mxu0 0
    %4482 = vmatprep.subr.bf16.mxu0 0
    %4483 = vmatpush1.bf16.xpose.msra.mxu0 0
    %4484 = vmatprep.subr.bf16.mxu0 0
    %4485 = vmatpush1.bf16.xpose.msra.mxu0 0
    %4486 = vmatprep.subr.bf16.mxu0 0
    %4487 = vmatpush1.bf16.xpose.msra.mxu0 0
    %4488 = vmatprep.subr.bf16.mxu0 0
    %4489 = vmatpush1.bf16.xpose.msra.mxu0 0
    %4490 = vmatprep.subr.bf16.mxu0 0
    %4491 = vmatpush1.bf16.xpose.msra.mxu0 %v4468
    %4492 = vmatprep.subr.bf16.mxu0 0
    %4493 = vmatpush2.bf16.xpose.msra.mxu0 0
    %4494 = vmatprep.subr.bf16.mxu0 0
    %4495 = vmatpush2.bf16.xpose.msra.mxu0 0
    %4496 = vmatprep.subr.bf16.mxu0 0
    %4497 = vmatpush2.bf16.xpose.msra.mxu0 0
    %4498 = vmatprep.subr.bf16.mxu0 0
    %4499 = vmatpush2.bf16.xpose.msra.mxu0 0
    %4500 = vmatprep.subr.bf16.mxu0 0
    %4501 = vmatpush2.bf16.xpose.msra.mxu0 0
    %4502 = vmatprep.subr.bf16.mxu0 0
    %4503 = vmatpush2.bf16.xpose.msra.mxu0 0
    %4504 = vmatprep.subr.bf16.mxu0 0
    %4505 = vmatpush2.bf16.xpose.msra.mxu0 0
    %4506 = vmatprep.subr.bf16.mxu0 0
    %4507 = vmatpush2.bf16.xpose.msra.mxu0 0
    %4508 = vmatprep.mubr.bf16.mxu0 0
    %4509 = vmatmul.mubr.bf16.gmra.mxu0 %v4464
    %v4510 = vpop.f32.mrf.mxu0
    %v4511 = vadd.f32 0.0, %v4510
    %v4512 = vpop.f32.mrf.mxu0
    %v4513 = vpop.f32.mrf.mxu0
    %v4514 = vpop.f32.mrf.mxu0
    %4515 = vdwg.mxu0
    %4516 = vmatprep.subr.bf16.mxu0 0
    %4517 = vmatpush1.bf16.xpose.msra.mxu0 0
    %4518 = vmatprep.subr.bf16.mxu0 0
    %4519 = vmatpush1.bf16.xpose.msra.mxu0 0
    %4520 = vmatprep.subr.bf16.mxu0 0
    %4521 = vmatpush1.bf16.xpose.msra.mxu0 0
    %4522 = vmatprep.subr.bf16.mxu0 0
    %4523 = vmatpush1.bf16.xpose.msra.mxu0 0
    %4524 = vmatprep.subr.bf16.mxu0 0
    %4525 = vmatpush1.bf16.xpose.msra.mxu0 0
    %4526 = vmatprep.subr.bf16.mxu0 0
    %4527 = vmatpush1.bf16.xpose.msra.mxu0 0
    %4528 = vmatprep.subr.bf16.mxu0 0
    %4529 = vmatpush1.bf16.xpose.msra.mxu0 0
    %4530 = vmatprep.subr.bf16.mxu0 0
    %4531 = vmatpush1.bf16.xpose.msra.mxu0 %v4469
    %4532 = vmatprep.subr.bf16.mxu0 0
    %4533 = vmatpush2.bf16.xpose.msra.mxu0 0
    %4534 = vmatprep.subr.bf16.mxu0 0
    %4535 = vmatpush2.bf16.xpose.msra.mxu0 0
    %4536 = vmatprep.subr.bf16.mxu0 0
    %4537 = vmatpush2.bf16.xpose.msra.mxu0 0
    %4538 = vmatprep.subr.bf16.mxu0 0
    %4539 = vmatpush2.bf16.xpose.msra.mxu0 0
    %4540 = vmatprep.subr.bf16.mxu0 0
    %4541 = vmatpush2.bf16.xpose.msra.mxu0 0
    %4542 = vmatprep.subr.bf16.mxu0 0
    %4543 = vmatpush2.bf16.xpose.msra.mxu0 0
    %4544 = vmatprep.subr.bf16.mxu0 0
    %4545 = vmatpush2.bf16.xpose.msra.mxu0 0
    %4546 = vmatprep.subr.bf16.mxu0 0
    %4547 = vmatpush2.bf16.xpose.msra.mxu0 0
    %4548 = vmatprep.mubr.bf16.mxu0 0
    %4549 = vmatmul.mubr.bf16.gmra.mxu0 %v4465
    %v4550 = vpop.f32.mrf.mxu0
    %v4551 = vadd.f32 0.0, %v4550
    %v4552 = vpop.f32.mrf.mxu0
    %v4553 = vpop.f32.mrf.mxu0
    %v4554 = vpop.f32.mrf.mxu0
    %4555 = vdwg.mxu0
    %4556 = vmatprep.subr.bf16.mxu0 0
    %4557 = vmatpush1.bf16.xpose.msra.mxu0 0
    %4558 = vmatprep.subr.bf16.mxu0 0
    %4559 = vmatpush1.bf16.xpose.msra.mxu0 0
    %4560 = vmatprep.subr.bf16.mxu0 0
    %4561 = vmatpush1.bf16.xpose.msra.mxu0 0
    %4562 = vmatprep.subr.bf16.mxu0 0
    %4563 = vmatpush1.bf16.xpose.msra.mxu0 0
    %4564 = vmatprep.subr.bf16.mxu0 0
    %4565 = vmatpush1.bf16.xpose.msra.mxu0 0
    %4566 = vmatprep.subr.bf16.mxu0 0
    %4567 = vmatpush1.bf16.xpose.msra.mxu0 0
    %4568 = vmatprep.subr.bf16.mxu0 0
    %4569 = vmatpush1.bf16.xpose.msra.mxu0 0
    %4570 = vmatprep.subr.bf16.mxu0 0
    %4571 = vmatpush1.bf16.xpose.msra.mxu0 %v4470
    %4572 = vmatprep.subr.bf16.mxu0 0
    %4573 = vmatpush2.bf16.xpose.msra.mxu0 0
    %4574 = vmatprep.subr.bf16.mxu0 0
    %4575 = vmatpush2.bf16.xpose.msra.mxu0 0
    %4576 = vmatprep.subr.bf16.mxu0 0
    %4577 = vmatpush2.bf16.xpose.msra.mxu0 0
    %4578 = vmatprep.subr.bf16.mxu0 0
    %4579 = vmatpush2.bf16.xpose.msra.mxu0 0
    %4580 = vmatprep.subr.bf16.mxu0 0
    %4581 = vmatpush2.bf16.xpose.msra.mxu0 0
    %4582 = vmatprep.subr.bf16.mxu0 0
    %4583 = vmatpush2.bf16.xpose.msra.mxu0 0
    %4584 = vmatprep.subr.bf16.mxu0 0
    %4585 = vmatpush2.bf16.xpose.msra.mxu0 0
    %4586 = vmatprep.subr.bf16.mxu0 0
    %4587 = vmatpush2.bf16.xpose.msra.mxu0 0
    %4588 = vmatprep.mubr.bf16.mxu0 0
    %4589 = vmatmul.mubr.bf16.gmra.mxu0 %v4466
    %v4590 = vpop.f32.mrf.mxu0
    %v4591 = vadd.f32 0.0, %v4590
    %v4592 = vpop.f32.mrf.mxu0
    %v4593 = vpop.f32.mrf.mxu0
    %v4594 = vpop.f32.mrf.mxu0
    %4595 = vdwg.mxu0
    %4596 = vmatprep.subr.bf16.mxu0 0
    %4597 = vmatpush1.bf16.xpose.msra.mxu0 0
    %4598 = vmatprep.subr.bf16.mxu0 0
    %4599 = vmatpush1.bf16.xpose.msra.mxu0 0
    %4600 = vmatprep.subr.bf16.mxu0 0
    %4601 = vmatpush1.bf16.xpose.msra.mxu0 0
    %4602 = vmatprep.subr.bf16.mxu0 0
    %4603 = vmatpush1.bf16.xpose.msra.mxu0 0
    %4604 = vmatprep.subr.bf16.mxu0 0
    %4605 = vmatpush1.bf16.xpose.msra.mxu0 0
    %4606 = vmatprep.subr.bf16.mxu0 0
    %4607 = vmatpush1.bf16.xpose.msra.mxu0 0
    %4608 = vmatprep.subr.bf16.mxu0 0
    %4609 = vmatpush1.bf16.xpose.msra.mxu0 0
    %4610 = vmatprep.subr.bf16.mxu0 0
    %4611 = vmatpush1.bf16.xpose.msra.mxu0 %v4471
    %4612 = vmatprep.subr.bf16.mxu0 0
    %4613 = vmatpush2.bf16.xpose.msra.mxu0 0
    %4614 = vmatprep.subr.bf16.mxu0 0
    %4615 = vmatpush2.bf16.xpose.msra.mxu0 0
    %4616 = vmatprep.subr.bf16.mxu0 0
    %4617 = vmatpush2.bf16.xpose.msra.mxu0 0
    %4618 = vmatprep.subr.bf16.mxu0 0
    %4619 = vmatpush2.bf16.xpose.msra.mxu0 0
    %4620 = vmatprep.subr.bf16.mxu0 0
    %4621 = vmatpush2.bf16.xpose.msra.mxu0 0
    %4622 = vmatprep.subr.bf16.mxu0 0
    %4623 = vmatpush2.bf16.xpose.msra.mxu0 0
    %4624 = vmatprep.subr.bf16.mxu0 0
    %4625 = vmatpush2.bf16.xpose.msra.mxu0 0
    %4626 = vmatprep.subr.bf16.mxu0 0
    %4627 = vmatpush2.bf16.xpose.msra.mxu0 0
    %4628 = vmatprep.mubr.bf16.mxu0 0
    %4629 = vmatmul.mubr.bf16.gmra.mxu0 %v4467
    %v4630 = vpop.f32.mrf.mxu0
    %v4631 = vadd.f32 0.0, %v4630
    %v4632 = vpop.f32.mrf.mxu0
    %v4633 = vpop.f32.mrf.mxu0
    %v4634 = vpop.f32.mrf.mxu0
    %4635 = vdwg.mxu0
    %v4636 = vsel %vm1284, %v4511, -inf
    %4637 = vmax.xlane.f32.xlu0 %v4636
    %v4638 = vpop.xlane.xlu0 %4637
    %v4639 = vsel %vm1284, %v4551, -inf
    %4640 = vmax.xlane.f32.xlu0 %v4639
    %v4641 = vpop.xlane.xlu0 %4640
    %v4642 = vsel %vm1284, %v4591, -inf
    %4643 = vmax.xlane.f32.xlu0 %v4642
    %v4644 = vpop.xlane.xlu0 %4643
    %v4645 = vsel %vm1284, %v4631, -inf
    %4646 = vmax.xlane.f32.xlu0 %v4645
    %v4647 = vpop.xlane.xlu0 %4646
    %v4648 = vsub.f32 %v4511, %v4638
    %v4649 = vsub.f32 %v4551, %v4641
    %v4650 = vsub.f32 %v4591, %v4644
    %v4651 = vsub.f32 %v4631, %v4647
    %v4652 = vmul.f32 %v4648, 1.442695
    %v4653 = vpow.pop %v4652
    %v4654 = vmul.f32 %v4649, 1.442695
    %v4655 = vpow.pop %v4654
    %v4656 = vmul.f32 %v4650, 1.442695
    %v4657 = vpow.pop %v4656
    %v4658 = vmul.f32 %v4651, 1.442695
    %v4659 = vpow.pop %v4658
    %v4660 = vsel %vm1284, %v4653, 0.0
    %4661 = vadd.xlane.f32.xlu0 %v4660
    %v4662 = vpop.xlane.xlu0 %4661
    %v4663 = vsel %vm1284, %v4655, 0.0
    %4664 = vadd.xlane.f32.xlu0 %v4663
    %v4665 = vpop.xlane.xlu0 %4664
    %v4666 = vsel %vm1284, %v4657, 0.0
    %4667 = vadd.xlane.f32.xlu0 %v4666
    %v4668 = vpop.xlane.xlu0 %4667
    %v4669 = vsel %vm1284, %v4659, 0.0
    %4670 = vadd.xlane.f32.xlu0 %v4669
    %v4671 = vpop.xlane.xlu0 %4670
    %v4672 = vrcp.pop %v4662
    %v4673 = vrcp.pop %v4665
    %v4674 = vrcp.pop %v4668
    %v4675 = vrcp.pop %v4671
    %v4676 = vmul.f32 %v4653, %v4672
    %v4677 = vmul.f32 %v4655, %v4673
    %v4678 = vmul.f32 %v4657, %v4674
    %v4679 = vmul.f32 %v4659, %v4675
    %v4680 = vpack.c.bf16 %v4676, %v4676
    %v4681 = vpack.c.bf16 %v4677, %v4677
    %v4682 = vpack.c.bf16 %v4678, %v4678
    %v4683 = vpack.c.bf16 %v4679, %v4679
    %v4685 = vsel %vm1284, %v4680, 0
    %v4688 = vsel %vm1336, %v4472, 0
    %4690 = vmatprep.subr.bf16.mxu0 0
    %4691 = vmatpush1.bf16.msra.mxu0 0
    %4692 = vmatprep.subr.bf16.mxu0 0
    %4693 = vmatpush1.bf16.msra.mxu0 0
    %4694 = vmatprep.subr.bf16.mxu0 0
    %4695 = vmatpush1.bf16.msra.mxu0 0
    %4696 = vmatprep.subr.bf16.mxu0 0
    %4697 = vmatpush1.bf16.msra.mxu0 0
    %4698 = vmatprep.subr.bf16.mxu0 0
    %4699 = vmatpush1.bf16.msra.mxu0 0
    %4700 = vmatprep.subr.bf16.mxu0 0
    %4701 = vmatpush1.bf16.msra.mxu0 0
    %4702 = vmatprep.subr.bf16.mxu0 0
    %4703 = vmatpush1.bf16.msra.mxu0 0
    %4704 = vmatprep.subr.bf16.mxu0 0
    %4705 = vmatpush1.bf16.msra.mxu0 %v4688
    %4706 = vmatprep.subr.bf16.mxu0 0
    %4707 = vmatpush2.bf16.msra.mxu0 0
    %4708 = vmatprep.subr.bf16.mxu0 0
    %4709 = vmatpush2.bf16.msra.mxu0 0
    %4710 = vmatprep.subr.bf16.mxu0 0
    %4711 = vmatpush2.bf16.msra.mxu0 0
    %4712 = vmatprep.subr.bf16.mxu0 0
    %4713 = vmatpush2.bf16.msra.mxu0 0
    %4714 = vmatprep.subr.bf16.mxu0 0
    %4715 = vmatpush2.bf16.msra.mxu0 0
    %4716 = vmatprep.subr.bf16.mxu0 0
    %4717 = vmatpush2.bf16.msra.mxu0 0
    %4718 = vmatprep.subr.bf16.mxu0 0
    %4719 = vmatpush2.bf16.msra.mxu0 0
    %4720 = vmatprep.subr.bf16.mxu0 0
    %4721 = vmatpush2.bf16.msra.mxu0 0
    %4722 = vmatprep.mubr.bf16.mxu0 0
    %4723 = vmatmul.mubr.bf16.gmra.mxu0 %v4685
    %v4724 = vpop.f32.mrf.mxu0
    %v4725 = vadd.f32 0.0, %v4724
    %v4726 = vpop.f32.mrf.mxu0
    %v4727 = vpop.f32.mrf.mxu0
    %v4728 = vpop.f32.mrf.mxu0
    %4729 = vdwg.mxu0
    %v4731 = vsel %vm1284, %v4681, 0
    %v4734 = vsel %vm1336, %v4473, 0
    %4736 = vmatprep.subr.bf16.mxu0 0
    %4737 = vmatpush1.bf16.msra.mxu0 0
    %4738 = vmatprep.subr.bf16.mxu0 0
    %4739 = vmatpush1.bf16.msra.mxu0 0
    %4740 = vmatprep.subr.bf16.mxu0 0
    %4741 = vmatpush1.bf16.msra.mxu0 0
    %4742 = vmatprep.subr.bf16.mxu0 0
    %4743 = vmatpush1.bf16.msra.mxu0 0
    %4744 = vmatprep.subr.bf16.mxu0 0
    %4745 = vmatpush1.bf16.msra.mxu0 0
    %4746 = vmatprep.subr.bf16.mxu0 0
    %4747 = vmatpush1.bf16.msra.mxu0 0
    %4748 = vmatprep.subr.bf16.mxu0 0
    %4749 = vmatpush1.bf16.msra.mxu0 0
    %4750 = vmatprep.subr.bf16.mxu0 0
    %4751 = vmatpush1.bf16.msra.mxu0 %v4734
    %4752 = vmatprep.subr.bf16.mxu0 0
    %4753 = vmatpush2.bf16.msra.mxu0 0
    %4754 = vmatprep.subr.bf16.mxu0 0
    %4755 = vmatpush2.bf16.msra.mxu0 0
    %4756 = vmatprep.subr.bf16.mxu0 0
    %4757 = vmatpush2.bf16.msra.mxu0 0
    %4758 = vmatprep.subr.bf16.mxu0 0
    %4759 = vmatpush2.bf16.msra.mxu0 0
    %4760 = vmatprep.subr.bf16.mxu0 0
    %4761 = vmatpush2.bf16.msra.mxu0 0
    %4762 = vmatprep.subr.bf16.mxu0 0
    %4763 = vmatpush2.bf16.msra.mxu0 0
    %4764 = vmatprep.subr.bf16.mxu0 0
    %4765 = vmatpush2.bf16.msra.mxu0 0
    %4766 = vmatprep.subr.bf16.mxu0 0
    %4767 = vmatpush2.bf16.msra.mxu0 0
    %4768 = vmatprep.mubr.bf16.mxu0 0
    %4769 = vmatmul.mubr.bf16.gmra.mxu0 %v4731
    %v4770 = vpop.f32.mrf.mxu0
    %v4771 = vadd.f32 0.0, %v4770
    %v4772 = vpop.f32.mrf.mxu0
    %v4773 = vpop.f32.mrf.mxu0
    %v4774 = vpop.f32.mrf.mxu0
    %4775 = vdwg.mxu0
    %v4777 = vsel %vm1284, %v4682, 0
    %v4780 = vsel %vm1336, %v4474, 0
    %4782 = vmatprep.subr.bf16.mxu0 0
    %4783 = vmatpush1.bf16.msra.mxu0 0
    %4784 = vmatprep.subr.bf16.mxu0 0
    %4785 = vmatpush1.bf16.msra.mxu0 0
    %4786 = vmatprep.subr.bf16.mxu0 0
    %4787 = vmatpush1.bf16.msra.mxu0 0
    %4788 = vmatprep.subr.bf16.mxu0 0
    %4789 = vmatpush1.bf16.msra.mxu0 0
    %4790 = vmatprep.subr.bf16.mxu0 0
    %4791 = vmatpush1.bf16.msra.mxu0 0
    %4792 = vmatprep.subr.bf16.mxu0 0
    %4793 = vmatpush1.bf16.msra.mxu0 0
    %4794 = vmatprep.subr.bf16.mxu0 0
    %4795 = vmatpush1.bf16.msra.mxu0 0
    %4796 = vmatprep.subr.bf16.mxu0 0
    %4797 = vmatpush1.bf16.msra.mxu0 %v4780
    %4798 = vmatprep.subr.bf16.mxu0 0
    %4799 = vmatpush2.bf16.msra.mxu0 0
    %4800 = vmatprep.subr.bf16.mxu0 0
    %4801 = vmatpush2.bf16.msra.mxu0 0
    %4802 = vmatprep.subr.bf16.mxu0 0
    %4803 = vmatpush2.bf16.msra.mxu0 0
    %4804 = vmatprep.subr.bf16.mxu0 0
    %4805 = vmatpush2.bf16.msra.mxu0 0
    %4806 = vmatprep.subr.bf16.mxu0 0
    %4807 = vmatpush2.bf16.msra.mxu0 0
    %4808 = vmatprep.subr.bf16.mxu0 0
    %4809 = vmatpush2.bf16.msra.mxu0 0
    %4810 = vmatprep.subr.bf16.mxu0 0
    %4811 = vmatpush2.bf16.msra.mxu0 0
    %4812 = vmatprep.subr.bf16.mxu0 0
    %4813 = vmatpush2.bf16.msra.mxu0 0
    %4814 = vmatprep.mubr.bf16.mxu0 0
    %4815 = vmatmul.mubr.bf16.gmra.mxu0 %v4777
    %v4816 = vpop.f32.mrf.mxu0
    %v4817 = vadd.f32 0.0, %v4816
    %v4818 = vpop.f32.mrf.mxu0
    %v4819 = vpop.f32.mrf.mxu0
    %v4820 = vpop.f32.mrf.mxu0
    %4821 = vdwg.mxu0
    %v4823 = vsel %vm1284, %v4683, 0
    %v4826 = vsel %vm1336, %v4475, 0
    %4828 = vmatprep.subr.bf16.mxu0 0
    %4829 = vmatpush1.bf16.msra.mxu0 0
    %4830 = vmatprep.subr.bf16.mxu0 0
    %4831 = vmatpush1.bf16.msra.mxu0 0
    %4832 = vmatprep.subr.bf16.mxu0 0
    %4833 = vmatpush1.bf16.msra.mxu0 0
    %4834 = vmatprep.subr.bf16.mxu0 0
    %4835 = vmatpush1.bf16.msra.mxu0 0
    %4836 = vmatprep.subr.bf16.mxu0 0
    %4837 = vmatpush1.bf16.msra.mxu0 0
    %4838 = vmatprep.subr.bf16.mxu0 0
    %4839 = vmatpush1.bf16.msra.mxu0 0
    %4840 = vmatprep.subr.bf16.mxu0 0
    %4841 = vmatpush1.bf16.msra.mxu0 0
    %4842 = vmatprep.subr.bf16.mxu0 0
    %4843 = vmatpush1.bf16.msra.mxu0 %v4826
    %4844 = vmatprep.subr.bf16.mxu0 0
    %4845 = vmatpush2.bf16.msra.mxu0 0
    %4846 = vmatprep.subr.bf16.mxu0 0
    %4847 = vmatpush2.bf16.msra.mxu0 0
    %4848 = vmatprep.subr.bf16.mxu0 0
    %4849 = vmatpush2.bf16.msra.mxu0 0
    %4850 = vmatprep.subr.bf16.mxu0 0
    %4851 = vmatpush2.bf16.msra.mxu0 0
    %4852 = vmatprep.subr.bf16.mxu0 0
    %4853 = vmatpush2.bf16.msra.mxu0 0
    %4854 = vmatprep.subr.bf16.mxu0 0
    %4855 = vmatpush2.bf16.msra.mxu0 0
    %4856 = vmatprep.subr.bf16.mxu0 0
    %4857 = vmatpush2.bf16.msra.mxu0 0
    %4858 = vmatprep.subr.bf16.mxu0 0
    %4859 = vmatpush2.bf16.msra.mxu0 0
    %4860 = vmatprep.mubr.bf16.mxu0 0
    %4861 = vmatmul.mubr.bf16.gmra.mxu0 %v4823
    %v4862 = vpop.f32.mrf.mxu0
    %v4863 = vadd.f32 0.0, %v4862
    %v4864 = vpop.f32.mrf.mxu0
    %v4865 = vpop.f32.mrf.mxu0
    %v4866 = vpop.f32.mrf.mxu0
    %4867 = vdwg.mxu0
    %v4868 = vpack.c.bf16 %v4725, %v4725
    %v4869 = vpack.c.bf16 %v4771, %v4771
    %v4870 = vpack.c.bf16 %v4817, %v4817
    %v4871 = vpack.c.bf16 %v4863, %v4863
    %4872 = vmatprep.subr.bf16.mxu0 0
    %4873 = vmatpush1.bf16.msra.mxu0 %v4148
    %4874 = vmatprep.subr.bf16.mxu0 0
    %4875 = vmatpush1.bf16.msra.mxu0 %v4147
    %4876 = vmatprep.subr.bf16.mxu0 0
    %4877 = vmatpush1.bf16.msra.mxu0 %v4146
    %4878 = vmatprep.subr.bf16.mxu0 0
    %4879 = vmatpush1.bf16.msra.mxu0 %v4145
    %4880 = vmatprep.subr.bf16.mxu0 0
    %4881 = vmatpush1.bf16.msra.mxu0 %v4144
    %4882 = vmatprep.subr.bf16.mxu0 0
    %4883 = vmatpush1.bf16.msra.mxu0 %v4143
    %4884 = vmatprep.subr.bf16.mxu0 0
    %4885 = vmatpush1.bf16.msra.mxu0 %v4142
    %4886 = vmatprep.subr.bf16.mxu0 0
    %4887 = vmatpush1.bf16.msra.mxu0 %v4141
    %4888 = vmatprep.subr.bf16.mxu0 0
    %4889 = vmatpush2.bf16.msra.mxu0 0
    %4890 = vmatprep.subr.bf16.mxu0 0
    %4891 = vmatpush2.bf16.msra.mxu0 0
    %4892 = vmatprep.subr.bf16.mxu0 0
    %4893 = vmatpush2.bf16.msra.mxu0 0
    %4894 = vmatprep.subr.bf16.mxu0 0
    %4895 = vmatpush2.bf16.msra.mxu0 0
    %4896 = vmatprep.subr.bf16.mxu0 0
    %4897 = vmatpush2.bf16.msra.mxu0 0
    %4898 = vmatprep.subr.bf16.mxu0 0
    %4899 = vmatpush2.bf16.msra.mxu0 0
    %4900 = vmatprep.subr.bf16.mxu0 0
    %4901 = vmatpush2.bf16.msra.mxu0 0
    %4902 = vmatprep.subr.bf16.mxu0 0
    %4903 = vmatpush2.bf16.msra.mxu0 0
    %4904 = vmatprep.mubr.bf16.mxu0 0
    %4905 = vmatmul.mubr.bf16.gmra.mxu0 %v4868
    %v4906 = vpop.f32.mrf.mxu0
    %v4907 = vadd.f32 0.0, %v4906
    %v4908 = vpop.f32.mrf.mxu0
    %v4909 = vpop.f32.mrf.mxu0
    %v4910 = vpop.f32.mrf.mxu0
    %4911 = vdwg.mxu0
    %4912 = vmatprep.subr.bf16.mxu0 0
    %4913 = vmatpush1.bf16.msra.mxu0 %v4236
    %4914 = vmatprep.subr.bf16.mxu0 0
    %4915 = vmatpush1.bf16.msra.mxu0 %v4235
    %4916 = vmatprep.subr.bf16.mxu0 0
    %4917 = vmatpush1.bf16.msra.mxu0 %v4234
    %4918 = vmatprep.subr.bf16.mxu0 0
    %4919 = vmatpush1.bf16.msra.mxu0 %v4233
    %4920 = vmatprep.subr.bf16.mxu0 0
    %4921 = vmatpush1.bf16.msra.mxu0 %v4232
    %4922 = vmatprep.subr.bf16.mxu0 0
    %4923 = vmatpush1.bf16.msra.mxu0 %v4231
    %4924 = vmatprep.subr.bf16.mxu0 0
    %4925 = vmatpush1.bf16.msra.mxu0 %v4230
    %4926 = vmatprep.subr.bf16.mxu0 0
    %4927 = vmatpush1.bf16.msra.mxu0 %v4229
    %4928 = vmatprep.subr.bf16.mxu0 0
    %4929 = vmatpush2.bf16.msra.mxu0 0
    %4930 = vmatprep.subr.bf16.mxu0 0
    %4931 = vmatpush2.bf16.msra.mxu0 0
    %4932 = vmatprep.subr.bf16.mxu0 0
    %4933 = vmatpush2.bf16.msra.mxu0 0
    %4934 = vmatprep.subr.bf16.mxu0 0
    %4935 = vmatpush2.bf16.msra.mxu0 0
    %4936 = vmatprep.subr.bf16.mxu0 0
    %4937 = vmatpush2.bf16.msra.mxu0 0
    %4938 = vmatprep.subr.bf16.mxu0 0
    %4939 = vmatpush2.bf16.msra.mxu0 0
    %4940 = vmatprep.subr.bf16.mxu0 0
    %4941 = vmatpush2.bf16.msra.mxu0 0
    %4942 = vmatprep.subr.bf16.mxu0 0
    %4943 = vmatpush2.bf16.msra.mxu0 0
    %4944 = vmatprep.mubr.bf16.mxu0 0
    %4945 = vmatmul.mubr.bf16.gmra.mxu0 %v4869
    %v4946 = vpop.f32.mrf.mxu0
    %v4947 = vadd.f32 0.0, %v4946
    %v4948 = vpop.f32.mrf.mxu0
    %v4949 = vpop.f32.mrf.mxu0
    %v4950 = vpop.f32.mrf.mxu0
    %4951 = vdwg.mxu0
    %4952 = vmatprep.subr.bf16.mxu0 0
    %4953 = vmatpush1.bf16.msra.mxu0 %v4324
    %4954 = vmatprep.subr.bf16.mxu0 0
    %4955 = vmatpush1.bf16.msra.mxu0 %v4323
    %4956 = vmatprep.subr.bf16.mxu0 0
    %4957 = vmatpush1.bf16.msra.mxu0 %v4322
    %4958 = vmatprep.subr.bf16.mxu0 0
    %4959 = vmatpush1.bf16.msra.mxu0 %v4321
    %4960 = vmatprep.subr.bf16.mxu0 0
    %4961 = vmatpush1.bf16.msra.mxu0 %v4320
    %4962 = vmatprep.subr.bf16.mxu0 0
    %4963 = vmatpush1.bf16.msra.mxu0 %v4319
    %4964 = vmatprep.subr.bf16.mxu0 0
    %4965 = vmatpush1.bf16.msra.mxu0 %v4318
    %4966 = vmatprep.subr.bf16.mxu0 0
    %4967 = vmatpush1.bf16.msra.mxu0 %v4317
    %4968 = vmatprep.subr.bf16.mxu0 0
    %4969 = vmatpush2.bf16.msra.mxu0 0
    %4970 = vmatprep.subr.bf16.mxu0 0
    %4971 = vmatpush2.bf16.msra.mxu0 0
    %4972 = vmatprep.subr.bf16.mxu0 0
    %4973 = vmatpush2.bf16.msra.mxu0 0
    %4974 = vmatprep.subr.bf16.mxu0 0
    %4975 = vmatpush2.bf16.msra.mxu0 0
    %4976 = vmatprep.subr.bf16.mxu0 0
    %4977 = vmatpush2.bf16.msra.mxu0 0
    %4978 = vmatprep.subr.bf16.mxu0 0
    %4979 = vmatpush2.bf16.msra.mxu0 0
    %4980 = vmatprep.subr.bf16.mxu0 0
    %4981 = vmatpush2.bf16.msra.mxu0 0
    %4982 = vmatprep.subr.bf16.mxu0 0
    %4983 = vmatpush2.bf16.msra.mxu0 0
    %4984 = vmatprep.mubr.bf16.mxu0 0
    %4985 = vmatmul.mubr.bf16.gmra.mxu0 %v4870
    %v4986 = vpop.f32.mrf.mxu0
    %v4987 = vadd.f32 0.0, %v4986
    %v4988 = vpop.f32.mrf.mxu0
    %v4989 = vpop.f32.mrf.mxu0
    %v4990 = vpop.f32.mrf.mxu0
    %4991 = vdwg.mxu0
    %4992 = vmatprep.subr.bf16.mxu0 0
    %4993 = vmatpush1.bf16.msra.mxu0 %v4412
    %4994 = vmatprep.subr.bf16.mxu0 0
    %4995 = vmatpush1.bf16.msra.mxu0 %v4411
    %4996 = vmatprep.subr.bf16.mxu0 0
    %4997 = vmatpush1.bf16.msra.mxu0 %v4410
    %4998 = vmatprep.subr.bf16.mxu0 0
    %4999 = vmatpush1.bf16.msra.mxu0 %v4409
    %5000 = vmatprep.subr.bf16.mxu0 0
    %5001 = vmatpush1.bf16.msra.mxu0 %v4408
    %5002 = vmatprep.subr.bf16.mxu0 0
    %5003 = vmatpush1.bf16.msra.mxu0 %v4407
    %5004 = vmatprep.subr.bf16.mxu0 0
    %5005 = vmatpush1.bf16.msra.mxu0 %v4406
    %5006 = vmatprep.subr.bf16.mxu0 0
    %5007 = vmatpush1.bf16.msra.mxu0 %v4405
    %5008 = vmatprep.subr.bf16.mxu0 0
    %5009 = vmatpush2.bf16.msra.mxu0 0
    %5010 = vmatprep.subr.bf16.mxu0 0
    %5011 = vmatpush2.bf16.msra.mxu0 0
    %5012 = vmatprep.subr.bf16.mxu0 0
    %5013 = vmatpush2.bf16.msra.mxu0 0
    %5014 = vmatprep.subr.bf16.mxu0 0
    %5015 = vmatpush2.bf16.msra.mxu0 0
    %5016 = vmatprep.subr.bf16.mxu0 0
    %5017 = vmatpush2.bf16.msra.mxu0 0
    %5018 = vmatprep.subr.bf16.mxu0 0
    %5019 = vmatpush2.bf16.msra.mxu0 0
    %5020 = vmatprep.subr.bf16.mxu0 0
    %5021 = vmatpush2.bf16.msra.mxu0 0
    %5022 = vmatprep.subr.bf16.mxu0 0
    %5023 = vmatpush2.bf16.msra.mxu0 0
    %5024 = vmatprep.mubr.bf16.mxu0 0
    %5025 = vmatmul.mubr.bf16.gmra.mxu0 %v4871
    %v5026 = vpop.f32.mrf.mxu0
    %v5027 = vadd.f32 0.0, %v5026
    %v5028 = vpop.f32.mrf.mxu0
    %v5029 = vpop.f32.mrf.mxu0
    %v5030 = vpop.f32.mrf.mxu0
    %5031 = vdwg.mxu0
    %v5032 = vadd.f32 %v4907, %v4947
    %v5033 = vadd.f32 %v5032, %v4987
    %v5034 = vadd.f32 %v5033, %v5027
    %v5035 = vadd.f32 %v2698, %v4463
    %v5036 = vadd.f32 %v2699, %v5034
    %5037 = vadd.xlane.f32.xlu0 %v5035
    %v5038 = vpop.xlane.xlu0 %5037
    %5039 = vadd.xlane.f32.xlu0 %v5036
    %v5040 = vpop.xlane.xlu0 %5039
    %v5041 = vmul.f32 %v5038, 0.03125
    %v5042 = vmul.f32 %v5040, 0.03125
    %v5043 = vsub.f32 %v5035, %v5041
    %v5044 = vsub.f32 %v5036, %v5042
    %v5045 = vmul.f32 %v5043, %v118
    %v5046 = vmul.f32 %v5044, %v118
    %v5047 = vmul.f32 %v5045, %v5045
    %v5048 = vmul.f32 %v5046, %v5046
    %5049 = vadd.xlane.f32.xlu0 %v5047
    %v5050 = vpop.xlane.xlu0 %5049
    %5051 = vadd.xlane.f32.xlu0 %v5048
    %v5052 = vpop.xlane.xlu0 %5051
    %v5053 = vmul.f32 %v5050, 0.032258064
    %v5054 = vmul.f32 %v5052, 0.032258064
    %v5056 = vlaneseq
    %v5057 = vshrl.u32 %v5056, 7
    %v5058 = vsub.s32 0, %v5057
    %v5059 = vrot.slane %v2705, %v5058
    %v5061 = vmul.f32 %v5059, %v5045
    %v5062 = vmul.f32 %v5059, %v5046
    %v5063 = vrsqrt.pop %v5053
    %v5064 = vmul.f32 %v5053, %v5063
    %vm5065 = vcmp.eq.f32.partialorder %v5053, inf
    %v5066 = vsel %vm5065, %v5053, %v5064
    %vm5067 = vcmp.eq.f32.partialorder %v5053, 0.0
    %v5068 = vand.u32 %v5053, 2147483648
    %v5069 = vsel %vm5067, %v5068, %v5066
    %v5070 = vrsqrt.pop %v5054
    %v5071 = vmul.f32 %v5054, %v5070
    %vm5072 = vcmp.eq.f32.partialorder %v5054, inf
    %v5073 = vsel %vm5072, %v5054, %v5071
    %vm5074 = vcmp.eq.f32.partialorder %v5054, 0.0
    %v5075 = vand.u32 %v5054, 2147483648
    %v5076 = vsel %vm5074, %v5075, %v5073
    %v5077 = vadd.f32 %v5069, 1e-06
    %v5078 = vadd.f32 %v5076, 1e-06
    %v5079 = vrcp.pop %v5077
    %v5080 = vmul.f32 %v5061, %v5079
    %v5081 = vrcp.pop %v5078
    %v5082 = vmul.f32 %v5062, %v5081
    %v5084 = vlaneseq
    %v5085 = vshrl.u32 %v5084, 7
    %v5086 = vsub.s32 0, %v5085
    %v5087 = vrot.slane %v2707, %v5086
    %v5089 = vadd.f32 %v5080, %v5087
    %v5090 = vadd.f32 %v5082, %v5087
    %v5091 = vpack.c.bf16 %v5090, %v5089
    %v5093 = vlaneseq
    %v5094 = vshrl.u32 %v5093, 7
    %v5095 = vsub.s32 0, %v5094
    %v5096 = vrot.slane %v2888, %v5095
    %v5114 = vunpack.c.l.b16 %v2871
    %v5115 = vunpack.c.l.b16 %v2872
    %v5116 = vunpack.c.l.b16 %v2873
    %v5117 = vunpack.c.l.b16 %v2874
    %v5118 = vunpack.c.l.b16 %v2875
    %v5119 = vunpack.c.l.b16 %v2876
    %v5120 = vunpack.c.l.b16 %v2877
    %v5121 = vunpack.c.l.b16 %v2878
    %v5122 = vunpack.c.l.b16 %v2879
    %v5123 = vunpack.c.l.b16 %v2880
    %v5124 = vunpack.c.l.b16 %v2881
    %v5125 = vunpack.c.l.b16 %v2882
    %v5126 = vunpack.c.l.b16 %v2883
    %v5127 = vunpack.c.l.b16 %v2884
    %v5128 = vunpack.c.l.b16 %v2885
    %v5129 = vunpack.c.l.b16 %v2886
    %v5130 = vpack.c.b16 %v5115, %v5114
    %v5131 = vpack.c.b16 %v5117, %v5116
    %v5132 = vpack.c.b16 %v5119, %v5118
    %v5133 = vpack.c.b16 %v5121, %v5120
    %v5134 = vpack.c.b16 %v5123, %v5122
    %v5135 = vpack.c.b16 %v5125, %v5124
    %v5136 = vpack.c.b16 %v5127, %v5126
    %v5137 = vpack.c.b16 %v5129, %v5128
    %5146 = vmatprep.subr.bf16.mxu0 0
    %5147 = vmatpush1.bf16.msra.mxu0 %v5137
    %5148 = vmatprep.subr.bf16.mxu0 0
    %5149 = vmatpush1.bf16.msra.mxu0 %v5136
    %5150 = vmatprep.subr.bf16.mxu0 0
    %5151 = vmatpush1.bf16.msra.mxu0 %v5135
    %5152 = vmatprep.subr.bf16.mxu0 0
    %5153 = vmatpush1.bf16.msra.mxu0 %v5134
    %5154 = vmatprep.subr.bf16.mxu0 0
    %5155 = vmatpush1.bf16.msra.mxu0 %v5133
    %5156 = vmatprep.subr.bf16.mxu0 0
    %5157 = vmatpush1.bf16.msra.mxu0 %v5132
    %5158 = vmatprep.subr.bf16.mxu0 0
    %5159 = vmatpush1.bf16.msra.mxu0 %v5131
    %5160 = vmatprep.subr.bf16.mxu0 0
    %5161 = vmatpush1.bf16.msra.mxu0 %v5130
    %5162 = vmatprep.subr.bf16.mxu0 0
    %5163 = vmatpush2.bf16.msra.mxu0 0
    %5164 = vmatprep.subr.bf16.mxu0 0
    %5165 = vmatpush2.bf16.msra.mxu0 0
    %5166 = vmatprep.subr.bf16.mxu0 0
    %5167 = vmatpush2.bf16.msra.mxu0 0
    %5168 = vmatprep.subr.bf16.mxu0 0
    %5169 = vmatpush2.bf16.msra.mxu0 0
    %5170 = vmatprep.subr.bf16.mxu0 0
    %5171 = vmatpush2.bf16.msra.mxu0 0
    %5172 = vmatprep.subr.bf16.mxu0 0
    %5173 = vmatpush2.bf16.msra.mxu0 0
    %5174 = vmatprep.subr.bf16.mxu0 0
    %5175 = vmatpush2.bf16.msra.mxu0 0
    %5176 = vmatprep.subr.bf16.mxu0 0
    %5177 = vmatpush2.bf16.msra.mxu0 0
    %5178 = vmatprep.mubr.bf16.mxu0 0
    %5179 = vmatmul.mubr.bf16.gmra.mxu0 %v5091
    %v5180 = vpop.f32.mrf.mxu0
    %v5181 = vadd.f32 %v5096, %v5180
    %v5182 = vpop.f32.mrf.mxu0
    %v5183 = vpop.f32.mrf.mxu0
    %v5184 = vadd.f32 %v5096, %v5183
    %v5185 = vpop.f32.mrf.mxu0
    %5186 = vdwg.mxu0
    %v5187 = vmax.f32 %v5181, 0.0
    %v5188 = vmax.f32 %v5184, 0.0
    %v5189 = vpack.c.bf16 %v5188, %v5187
    %v5191 = vlaneseq
    %v5192 = vshrl.u32 %v5191, 7
    %v5193 = vsub.s32 0, %v5192
    %v5194 = vrot.slane %v2907, %v5193
    %v5212 = vunpack.c.l.b16 %v2890
    %v5213 = vunpack.c.l.b16 %v2891
    %v5214 = vunpack.c.l.b16 %v2892
    %v5215 = vunpack.c.l.b16 %v2893
    %v5216 = vunpack.c.l.b16 %v2894
    %v5217 = vunpack.c.l.b16 %v2895
    %v5218 = vunpack.c.l.b16 %v2896
    %v5219 = vunpack.c.l.b16 %v2897
    %v5220 = vunpack.c.l.b16 %v2898
    %v5221 = vunpack.c.l.b16 %v2899
    %v5222 = vunpack.c.l.b16 %v2900
    %v5223 = vunpack.c.l.b16 %v2901
    %v5224 = vunpack.c.l.b16 %v2902
    %v5225 = vunpack.c.l.b16 %v2903
    %v5226 = vunpack.c.l.b16 %v2904
    %v5227 = vunpack.c.l.b16 %v2905
    %v5228 = vpack.c.b16 %v5213, %v5212
    %v5229 = vpack.c.b16 %v5215, %v5214
    %v5230 = vpack.c.b16 %v5217, %v5216
    %v5231 = vpack.c.b16 %v5219, %v5218
    %v5232 = vpack.c.b16 %v5221, %v5220
    %v5233 = vpack.c.b16 %v5223, %v5222
    %v5234 = vpack.c.b16 %v5225, %v5224
    %v5235 = vpack.c.b16 %v5227, %v5226
    %5244 = vmatprep.subr.bf16.mxu0 0
    %5245 = vmatpush1.bf16.msra.mxu0 %v5235
    %5246 = vmatprep.subr.bf16.mxu0 0
    %5247 = vmatpush1.bf16.msra.mxu0 %v5234
    %5248 = vmatprep.subr.bf16.mxu0 0
    %5249 = vmatpush1.bf16.msra.mxu0 %v5233
    %5250 = vmatprep.subr.bf16.mxu0 0
    %5251 = vmatpush1.bf16.msra.mxu0 %v5232
    %5252 = vmatprep.subr.bf16.mxu0 0
    %5253 = vmatpush1.bf16.msra.mxu0 %v5231
    %5254 = vmatprep.subr.bf16.mxu0 0
    %5255 = vmatpush1.bf16.msra.mxu0 %v5230
    %5256 = vmatprep.subr.bf16.mxu0 0
    %5257 = vmatpush1.bf16.msra.mxu0 %v5229
    %5258 = vmatprep.subr.bf16.mxu0 0
    %5259 = vmatpush1.bf16.msra.mxu0 %v5228
    %5260 = vmatprep.subr.bf16.mxu0 0
    %5261 = vmatpush2.bf16.msra.mxu0 0
    %5262 = vmatprep.subr.bf16.mxu0 0
    %5263 = vmatpush2.bf16.msra.mxu0 0
    %5264 = vmatprep.subr.bf16.mxu0 0
    %5265 = vmatpush2.bf16.msra.mxu0 0
    %5266 = vmatprep.subr.bf16.mxu0 0
    %5267 = vmatpush2.bf16.msra.mxu0 0
    %5268 = vmatprep.subr.bf16.mxu0 0
    %5269 = vmatpush2.bf16.msra.mxu0 0
    %5270 = vmatprep.subr.bf16.mxu0 0
    %5271 = vmatpush2.bf16.msra.mxu0 0
    %5272 = vmatprep.subr.bf16.mxu0 0
    %5273 = vmatpush2.bf16.msra.mxu0 0
    %5274 = vmatprep.subr.bf16.mxu0 0
    %5275 = vmatpush2.bf16.msra.mxu0 0
    %5276 = vmatprep.mubr.bf16.mxu0 0
    %5277 = vmatmul.mubr.bf16.gmra.mxu0 %v5189
    %v5278 = vpop.f32.mrf.mxu0
    %v5279 = vadd.f32 %v5194, %v5278
    %v5280 = vpop.f32.mrf.mxu0
    %v5281 = vpop.f32.mrf.mxu0
    %v5282 = vadd.f32 %v5194, %v5281
    %v5283 = vpop.f32.mrf.mxu0
    %5284 = vdwg.mxu0
    %v5285 = vadd.f32 %v5035, %v5279
    %v5286 = vadd.f32 %v5036, %v5282
    %v5287 = vld [vmem:[%s11] sm:$0x1]
    %v5288 = vld [vmem:[%s12] sm:$0x1]
    %5289 = vadd.xlane.f32.xlu0 %v5285
    %v5290 = vpop.xlane.xlu0 %5289
    %5291 = vadd.xlane.f32.xlu0 %v5286
    %v5292 = vpop.xlane.xlu0 %5291
    %v5293 = vmul.f32 %v5290, 0.03125
    %v5294 = vmul.f32 %v5292, 0.03125
    %v5295 = vsub.f32 %v5285, %v5293
    %v5296 = vsub.f32 %v5286, %v5294
    %v5297 = vmul.f32 %v5295, %v118
    %v5298 = vmul.f32 %v5296, %v118
    %v5299 = vmul.f32 %v5297, %v5297
    %v5300 = vmul.f32 %v5298, %v5298
    %5301 = vadd.xlane.f32.xlu0 %v5299
    %v5302 = vpop.xlane.xlu0 %5301
    %5303 = vadd.xlane.f32.xlu0 %v5300
    %v5304 = vpop.xlane.xlu0 %5303
    %v5305 = vmul.f32 %v5302, 0.032258064
    %v5306 = vmul.f32 %v5304, 0.032258064
    %v5308 = vlaneseq
    %v5309 = vshrl.u32 %v5308, 7
    %v5310 = vsub.s32 0, %v5309
    %v5311 = vrot.slane %v5287, %v5310
    %v5313 = vmul.f32 %v5311, %v5297
    %v5314 = vmul.f32 %v5311, %v5298
    %v5315 = vrsqrt.pop %v5305
    %v5316 = vmul.f32 %v5305, %v5315
    %vm5317 = vcmp.eq.f32.partialorder %v5305, inf
    %v5318 = vsel %vm5317, %v5305, %v5316
    %vm5319 = vcmp.eq.f32.partialorder %v5305, 0.0
    %v5320 = vand.u32 %v5305, 2147483648
    %v5321 = vsel %vm5319, %v5320, %v5318
    %v5322 = vrsqrt.pop %v5306
    %v5323 = vmul.f32 %v5306, %v5322
    %vm5324 = vcmp.eq.f32.partialorder %v5306, inf
    %v5325 = vsel %vm5324, %v5306, %v5323
    %vm5326 = vcmp.eq.f32.partialorder %v5306, 0.0
    %v5327 = vand.u32 %v5306, 2147483648
    %v5328 = vsel %vm5326, %v5327, %v5325
    %v5329 = vadd.f32 %v5321, 1e-06
    %v5330 = vadd.f32 %v5328, 1e-06
    %v5331 = vrcp.pop %v5329
    %v5332 = vmul.f32 %v5313, %v5331
    %v5333 = vrcp.pop %v5330
    %v5334 = vmul.f32 %v5314, %v5333
    %v5336 = vlaneseq
    %v5337 = vshrl.u32 %v5336, 7
    %v5338 = vsub.s32 0, %v5337
    %v5339 = vrot.slane %v5288, %v5338
    %v5341 = vadd.f32 %v5332, %v5339
    %v5342 = vadd.f32 %v5334, %v5339
    %5343 = vst [vmem:[#allocation11] sm:$0xff] %v5341
    %5344 = vst [vmem:[#allocation11 + $0x8] sm:$0xff] %v5342
    // Predicated region
    $region74: #{tpu_custom_call.1} parent=1 // pred_check
      _
    $region75: #{tpu_custom_call.1} parent=1 // pred_check_branch
      %5346 = sbr.rel (0) target = $region77
    $region76: #{tpu_custom_call.1} parent=1 // pred_region
      %s5348 = ssub.s32 256, 256
      %5349 = vsyncadd [#allocation4], %s5348
      %s5350 = sshll.u32 [#allocation11], 4
      %s5351 = int_to_ptr.vmem [resolvable:$true] %s5350
      %5356 = dma.vmem_to_hbm [thread:$0]  %s5351, 256, %s13, [#allocation4], 128, 128, 8
    $region77: #{tpu_custom_call.1} parent=1 // pred_fallthru
      _
    // Predicated region
    $region78: #{tpu_custom_call.1} parent=1 // pred_check
      _
    $region79: #{tpu_custom_call.1} parent=1 // pred_check_branch
      %5358 = sbr.rel (0) target = $region81
    $region80: #{tpu_custom_call.1} parent=1 // pred_region
      %5359 = dma.done [#allocation4], 256
    $region81: #{tpu_custom_call.1} parent=1 // pred_fallthru
      _
    %5360 = vsyncpa [#allocation3], 1
    %5361 = vsyncpa [#allocation6], 1
    %5362 = vsyncpa [#allocation9], 1
    %5363 = vsyncpa [#allocation4], 1

</llo_original>
